<compile_context>
chip_gen: v7x
topology: tpu7x:2x2x1
jax: 0.10.0
libtpu: 0.0.40
codegen_flags: <defaults>
</compile_context>

<pallas_src>
import functools

import jax
import jax.numpy as jnp
from jax.experimental import pallas as pl
from jax.experimental.pallas import tpu as pltpu

NEG_INF = -9e15
LRELU_ALPHA = 0.2   # nn.LeakyReLU slope used by HyperGraphAttentionLayerSparse
LANE = 128


def _leaky_relu(v):
    return jnp.where(v > 0, v, LRELU_ALPHA * v)


def _elu(v):
    return jnp.where(v > 0, v, jnp.exp(v) - 1.0)


def _round_up(v, m):
    return (v + m - 1) // m * m


def _vmem_limit_bytes():
    """Per-generation scoped-VMEM budget: headroom below the physical per-core
    capacity (64 MiB on v7x -> ~52 MiB; 128 MiB on v5e/v6e -> ~112 MiB)."""
    try:
        cap = int(pltpu.get_tpu_info().vmem_capacity_bytes)
    except Exception:
        cap = 64 * 1024 * 1024
    return int(max(32 * 1024 * 1024,
                   min(cap - 12 * 1024 * 1024, 112 * 1024 * 1024)))


# ------------------------------- fused kernel --------------------------------
def _hhgat_fused_kernel(n_layers, bb, n_nodes, dp, cu1, cu2, cq3,
                        compute_dtype, exp_dtype, approx_recip,
                        x_ref, adj_ref, rhs_ref, c1_ref, out_ref):
    f32 = jnp.float32
    cd = compute_dtype
    N = n_nodes

    # One additive mask per grid step ({0, -9e15} in f32): masking each softmax
    # is then a vadd instead of a per-layer vselect + int8->f32 convert.
    adj_pos = adj_ref[...].astype(f32) > 0.0                        # [bb, E, N]
    add_mask = jnp.where(adj_pos, 0.0, NEG_INF)                     # [bb, E, N]

    x0 = x_ref[...].astype(f32)                                     # [bb*N, Dp]
    x_cur = x0

    for li in range(n_layers):                      # static unroll over layers
        xb = x_cur.astype(cd)
        # Single fused MXU pass against [ Wblk | u1 u2 q3 ]:
        #   big[:, :Dp]     = x @ W (transfer) or x (identity block)
        #   big[:, cu1/cu2] = x.(W2 a[D:]) and x.(W2 a2[:D])
        #   big[:, cq3]     = x.(Wblk (W3 a2[D:]))  (folded se projection)
        big = jnp.dot(xb, rhs_ref[li], preferred_element_type=f32)  # [bb*N, W]
        big_cd = big.astype(cd)

        c1 = c1_ref[li]                              # SMEM scalar: wc.a[:D]
        s1_all = _leaky_relu(c1 + big[:, cu1:cu1 + 1])              # [bb*N, 1]
        sx_all = big[:, cu2:cu2 + 1]                                # [bb*N, 1]

        blocks = []
        for b in range(bb):                         # static unroll over batch
            r0 = b * N
            mask = add_mask[b]                                      # [E, N]
            big_b = big_cd[r0:r0 + N, :]                            # [N, W]
            s1 = s1_all[r0:r0 + N, :]                               # [N, 1]
            sx = sx_all[r0:r0 + N, :]                               # [N, 1]

            # ---- hyperedge attention: softmax over nodes (lanes) ----------
            e1 = s1.T + mask                                        # [E, N]
            m1 = jnp.max(e1, axis=-1, keepdims=True)
            p1 = jnp.exp((e1 - m1).astype(exp_dtype))
            l1 = jnp.sum(p1, axis=-1, keepdims=True, dtype=f32)
            inv1 = pl.reciprocal(l1, approx=True) if approx_recip else 1.0 / l1
            att_e = (p1 * inv1.astype(exp_dtype)).astype(cd)        # [E, N]

            # edge features and the folded se column in one MXU pass
            edge_ext = jnp.dot(att_e, big_b, preferred_element_type=f32)
            edge = edge_ext[:, :dp]                                 # [E, Dp]
            se = edge_ext[:, cq3:cq3 + 1]                           # [E, 1]

            # ---- node attention: softmax over hyperedges (axis 0) ---------
            s2 = _leaky_relu(se + sx.T)                             # [E, N]
            e2 = s2 + mask
            m2 = jnp.max(e2, axis=0, keepdims=True)                 # [1, N]
            p2 = jnp.exp((e2 - m2).astype(exp_dtype))
            l2 = jnp.sum(p2, axis=0, keepdims=True, dtype=f32)
            inv2 = pl.reciprocal(l2, approx=True) if approx_recip else 1.0 / l2
            att_n = (p2 * inv2.astype(exp_dtype)).astype(cd)        # [E, N]

            # node = att_n.T @ edge without materializing an [E,N]->[N,E]
            # transpose: contract dim 0 of both operands on the MXU.
            node = jax.lax.dot_general(
                att_n, edge.astype(cd),
                dimension_numbers=(((0,), (0,)), ((), ())),
                preferred_element_type=f32)                         # [N, Dp]
            blocks.append(_elu(node) + x0[r0:r0 + N, :])            # residual

        x_cur = blocks[0] if bb == 1 else jnp.concatenate(blocks, axis=0)

    out_ref[...] = x_cur.astype(out_ref.dtype)


# --------------------------------- wrapper ------------------------------------
def hhgat_forward(x, adj, layers, *, compute_dtype=jnp.bfloat16,
                  approx_reciprocal=True, low_precision_exp=None,
                  batch_block=None):
    """HHGAT.forward (eval mode). All `step` layers fused in one pallas_call."""
    f32 = jnp.float32
    B, N, Fin = x.shape
    E = adj.shape[1]
    L = len(layers)
    D = layers[0]["w2"].shape[1]
    assert Fin == D, "HHGAT residual requires input_size == n_hid == output_size"
    for p in layers:
        assert p["w2"].shape == (D, D) and p["w3"].shape == (D, D)
        if p["transfer"]:
            assert p["w"].shape == (D, D)

    Dp = _round_up(max(D, LANE), LANE)          # lane-dense feature dim
    # Column layout of the fused per-layer RHS [ Wblk | u1 u2 q3 ]: stash the
    # three projection columns in the zero padding of the W block when there is
    # room (RHS stays exactly Dp lanes wide), else append one extra lane block.
    if D + 3 <= Dp:
        W_rhs = Dp
        cu1, cu2, cq3 = D, D + 1, D + 2
    else:
        W_rhs = Dp + LANE
        cu1, cu2, cq3 = Dp, Dp + 1, Dp + 2

    if low_precision_exp is None:
        # bf16 exponentials pay off on v6e/v7x (bf16 EUP); pass False on v5e.
        low_precision_exp = jnp.dtype(compute_dtype) == jnp.dtype(jnp.bfloat16)
    exp_dtype = compute_dtype if low_precision_exp else f32

    # ---- fold weights / projections per layer --------------------------------
    rhs_list, c1_list = [], []
    for p in layers:
        a, a2, wc = p["a"].astype(f32), p["a2"].astype(f32), p["wc"].astype(f32)
        w2, w3 = p["w2"].astype(f32), p["w3"].astype(f32)
        wblk = p["w"].astype(f32) if p["transfer"] else jnp.eye(D, dtype=f32)
        u1 = w2 @ a[D:]            # (x@W2).a[D:]    -> x.(W2 a[D:])
        u2 = w2 @ a2[:D]           # (x@W2).a2[:D]   -> x.(W2 a2[:D])
        q3 = wblk @ (w3 @ a2[D:])  # (edge@W3).a2[D:] -> att_e @ (x.(W (W3 a2[D:])))
        rhs = jnp.zeros((Dp, W_rhs), f32)
        rhs = rhs.at[:D, :D].set(wblk)
        rhs = rhs.at[:D, cu1].set(u1).at[:D, cu2].set(u2).at[:D, cq3].set(q3)
        rhs_list.append(rhs)
        c1_list.append(wc @ a[:D])
    rhs_stack = jnp.stack(rhs_list).astype(compute_dtype)    # [L, Dp, W_rhs]
    c1_arr = jnp.stack(c1_list).astype(f32)                  # [L]   (SMEM)

    # ---- batch blocking: fill the MXU M dim / amortize grid-step overhead ----
    if batch_block is None:
        cap = max(1, 256 // max(N, 1))
        cands = [d for d in range(1, B + 1)
                 if B % d == 0 and d <= cap and (d * N) % 8 == 0]
        bb = max(cands) if cands else B
    else:
        bb = batch_block
    assert B % bb == 0

    x_flat = jnp.pad(x.astype(f32), ((0, 0), (0, 0), (0, Dp - D)))
    x_flat = x_flat.reshape(B * N, Dp).astype(compute_dtype)
    adj_i8 = (adj > 0).astype(jnp.int8)                       # 4x smaller DMA

    vmem_limit = _vmem_limit_bytes()

    def run(aggressive):
        exp_dt = exp_dtype if aggressive else f32
        # grid-invariant weights never change -> single buffer is enough
        wkw = dict(pipeline_mode=pl.Buffered(1)) if aggressive else {}
        kernel = functools.partial(
            _hhgat_fused_kernel, L, bb, N, Dp, cu1, cu2, cq3,
            compute_dtype, exp_dt, approx_reciprocal)
        return pl.pallas_call(
            kernel,
            grid=(B // bb,),
            in_specs=[
                pl.BlockSpec((bb * N, Dp), lambda i: (i, 0)),        # x (flat)
                pl.BlockSpec((bb, E, N), lambda i: (i, 0, 0)),       # adj int8
                pl.BlockSpec((L, Dp, W_rhs), lambda i: (0, 0, 0), **wkw),
                pl.BlockSpec(memory_space=pltpu.MemorySpace.SMEM),   # wc.a[:D]
            ],
            out_specs=pl.BlockSpec((bb * N, Dp), lambda i: (i, 0)),
            out_shape=jax.ShapeDtypeStruct((B * N, Dp), x.dtype),
            compiler_params=pltpu.CompilerParams(
                dimension_semantics=("parallel",),    # batch axis -> megacore
                vmem_limit_bytes=vmem_limit,
            ),
        )(x_flat, adj_i8, rhs_stack, c1_arr)

    try:
        out = jax.block_until_ready(run(True))
    except Exception:
        # Fallback: double-buffered weights + f32 exponentials (covers chips /
        # jax versions where pl.Buffered(1) or bf16 EUP ops are unsupported).
        out = run(False)

    # TODO(synk): emit bf16 / fuse this slice into the consumer to cut output
    # store traffic when D << Dp.
    return out.reshape(B, N, Dp)[..., :D]


# ----------------------------- parameter init --------------------------------
def init_layer_params(key, fin, fout, transfer):
    ks = jax.random.split(key, 6)
    stdv = 1.0 / jnp.sqrt(jnp.float32(fout))
    u = lambda k, shape: jax.random.uniform(k, shape, jnp.float32, -stdv, stdv)
    return {
        "w": u(ks[0], (fin, fout)) if transfer else None,
        "w2": u(ks[1], (fin, fout)),
        "w3": u(ks[2], (fout, fout)),
        "a": u(ks[3], (2 * fout,)),
        "a2": u(ks[4], (2 * fout,)),
        "wc": jax.random.normal(ks[5], (fout,), jnp.float32),  # word_context
        "transfer": transfer,
    }


def init_hhgat(key, input_size, n_hid, output_size, step):
    keys = jax.random.split(key, step)
    layers = [init_layer_params(keys[0], input_size, n_hid, transfer=False)]
    for i in range(step - 2):
        layers.append(init_layer_params(keys[1 + i], n_hid, n_hid, transfer=True))
    layers.append(init_layer_params(keys[step - 1], n_hid, output_size, transfer=True))
    return layers


# ----------------------------- pure-JAX reference ----------------------------
def _layer_ref(x, adj, p):
    D = p["w2"].shape[1]
    x4 = x @ p["w2"]
    xt = x @ p["w"] if p["transfer"] else x
    a, a2, wc = p["a"], p["a2"], p["wc"]
    s1 = _leaky_relu(wc @ a[:D] + x4 @ a[D:])                      # [B, N]
    e1 = jnp.where(adj > 0, s1[:, None, :], NEG_INF)               # [B, E, N]
    att_e = jax.nn.softmax(e1, axis=-1)
    edge = att_e @ xt                                              # [B, E, D]
    e4 = edge @ p["w3"]
    sx = x4 @ a2[:D]                                               # [B, N]
    se = e4 @ a2[D:]                                               # [B, E]
    s2 = _leaky_relu(se[:, :, None] + sx[:, None, :])              # [B, E, N]
    e2 = jnp.where(adj > 0, s2, NEG_INF)
    att_n = jax.nn.softmax(jnp.swapaxes(e2, 1, 2), axis=-1)        # [B, N, E]
    return jax.nn.elu(att_n @ edge)


def _hhgat_ref(x, adj, layers):
    residual = x
    for p in layers:
        x = _layer_ref(x, adj, p) + residual
    return x


# ------------------------------------ main ------------------------------------
if __name__ == "__main__":
    B, N, E, D = 2, 8, 8, 32   # batch, nodes, hyperedges, feature dim
    step = 3
    # residual connection in HHGAT requires input_size == n_hid == output_size
    input_size = n_hid = output_size = D

    key = jax.random.PRNGKey(0)
    kx, ka, kp = jax.random.split(key, 3)
    x = jax.random.normal(kx, (B, N, D), jnp.float32)
    adj = (jax.random.uniform(ka, (B, E, N)) > 0.5).astype(jnp.float32)
    # Guarantee every hyperedge has >= 1 node and every node >= 1 hyperedge so
    # the degenerate all-masked softmax rows (where the reference silently
    # attends uniformly over everything) never appear in the test data.
    adj = jnp.maximum(adj, jnp.eye(E, N, dtype=jnp.float32)[None])

    layers = init_hhgat(kp, input_size, n_hid, output_size, step)
    ref = _hhgat_ref(x, adj, layers)

    # 1) f32 / exact-division path: tight structural check vs the reference.
    out_f32 = jax.block_until_ready(
        hhgat_forward(x, adj, layers, compute_dtype=jnp.float32,
                      approx_reciprocal=False))
    assert out_f32.shape == (B, N, D)
    assert bool(jnp.all(jnp.isfinite(out_f32)))
    assert bool(jnp.allclose(out_f32, ref, atol=1e-3, rtol=1e-3)), \
        "f32 kernel mismatch vs JAX reference"

    # 2) default performance path (bf16 MXU operands, bf16 exponentials,
    #    approx reciprocal): sanity bound vs the f32 reference.
    out = jax.block_until_ready(hhgat_forward(x, adj, layers))
    assert out.shape == (B, N, D)
    assert bool(jnp.all(jnp.isfinite(out)))
    assert float(jnp.max(jnp.abs(out - ref))) < 0.3, \
        "bf16 kernel diverged from reference"

    print("KERNEL_OK")
</pallas_src>

<mosaic_0001>
module attributes {stable_mosaic.version = 11 : i64} {
  func.func @_hhgat_fused_kernel(%arg0: i32, %arg1: memref<16x128xf32, #tpu.memory_space<vmem>>, %arg2: memref<2x8x8xi8, #tpu.memory_space<vmem>>, %arg3: memref<3x128x128xf32, #tpu.memory_space<vmem>>, %arg4: memref<3xf32, #tpu.memory_space<smem>>, %arg5: memref<16x128xf32, #tpu.memory_space<vmem>>) attributes {dimension_semantics = [#tpu.dimension_semantics<parallel>], iteration_bounds = array<i64: 1>, scalar_prefetch = 0 : i64, scratch_operands = 0 : i64, tpu.core_type = #tpu.core_type<tc>, window_params = [{transform_indices = @transform_0, window_bounds = array<i64: 16, 128>}, {transform_indices = @transform_1, window_bounds = array<i64: 2, 8, 8>}, {pipeline_mode = #tpu.pipeline_mode<synchronous>, transform_indices = @transform_2, window_bounds = array<i64: 3, 128, 128>}, {transform_indices = @transform_3, window_bounds = array<i64: 3>}, {transform_indices = @transform_4, window_bounds = array<i64: 16, 128>}]} {
    %c0 = arith.constant 0 : index
    %c0_0 = arith.constant 0 : index
    %c0_1 = arith.constant 0 : index
    %0 = vector.load %arg2[%c0, %c0_0, %c0_1] : memref<2x8x8xi8, #tpu.memory_space<vmem>>, vector<2x8x8xi8>
    %1 = arith.sitofp %0 : vector<2x8x8xi8> to vector<2x8x8xf32>
    %cst = arith.constant 0.000000e+00 : f32
    %2 = vector.broadcast %cst : f32 to vector<2x8x8xf32>
    %3 = arith.cmpf ogt, %1, %2 : vector<2x8x8xf32>
    %cst_2 = arith.constant 0.000000e+00 : f32
    %cst_3 = arith.constant -9.000000e+15 : f32
    %4 = vector.broadcast %cst_2 : f32 to vector<2x8x8xf32>
    %5 = vector.broadcast %cst_3 : f32 to vector<2x8x8xf32>
    %6 = arith.select %3, %4, %5 : vector<2x8x8xi1>, vector<2x8x8xf32>
    %c0_4 = arith.constant 0 : index
    %c0_5 = arith.constant 0 : index
    %7 = vector.load %arg1[%c0_4, %c0_5] : memref<16x128xf32, #tpu.memory_space<vmem>>, vector<16x128xf32>
    %c0_6 = arith.constant 0 : index
    %c0_7 = arith.constant 0 : index
    %c0_8 = arith.constant 0 : index
    %8 = vector.load %arg3[%c0_6, %c0_7, %c0_8] : memref<3x128x128xf32, #tpu.memory_space<vmem>>, vector<1x128x128xf32>
    %9 = vector.shape_cast %8 : vector<1x128x128xf32> to vector<128x128xf32>
    %cst_9 = arith.constant dense<0.000000e+00> : vector<16x128xf32>
    %10 = tpu.matmul %7, %9, %cst_9 {dimension_numbers = #tpu.dot_dimension_numbers<[1], [0], [0], [1], [0, 0, 1, 1], [], []>} : vector<16x128xf32>, vector<128x128xf32>, vector<16x128xf32> -> vector<16x128xf32>
    %c0_10 = arith.constant 0 : index
    %11 = memref.load %arg4[%c0_10] : memref<3xf32, #tpu.memory_space<smem>>
    %12 = vector.extract_strided_slice %10 {offsets = [0, 32], sizes = [16, 1], strides = [1, 1]} : vector<16x128xf32> to vector<16x1xf32>
    %13 = vector.broadcast %11 : f32 to vector<16x1xf32>
    %14 = arith.addf %13, %12 : vector<16x1xf32>
    %cst_11 = arith.constant 0.000000e+00 : f32
    %15 = vector.broadcast %cst_11 : f32 to vector<16x1xf32>
    %16 = arith.cmpf ogt, %14, %15 : vector<16x1xf32>
    %cst_12 = arith.constant 2.000000e-01 : f32
    %17 = vector.broadcast %cst_12 : f32 to vector<16x1xf32>
    %18 = arith.mulf %17, %14 : vector<16x1xf32>
    %19 = arith.select %16, %14, %18 : vector<16x1xi1>, vector<16x1xf32>
    %20 = vector.extract_strided_slice %10 {offsets = [0, 33], sizes = [16, 1], strides = [1, 1]} : vector<16x128xf32> to vector<16x1xf32>
    %21 = vector.extract_strided_slice %6 {offsets = [0, 0, 0], sizes = [1, 8, 8], strides = [1, 1, 1]} : vector<2x8x8xf32> to vector<1x8x8xf32>
    %22 = vector.shape_cast %21 : vector<1x8x8xf32> to vector<8x8xf32>
    %23 = vector.extract_strided_slice %10 {offsets = [0, 0], sizes = [8, 128], strides = [1, 1]} : vector<16x128xf32> to vector<8x128xf32>
    %24 = vector.extract_strided_slice %19 {offsets = [0, 0], sizes = [8, 1], strides = [1, 1]} : vector<16x1xf32> to vector<8x1xf32>
    %25 = vector.extract_strided_slice %20 {offsets = [0, 0], sizes = [8, 1], strides = [1, 1]} : vector<16x1xf32> to vector<8x1xf32>
    %26 = tpu.transpose %24, [1, 0] : vector<8x1xf32> -> vector<1x8xf32>
    %27 = vector.broadcast %26 : vector<1x8xf32> to vector<8x8xf32>
    %28 = arith.addf %27, %22 : vector<8x8xf32>
    %cst_13 = arith.constant dense<0xFF800000> : vector<8xf32>
    %29 = vector.multi_reduction <maximumf>, %28, %cst_13 [1] : vector<8x8xf32> to vector<8xf32>
    %30 = vector.shape_cast %29 : vector<8xf32> to vector<8x1xf32>
    %31 = vector.broadcast %30 : vector<8x1xf32> to vector<8x8xf32>
    %32 = arith.subf %28, %31 : vector<8x8xf32>
    %33 = math.exp %32 : vector<8x8xf32>
    %cst_14 = arith.constant dense<0.000000e+00> : vector<8xf32>
    %34 = vector.multi_reduction <add>, %33, %cst_14 [1] : vector<8x8xf32> to vector<8xf32>
    %35 = vector.shape_cast %34 : vector<8xf32> to vector<8x1xf32>
    %cst_15 = arith.constant 1.000000e+00 : f32
    %36 = vector.broadcast %cst_15 : f32 to vector<8x1xf32>
    %37 = arith.divf %36, %35 : vector<8x1xf32>
    %38 = vector.broadcast %37 : vector<8x1xf32> to vector<8x8xf32>
    %39 = arith.mulf %33, %38 : vector<8x8xf32>
    %cst_16 = arith.constant dense<0.000000e+00> : vector<8x128xf32>
    %40 = tpu.matmul %39, %23, %cst_16 {dimension_numbers = #tpu.dot_dimension_numbers<[1], [0], [0], [1], [0, 0, 1, 1], [], []>} : vector<8x8xf32>, vector<8x128xf32>, vector<8x128xf32> -> vector<8x128xf32>
    %41 = vector.extract_strided_slice %40 {offsets = [0, 34], sizes = [8, 1], strides = [1, 1]} : vector<8x128xf32> to vector<8x1xf32>
    %42 = tpu.transpose %25, [1, 0] : vector<8x1xf32> -> vector<1x8xf32>
    %43 = vector.broadcast %41 : vector<8x1xf32> to vector<8x8xf32>
    %44 = vector.broadcast %42 : vector<1x8xf32> to vector<8x8xf32>
    %45 = arith.addf %43, %44 : vector<8x8xf32>
    %cst_17 = arith.constant 0.000000e+00 : f32
    %46 = vector.broadcast %cst_17 : f32 to vector<8x8xf32>
    %47 = arith.cmpf ogt, %45, %46 : vector<8x8xf32>
    %cst_18 = arith.constant 2.000000e-01 : f32
    %48 = vector.broadcast %cst_18 : f32 to vector<8x8xf32>
    %49 = arith.mulf %48, %45 : vector<8x8xf32>
    %50 = arith.select %47, %45, %49 : vector<8x8xi1>, vector<8x8xf32>
    %51 = arith.addf %50, %22 : vector<8x8xf32>
    %cst_19 = arith.constant dense<0xFF800000> : vector<8xf32>
    %52 = vector.multi_reduction <maximumf>, %51, %cst_19 [0] : vector<8x8xf32> to vector<8xf32>
    %53 = vector.shape_cast %52 : vector<8xf32> to vector<1x8xf32>
    %54 = vector.broadcast %53 : vector<1x8xf32> to vector<8x8xf32>
    %55 = arith.subf %51, %54 : vector<8x8xf32>
    %56 = math.exp %55 : vector<8x8xf32>
    %cst_20 = arith.constant dense<0.000000e+00> : vector<8xf32>
    %57 = vector.multi_reduction <add>, %56, %cst_20 [0] : vector<8x8xf32> to vector<8xf32>
    %58 = vector.shape_cast %57 : vector<8xf32> to vector<1x8xf32>
    %cst_21 = arith.constant 1.000000e+00 : f32
    %59 = vector.broadcast %cst_21 : f32 to vector<1x8xf32>
    %60 = arith.divf %59, %58 : vector<1x8xf32>
    %61 = vector.broadcast %60 : vector<1x8xf32> to vector<8x8xf32>
    %62 = arith.mulf %56, %61 : vector<8x8xf32>
    %cst_22 = arith.constant dense<0.000000e+00> : vector<8x128xf32>
    %63 = tpu.matmul %62, %40, %cst_22 {dimension_numbers = #tpu.dot_dimension_numbers<[0], [0], [1], [1], [0, 1, 1, 1], [], []>} : vector<8x8xf32>, vector<8x128xf32>, vector<8x128xf32> -> vector<8x128xf32>
    %cst_23 = arith.constant 0.000000e+00 : f32
    %64 = vector.broadcast %cst_23 : f32 to vector<8x128xf32>
    %65 = arith.cmpf ogt, %63, %64 : vector<8x128xf32>
    %66 = math.exp %63 : vector<8x128xf32>
    %cst_24 = arith.constant 1.000000e+00 : f32
    %67 = vector.broadcast %cst_24 : f32 to vector<8x128xf32>
    %68 = arith.subf %66, %67 : vector<8x128xf32>
    %69 = arith.select %65, %63, %68 : vector<8x128xi1>, vector<8x128xf32>
    %70 = vector.extract_strided_slice %7 {offsets = [0, 0], sizes = [8, 128], strides = [1, 1]} : vector<16x128xf32> to vector<8x128xf32>
    %71 = arith.addf %69, %70 : vector<8x128xf32>
    %72 = vector.extract_strided_slice %6 {offsets = [1, 0, 0], sizes = [1, 8, 8], strides = [1, 1, 1]} : vector<2x8x8xf32> to vector<1x8x8xf32>
    %73 = vector.shape_cast %72 : vector<1x8x8xf32> to vector<8x8xf32>
    %74 = vector.extract_strided_slice %10 {offsets = [8, 0], sizes = [8, 128], strides = [1, 1]} : vector<16x128xf32> to vector<8x128xf32>
    %75 = vector.extract_strided_slice %19 {offsets = [8, 0], sizes = [8, 1], strides = [1, 1]} : vector<16x1xf32> to vector<8x1xf32>
    %76 = vector.extract_strided_slice %20 {offsets = [8, 0], sizes = [8, 1], strides = [1, 1]} : vector<16x1xf32> to vector<8x1xf32>
    %77 = tpu.transpose %75, [1, 0] : vector<8x1xf32> -> vector<1x8xf32>
    %78 = vector.broadcast %77 : vector<1x8xf32> to vector<8x8xf32>
    %79 = arith.addf %78, %73 : vector<8x8xf32>
    %cst_25 = arith.constant dense<0xFF800000> : vector<8xf32>
    %80 = vector.multi_reduction <maximumf>, %79, %cst_25 [1] : vector<8x8xf32> to vector<8xf32>
    %81 = vector.shape_cast %80 : vector<8xf32> to vector<8x1xf32>
    %82 = vector.broadcast %81 : vector<8x1xf32> to vector<8x8xf32>
    %83 = arith.subf %79, %82 : vector<8x8xf32>
    %84 = math.exp %83 : vector<8x8xf32>
    %cst_26 = arith.constant dense<0.000000e+00> : vector<8xf32>
    %85 = vector.multi_reduction <add>, %84, %cst_26 [1] : vector<8x8xf32> to vector<8xf32>
    %86 = vector.shape_cast %85 : vector<8xf32> to vector<8x1xf32>
    %cst_27 = arith.constant 1.000000e+00 : f32
    %87 = vector.broadcast %cst_27 : f32 to vector<8x1xf32>
    %88 = arith.divf %87, %86 : vector<8x1xf32>
    %89 = vector.broadcast %88 : vector<8x1xf32> to vector<8x8xf32>
    %90 = arith.mulf %84, %89 : vector<8x8xf32>
    %cst_28 = arith.constant dense<0.000000e+00> : vector<8x128xf32>
    %91 = tpu.matmul %90, %74, %cst_28 {dimension_numbers = #tpu.dot_dimension_numbers<[1], [0], [0], [1], [0, 0, 1, 1], [], []>} : vector<8x8xf32>, vector<8x128xf32>, vector<8x128xf32> -> vector<8x128xf32>
    %92 = vector.extract_strided_slice %91 {offsets = [0, 34], sizes = [8, 1], strides = [1, 1]} : vector<8x128xf32> to vector<8x1xf32>
    %93 = tpu.transpose %76, [1, 0] : vector<8x1xf32> -> vector<1x8xf32>
    %94 = vector.broadcast %92 : vector<8x1xf32> to vector<8x8xf32>
    %95 = vector.broadcast %93 : vector<1x8xf32> to vector<8x8xf32>
    %96 = arith.addf %94, %95 : vector<8x8xf32>
    %cst_29 = arith.constant 0.000000e+00 : f32
    %97 = vector.broadcast %cst_29 : f32 to vector<8x8xf32>
    %98 = arith.cmpf ogt, %96, %97 : vector<8x8xf32>
    %cst_30 = arith.constant 2.000000e-01 : f32
    %99 = vector.broadcast %cst_30 : f32 to vector<8x8xf32>
    %100 = arith.mulf %99, %96 : vector<8x8xf32>
    %101 = arith.select %98, %96, %100 : vector<8x8xi1>, vector<8x8xf32>
    %102 = arith.addf %101, %73 : vector<8x8xf32>
    %cst_31 = arith.constant dense<0xFF800000> : vector<8xf32>
    %103 = vector.multi_reduction <maximumf>, %102, %cst_31 [0] : vector<8x8xf32> to vector<8xf32>
    %104 = vector.shape_cast %103 : vector<8xf32> to vector<1x8xf32>
    %105 = vector.broadcast %104 : vector<1x8xf32> to vector<8x8xf32>
    %106 = arith.subf %102, %105 : vector<8x8xf32>
    %107 = math.exp %106 : vector<8x8xf32>
    %cst_32 = arith.constant dense<0.000000e+00> : vector<8xf32>
    %108 = vector.multi_reduction <add>, %107, %cst_32 [0] : vector<8x8xf32> to vector<8xf32>
    %109 = vector.shape_cast %108 : vector<8xf32> to vector<1x8xf32>
    %cst_33 = arith.constant 1.000000e+00 : f32
    %110 = vector.broadcast %cst_33 : f32 to vector<1x8xf32>
    %111 = arith.divf %110, %109 : vector<1x8xf32>
    %112 = vector.broadcast %111 : vector<1x8xf32> to vector<8x8xf32>
    %113 = arith.mulf %107, %112 : vector<8x8xf32>
    %cst_34 = arith.constant dense<0.000000e+00> : vector<8x128xf32>
    %114 = tpu.matmul %113, %91, %cst_34 {dimension_numbers = #tpu.dot_dimension_numbers<[0], [0], [1], [1], [0, 1, 1, 1], [], []>} : vector<8x8xf32>, vector<8x128xf32>, vector<8x128xf32> -> vector<8x128xf32>
    %cst_35 = arith.constant 0.000000e+00 : f32
    %115 = vector.broadcast %cst_35 : f32 to vector<8x128xf32>
    %116 = arith.cmpf ogt, %114, %115 : vector<8x128xf32>
    %117 = math.exp %114 : vector<8x128xf32>
    %cst_36 = arith.constant 1.000000e+00 : f32
    %118 = vector.broadcast %cst_36 : f32 to vector<8x128xf32>
    %119 = arith.subf %117, %118 : vector<8x128xf32>
    %120 = arith.select %116, %114, %119 : vector<8x128xi1>, vector<8x128xf32>
    %121 = vector.extract_strided_slice %7 {offsets = [8, 0], sizes = [8, 128], strides = [1, 1]} : vector<16x128xf32> to vector<8x128xf32>
    %122 = arith.addf %120, %121 : vector<8x128xf32>
    %123 = tpu.concatenate %71, %122 in 0 : vector<8x128xf32>, vector<8x128xf32> -> vector<16x128xf32>
    %c1 = arith.constant 1 : index
    %c0_37 = arith.constant 0 : index
    %c0_38 = arith.constant 0 : index
    %124 = vector.load %arg3[%c1, %c0_37, %c0_38] : memref<3x128x128xf32, #tpu.memory_space<vmem>>, vector<1x128x128xf32>
    %125 = vector.shape_cast %124 : vector<1x128x128xf32> to vector<128x128xf32>
    %cst_39 = arith.constant dense<0.000000e+00> : vector<16x128xf32>
    %126 = tpu.matmul %123, %125, %cst_39 {dimension_numbers = #tpu.dot_dimension_numbers<[1], [0], [0], [1], [0, 0, 1, 1], [], []>} : vector<16x128xf32>, vector<128x128xf32>, vector<16x128xf32> -> vector<16x128xf32>
    %c1_40 = arith.constant 1 : index
    %127 = memref.load %arg4[%c1_40] : memref<3xf32, #tpu.memory_space<smem>>
    %128 = vector.extract_strided_slice %126 {offsets = [0, 32], sizes = [16, 1], strides = [1, 1]} : vector<16x128xf32> to vector<16x1xf32>
    %129 = vector.broadcast %127 : f32 to vector<16x1xf32>
    %130 = arith.addf %129, %128 : vector<16x1xf32>
    %cst_41 = arith.constant 0.000000e+00 : f32
    %131 = vector.broadcast %cst_41 : f32 to vector<16x1xf32>
    %132 = arith.cmpf ogt, %130, %131 : vector<16x1xf32>
    %cst_42 = arith.constant 2.000000e-01 : f32
    %133 = vector.broadcast %cst_42 : f32 to vector<16x1xf32>
    %134 = arith.mulf %133, %130 : vector<16x1xf32>
    %135 = arith.select %132, %130, %134 : vector<16x1xi1>, vector<16x1xf32>
    %136 = vector.extract_strided_slice %126 {offsets = [0, 33], sizes = [16, 1], strides = [1, 1]} : vector<16x128xf32> to vector<16x1xf32>
    %137 = vector.extract_strided_slice %6 {offsets = [0, 0, 0], sizes = [1, 8, 8], strides = [1, 1, 1]} : vector<2x8x8xf32> to vector<1x8x8xf32>
    %138 = vector.shape_cast %137 : vector<1x8x8xf32> to vector<8x8xf32>
    %139 = vector.extract_strided_slice %126 {offsets = [0, 0], sizes = [8, 128], strides = [1, 1]} : vector<16x128xf32> to vector<8x128xf32>
    %140 = vector.extract_strided_slice %135 {offsets = [0, 0], sizes = [8, 1], strides = [1, 1]} : vector<16x1xf32> to vector<8x1xf32>
    %141 = vector.extract_strided_slice %136 {offsets = [0, 0], sizes = [8, 1], strides = [1, 1]} : vector<16x1xf32> to vector<8x1xf32>
    %142 = tpu.transpose %140, [1, 0] : vector<8x1xf32> -> vector<1x8xf32>
    %143 = vector.broadcast %142 : vector<1x8xf32> to vector<8x8xf32>
    %144 = arith.addf %143, %138 : vector<8x8xf32>
    %cst_43 = arith.constant dense<0xFF800000> : vector<8xf32>
    %145 = vector.multi_reduction <maximumf>, %144, %cst_43 [1] : vector<8x8xf32> to vector<8xf32>
    %146 = vector.shape_cast %145 : vector<8xf32> to vector<8x1xf32>
    %147 = vector.broadcast %146 : vector<8x1xf32> to vector<8x8xf32>
    %148 = arith.subf %144, %147 : vector<8x8xf32>
    %149 = math.exp %148 : vector<8x8xf32>
    %cst_44 = arith.constant dense<0.000000e+00> : vector<8xf32>
    %150 = vector.multi_reduction <add>, %149, %cst_44 [1] : vector<8x8xf32> to vector<8xf32>
    %151 = vector.shape_cast %150 : vector<8xf32> to vector<8x1xf32>
    %cst_45 = arith.constant 1.000000e+00 : f32
    %152 = vector.broadcast %cst_45 : f32 to vector<8x1xf32>
    %153 = arith.divf %152, %151 : vector<8x1xf32>
    %154 = vector.broadcast %153 : vector<8x1xf32> to vector<8x8xf32>
    %155 = arith.mulf %149, %154 : vector<8x8xf32>
    %cst_46 = arith.constant dense<0.000000e+00> : vector<8x128xf32>
    %156 = tpu.matmul %155, %139, %cst_46 {dimension_numbers = #tpu.dot_dimension_numbers<[1], [0], [0], [1], [0, 0, 1, 1], [], []>} : vector<8x8xf32>, vector<8x128xf32>, vector<8x128xf32> -> vector<8x128xf32>
    %157 = vector.extract_strided_slice %156 {offsets = [0, 34], sizes = [8, 1], strides = [1, 1]} : vector<8x128xf32> to vector<8x1xf32>
    %158 = tpu.transpose %141, [1, 0] : vector<8x1xf32> -> vector<1x8xf32>
    %159 = vector.broadcast %157 : vector<8x1xf32> to vector<8x8xf32>
    %160 = vector.broadcast %158 : vector<1x8xf32> to vector<8x8xf32>
    %161 = arith.addf %159, %160 : vector<8x8xf32>
    %cst_47 = arith.constant 0.000000e+00 : f32
    %162 = vector.broadcast %cst_47 : f32 to vector<8x8xf32>
    %163 = arith.cmpf ogt, %161, %162 : vector<8x8xf32>
    %cst_48 = arith.constant 2.000000e-01 : f32
    %164 = vector.broadcast %cst_48 : f32 to vector<8x8xf32>
    %165 = arith.mulf %164, %161 : vector<8x8xf32>
    %166 = arith.select %163, %161, %165 : vector<8x8xi1>, vector<8x8xf32>
    %167 = arith.addf %166, %138 : vector<8x8xf32>
    %cst_49 = arith.constant dense<0xFF800000> : vector<8xf32>
    %168 = vector.multi_reduction <maximumf>, %167, %cst_49 [0] : vector<8x8xf32> to vector<8xf32>
    %169 = vector.shape_cast %168 : vector<8xf32> to vector<1x8xf32>
    %170 = vector.broadcast %169 : vector<1x8xf32> to vector<8x8xf32>
    %171 = arith.subf %167, %170 : vector<8x8xf32>
    %172 = math.exp %171 : vector<8x8xf32>
    %cst_50 = arith.constant dense<0.000000e+00> : vector<8xf32>
    %173 = vector.multi_reduction <add>, %172, %cst_50 [0] : vector<8x8xf32> to vector<8xf32>
    %174 = vector.shape_cast %173 : vector<8xf32> to vector<1x8xf32>
    %cst_51 = arith.constant 1.000000e+00 : f32
    %175 = vector.broadcast %cst_51 : f32 to vector<1x8xf32>
    %176 = arith.divf %175, %174 : vector<1x8xf32>
    %177 = vector.broadcast %176 : vector<1x8xf32> to vector<8x8xf32>
    %178 = arith.mulf %172, %177 : vector<8x8xf32>
    %cst_52 = arith.constant dense<0.000000e+00> : vector<8x128xf32>
    %179 = tpu.matmul %178, %156, %cst_52 {dimension_numbers = #tpu.dot_dimension_numbers<[0], [0], [1], [1], [0, 1, 1, 1], [], []>} : vector<8x8xf32>, vector<8x128xf32>, vector<8x128xf32> -> vector<8x128xf32>
    %cst_53 = arith.constant 0.000000e+00 : f32
    %180 = vector.broadcast %cst_53 : f32 to vector<8x128xf32>
    %181 = arith.cmpf ogt, %179, %180 : vector<8x128xf32>
    %182 = math.exp %179 : vector<8x128xf32>
    %cst_54 = arith.constant 1.000000e+00 : f32
    %183 = vector.broadcast %cst_54 : f32 to vector<8x128xf32>
    %184 = arith.subf %182, %183 : vector<8x128xf32>
    %185 = arith.select %181, %179, %184 : vector<8x128xi1>, vector<8x128xf32>
    %186 = vector.extract_strided_slice %7 {offsets = [0, 0], sizes = [8, 128], strides = [1, 1]} : vector<16x128xf32> to vector<8x128xf32>
    %187 = arith.addf %185, %186 : vector<8x128xf32>
    %188 = vector.extract_strided_slice %6 {offsets = [1, 0, 0], sizes = [1, 8, 8], strides = [1, 1, 1]} : vector<2x8x8xf32> to vector<1x8x8xf32>
    %189 = vector.shape_cast %188 : vector<1x8x8xf32> to vector<8x8xf32>
    %190 = vector.extract_strided_slice %126 {offsets = [8, 0], sizes = [8, 128], strides = [1, 1]} : vector<16x128xf32> to vector<8x128xf32>
    %191 = vector.extract_strided_slice %135 {offsets = [8, 0], sizes = [8, 1], strides = [1, 1]} : vector<16x1xf32> to vector<8x1xf32>
    %192 = vector.extract_strided_slice %136 {offsets = [8, 0], sizes = [8, 1], strides = [1, 1]} : vector<16x1xf32> to vector<8x1xf32>
    %193 = tpu.transpose %191, [1, 0] : vector<8x1xf32> -> vector<1x8xf32>
    %194 = vector.broadcast %193 : vector<1x8xf32> to vector<8x8xf32>
    %195 = arith.addf %194, %189 : vector<8x8xf32>
    %cst_55 = arith.constant dense<0xFF800000> : vector<8xf32>
    %196 = vector.multi_reduction <maximumf>, %195, %cst_55 [1] : vector<8x8xf32> to vector<8xf32>
    %197 = vector.shape_cast %196 : vector<8xf32> to vector<8x1xf32>
    %198 = vector.broadcast %197 : vector<8x1xf32> to vector<8x8xf32>
    %199 = arith.subf %195, %198 : vector<8x8xf32>
    %200 = math.exp %199 : vector<8x8xf32>
    %cst_56 = arith.constant dense<0.000000e+00> : vector<8xf32>
    %201 = vector.multi_reduction <add>, %200, %cst_56 [1] : vector<8x8xf32> to vector<8xf32>
    %202 = vector.shape_cast %201 : vector<8xf32> to vector<8x1xf32>
    %cst_57 = arith.constant 1.000000e+00 : f32
    %203 = vector.broadcast %cst_57 : f32 to vector<8x1xf32>
    %204 = arith.divf %203, %202 : vector<8x1xf32>
    %205 = vector.broadcast %204 : vector<8x1xf32> to vector<8x8xf32>
    %206 = arith.mulf %200, %205 : vector<8x8xf32>
    %cst_58 = arith.constant dense<0.000000e+00> : vector<8x128xf32>
    %207 = tpu.matmul %206, %190, %cst_58 {dimension_numbers = #tpu.dot_dimension_numbers<[1], [0], [0], [1], [0, 0, 1, 1], [], []>} : vector<8x8xf32>, vector<8x128xf32>, vector<8x128xf32> -> vector<8x128xf32>
    %208 = vector.extract_strided_slice %207 {offsets = [0, 34], sizes = [8, 1], strides = [1, 1]} : vector<8x128xf32> to vector<8x1xf32>
    %209 = tpu.transpose %192, [1, 0] : vector<8x1xf32> -> vector<1x8xf32>
    %210 = vector.broadcast %208 : vector<8x1xf32> to vector<8x8xf32>
    %211 = vector.broadcast %209 : vector<1x8xf32> to vector<8x8xf32>
    %212 = arith.addf %210, %211 : vector<8x8xf32>
    %cst_59 = arith.constant 0.000000e+00 : f32
    %213 = vector.broadcast %cst_59 : f32 to vector<8x8xf32>
    %214 = arith.cmpf ogt, %212, %213 : vector<8x8xf32>
    %cst_60 = arith.constant 2.000000e-01 : f32
    %215 = vector.broadcast %cst_60 : f32 to vector<8x8xf32>
    %216 = arith.mulf %215, %212 : vector<8x8xf32>
    %217 = arith.select %214, %212, %216 : vector<8x8xi1>, vector<8x8xf32>
    %218 = arith.addf %217, %189 : vector<8x8xf32>
    %cst_61 = arith.constant dense<0xFF800000> : vector<8xf32>
    %219 = vector.multi_reduction <maximumf>, %218, %cst_61 [0] : vector<8x8xf32> to vector<8xf32>
    %220 = vector.shape_cast %219 : vector<8xf32> to vector<1x8xf32>
    %221 = vector.broadcast %220 : vector<1x8xf32> to vector<8x8xf32>
    %222 = arith.subf %218, %221 : vector<8x8xf32>
    %223 = math.exp %222 : vector<8x8xf32>
    %cst_62 = arith.constant dense<0.000000e+00> : vector<8xf32>
    %224 = vector.multi_reduction <add>, %223, %cst_62 [0] : vector<8x8xf32> to vector<8xf32>
    %225 = vector.shape_cast %224 : vector<8xf32> to vector<1x8xf32>
    %cst_63 = arith.constant 1.000000e+00 : f32
    %226 = vector.broadcast %cst_63 : f32 to vector<1x8xf32>
    %227 = arith.divf %226, %225 : vector<1x8xf32>
    %228 = vector.broadcast %227 : vector<1x8xf32> to vector<8x8xf32>
    %229 = arith.mulf %223, %228 : vector<8x8xf32>
    %cst_64 = arith.constant dense<0.000000e+00> : vector<8x128xf32>
    %230 = tpu.matmul %229, %207, %cst_64 {dimension_numbers = #tpu.dot_dimension_numbers<[0], [0], [1], [1], [0, 1, 1, 1], [], []>} : vector<8x8xf32>, vector<8x128xf32>, vector<8x128xf32> -> vector<8x128xf32>
    %cst_65 = arith.constant 0.000000e+00 : f32
    %231 = vector.broadcast %cst_65 : f32 to vector<8x128xf32>
    %232 = arith.cmpf ogt, %230, %231 : vector<8x128xf32>
    %233 = math.exp %230 : vector<8x128xf32>
    %cst_66 = arith.constant 1.000000e+00 : f32
    %234 = vector.broadcast %cst_66 : f32 to vector<8x128xf32>
    %235 = arith.subf %233, %234 : vector<8x128xf32>
    %236 = arith.select %232, %230, %235 : vector<8x128xi1>, vector<8x128xf32>
    %237 = vector.extract_strided_slice %7 {offsets = [8, 0], sizes = [8, 128], strides = [1, 1]} : vector<16x128xf32> to vector<8x128xf32>
    %238 = arith.addf %236, %237 : vector<8x128xf32>
    %239 = tpu.concatenate %187, %238 in 0 : vector<8x128xf32>, vector<8x128xf32> -> vector<16x128xf32>
    %c2 = arith.constant 2 : index
    %c0_67 = arith.constant 0 : index
    %c0_68 = arith.constant 0 : index
    %240 = vector.load %arg3[%c2, %c0_67, %c0_68] : memref<3x128x128xf32, #tpu.memory_space<vmem>>, vector<1x128x128xf32>
    %241 = vector.shape_cast %240 : vector<1x128x128xf32> to vector<128x128xf32>
    %cst_69 = arith.constant dense<0.000000e+00> : vector<16x128xf32>
    %242 = tpu.matmul %239, %241, %cst_69 {dimension_numbers = #tpu.dot_dimension_numbers<[1], [0], [0], [1], [0, 0, 1, 1], [], []>} : vector<16x128xf32>, vector<128x128xf32>, vector<16x128xf32> -> vector<16x128xf32>
    %c2_70 = arith.constant 2 : index
    %243 = memref.load %arg4[%c2_70] : memref<3xf32, #tpu.memory_space<smem>>
    %244 = vector.extract_strided_slice %242 {offsets = [0, 32], sizes = [16, 1], strides = [1, 1]} : vector<16x128xf32> to vector<16x1xf32>
    %245 = vector.broadcast %243 : f32 to vector<16x1xf32>
    %246 = arith.addf %245, %244 : vector<16x1xf32>
    %cst_71 = arith.constant 0.000000e+00 : f32
    %247 = vector.broadcast %cst_71 : f32 to vector<16x1xf32>
    %248 = arith.cmpf ogt, %246, %247 : vector<16x1xf32>
    %cst_72 = arith.constant 2.000000e-01 : f32
    %249 = vector.broadcast %cst_72 : f32 to vector<16x1xf32>
    %250 = arith.mulf %249, %246 : vector<16x1xf32>
    %251 = arith.select %248, %246, %250 : vector<16x1xi1>, vector<16x1xf32>
    %252 = vector.extract_strided_slice %242 {offsets = [0, 33], sizes = [16, 1], strides = [1, 1]} : vector<16x128xf32> to vector<16x1xf32>
    %253 = vector.extract_strided_slice %6 {offsets = [0, 0, 0], sizes = [1, 8, 8], strides = [1, 1, 1]} : vector<2x8x8xf32> to vector<1x8x8xf32>
    %254 = vector.shape_cast %253 : vector<1x8x8xf32> to vector<8x8xf32>
    %255 = vector.extract_strided_slice %242 {offsets = [0, 0], sizes = [8, 128], strides = [1, 1]} : vector<16x128xf32> to vector<8x128xf32>
    %256 = vector.extract_strided_slice %251 {offsets = [0, 0], sizes = [8, 1], strides = [1, 1]} : vector<16x1xf32> to vector<8x1xf32>
    %257 = vector.extract_strided_slice %252 {offsets = [0, 0], sizes = [8, 1], strides = [1, 1]} : vector<16x1xf32> to vector<8x1xf32>
    %258 = tpu.transpose %256, [1, 0] : vector<8x1xf32> -> vector<1x8xf32>
    %259 = vector.broadcast %258 : vector<1x8xf32> to vector<8x8xf32>
    %260 = arith.addf %259, %254 : vector<8x8xf32>
    %cst_73 = arith.constant dense<0xFF800000> : vector<8xf32>
    %261 = vector.multi_reduction <maximumf>, %260, %cst_73 [1] : vector<8x8xf32> to vector<8xf32>
    %262 = vector.shape_cast %261 : vector<8xf32> to vector<8x1xf32>
    %263 = vector.broadcast %262 : vector<8x1xf32> to vector<8x8xf32>
    %264 = arith.subf %260, %263 : vector<8x8xf32>
    %265 = math.exp %264 : vector<8x8xf32>
    %cst_74 = arith.constant dense<0.000000e+00> : vector<8xf32>
    %266 = vector.multi_reduction <add>, %265, %cst_74 [1] : vector<8x8xf32> to vector<8xf32>
    %267 = vector.shape_cast %266 : vector<8xf32> to vector<8x1xf32>
    %cst_75 = arith.constant 1.000000e+00 : f32
    %268 = vector.broadcast %cst_75 : f32 to vector<8x1xf32>
    %269 = arith.divf %268, %267 : vector<8x1xf32>
    %270 = vector.broadcast %269 : vector<8x1xf32> to vector<8x8xf32>
    %271 = arith.mulf %265, %270 : vector<8x8xf32>
    %cst_76 = arith.constant dense<0.000000e+00> : vector<8x128xf32>
    %272 = tpu.matmul %271, %255, %cst_76 {dimension_numbers = #tpu.dot_dimension_numbers<[1], [0], [0], [1], [0, 0, 1, 1], [], []>} : vector<8x8xf32>, vector<8x128xf32>, vector<8x128xf32> -> vector<8x128xf32>
    %273 = vector.extract_strided_slice %272 {offsets = [0, 34], sizes = [8, 1], strides = [1, 1]} : vector<8x128xf32> to vector<8x1xf32>
    %274 = tpu.transpose %257, [1, 0] : vector<8x1xf32> -> vector<1x8xf32>
    %275 = vector.broadcast %273 : vector<8x1xf32> to vector<8x8xf32>
    %276 = vector.broadcast %274 : vector<1x8xf32> to vector<8x8xf32>
    %277 = arith.addf %275, %276 : vector<8x8xf32>
    %cst_77 = arith.constant 0.000000e+00 : f32
    %278 = vector.broadcast %cst_77 : f32 to vector<8x8xf32>
    %279 = arith.cmpf ogt, %277, %278 : vector<8x8xf32>
    %cst_78 = arith.constant 2.000000e-01 : f32
    %280 = vector.broadcast %cst_78 : f32 to vector<8x8xf32>
    %281 = arith.mulf %280, %277 : vector<8x8xf32>
    %282 = arith.select %279, %277, %281 : vector<8x8xi1>, vector<8x8xf32>
    %283 = arith.addf %282, %254 : vector<8x8xf32>
    %cst_79 = arith.constant dense<0xFF800000> : vector<8xf32>
    %284 = vector.multi_reduction <maximumf>, %283, %cst_79 [0] : vector<8x8xf32> to vector<8xf32>
    %285 = vector.shape_cast %284 : vector<8xf32> to vector<1x8xf32>
    %286 = vector.broadcast %285 : vector<1x8xf32> to vector<8x8xf32>
    %287 = arith.subf %283, %286 : vector<8x8xf32>
    %288 = math.exp %287 : vector<8x8xf32>
    %cst_80 = arith.constant dense<0.000000e+00> : vector<8xf32>
    %289 = vector.multi_reduction <add>, %288, %cst_80 [0] : vector<8x8xf32> to vector<8xf32>
    %290 = vector.shape_cast %289 : vector<8xf32> to vector<1x8xf32>
    %cst_81 = arith.constant 1.000000e+00 : f32
    %291 = vector.broadcast %cst_81 : f32 to vector<1x8xf32>
    %292 = arith.divf %291, %290 : vector<1x8xf32>
    %293 = vector.broadcast %292 : vector<1x8xf32> to vector<8x8xf32>
    %294 = arith.mulf %288, %293 : vector<8x8xf32>
    %cst_82 = arith.constant dense<0.000000e+00> : vector<8x128xf32>
    %295 = tpu.matmul %294, %272, %cst_82 {dimension_numbers = #tpu.dot_dimension_numbers<[0], [0], [1], [1], [0, 1, 1, 1], [], []>} : vector<8x8xf32>, vector<8x128xf32>, vector<8x128xf32> -> vector<8x128xf32>
    %cst_83 = arith.constant 0.000000e+00 : f32
    %296 = vector.broadcast %cst_83 : f32 to vector<8x128xf32>
    %297 = arith.cmpf ogt, %295, %296 : vector<8x128xf32>
    %298 = math.exp %295 : vector<8x128xf32>
    %cst_84 = arith.constant 1.000000e+00 : f32
    %299 = vector.broadcast %cst_84 : f32 to vector<8x128xf32>
    %300 = arith.subf %298, %299 : vector<8x128xf32>
    %301 = arith.select %297, %295, %300 : vector<8x128xi1>, vector<8x128xf32>
    %302 = vector.extract_strided_slice %7 {offsets = [0, 0], sizes = [8, 128], strides = [1, 1]} : vector<16x128xf32> to vector<8x128xf32>
    %303 = arith.addf %301, %302 : vector<8x128xf32>
    %304 = vector.extract_strided_slice %6 {offsets = [1, 0, 0], sizes = [1, 8, 8], strides = [1, 1, 1]} : vector<2x8x8xf32> to vector<1x8x8xf32>
    %305 = vector.shape_cast %304 : vector<1x8x8xf32> to vector<8x8xf32>
    %306 = vector.extract_strided_slice %242 {offsets = [8, 0], sizes = [8, 128], strides = [1, 1]} : vector<16x128xf32> to vector<8x128xf32>
    %307 = vector.extract_strided_slice %251 {offsets = [8, 0], sizes = [8, 1], strides = [1, 1]} : vector<16x1xf32> to vector<8x1xf32>
    %308 = vector.extract_strided_slice %252 {offsets = [8, 0], sizes = [8, 1], strides = [1, 1]} : vector<16x1xf32> to vector<8x1xf32>
    %309 = tpu.transpose %307, [1, 0] : vector<8x1xf32> -> vector<1x8xf32>
    %310 = vector.broadcast %309 : vector<1x8xf32> to vector<8x8xf32>
    %311 = arith.addf %310, %305 : vector<8x8xf32>
    %cst_85 = arith.constant dense<0xFF800000> : vector<8xf32>
    %312 = vector.multi_reduction <maximumf>, %311, %cst_85 [1] : vector<8x8xf32> to vector<8xf32>
    %313 = vector.shape_cast %312 : vector<8xf32> to vector<8x1xf32>
    %314 = vector.broadcast %313 : vector<8x1xf32> to vector<8x8xf32>
    %315 = arith.subf %311, %314 : vector<8x8xf32>
    %316 = math.exp %315 : vector<8x8xf32>
    %cst_86 = arith.constant dense<0.000000e+00> : vector<8xf32>
    %317 = vector.multi_reduction <add>, %316, %cst_86 [1] : vector<8x8xf32> to vector<8xf32>
    %318 = vector.shape_cast %317 : vector<8xf32> to vector<8x1xf32>
    %cst_87 = arith.constant 1.000000e+00 : f32
    %319 = vector.broadcast %cst_87 : f32 to vector<8x1xf32>
    %320 = arith.divf %319, %318 : vector<8x1xf32>
    %321 = vector.broadcast %320 : vector<8x1xf32> to vector<8x8xf32>
    %322 = arith.mulf %316, %321 : vector<8x8xf32>
    %cst_88 = arith.constant dense<0.000000e+00> : vector<8x128xf32>
    %323 = tpu.matmul %322, %306, %cst_88 {dimension_numbers = #tpu.dot_dimension_numbers<[1], [0], [0], [1], [0, 0, 1, 1], [], []>} : vector<8x8xf32>, vector<8x128xf32>, vector<8x128xf32> -> vector<8x128xf32>
    %324 = vector.extract_strided_slice %323 {offsets = [0, 34], sizes = [8, 1], strides = [1, 1]} : vector<8x128xf32> to vector<8x1xf32>
    %325 = tpu.transpose %308, [1, 0] : vector<8x1xf32> -> vector<1x8xf32>
    %326 = vector.broadcast %324 : vector<8x1xf32> to vector<8x8xf32>
    %327 = vector.broadcast %325 : vector<1x8xf32> to vector<8x8xf32>
    %328 = arith.addf %326, %327 : vector<8x8xf32>
    %cst_89 = arith.constant 0.000000e+00 : f32
    %329 = vector.broadcast %cst_89 : f32 to vector<8x8xf32>
    %330 = arith.cmpf ogt, %328, %329 : vector<8x8xf32>
    %cst_90 = arith.constant 2.000000e-01 : f32
    %331 = vector.broadcast %cst_90 : f32 to vector<8x8xf32>
    %332 = arith.mulf %331, %328 : vector<8x8xf32>
    %333 = arith.select %330, %328, %332 : vector<8x8xi1>, vector<8x8xf32>
    %334 = arith.addf %333, %305 : vector<8x8xf32>
    %cst_91 = arith.constant dense<0xFF800000> : vector<8xf32>
    %335 = vector.multi_reduction <maximumf>, %334, %cst_91 [0] : vector<8x8xf32> to vector<8xf32>
    %336 = vector.shape_cast %335 : vector<8xf32> to vector<1x8xf32>
    %337 = vector.broadcast %336 : vector<1x8xf32> to vector<8x8xf32>
    %338 = arith.subf %334, %337 : vector<8x8xf32>
    %339 = math.exp %338 : vector<8x8xf32>
    %cst_92 = arith.constant dense<0.000000e+00> : vector<8xf32>
    %340 = vector.multi_reduction <add>, %339, %cst_92 [0] : vector<8x8xf32> to vector<8xf32>
    %341 = vector.shape_cast %340 : vector<8xf32> to vector<1x8xf32>
    %cst_93 = arith.constant 1.000000e+00 : f32
    %342 = vector.broadcast %cst_93 : f32 to vector<1x8xf32>
    %343 = arith.divf %342, %341 : vector<1x8xf32>
    %344 = vector.broadcast %343 : vector<1x8xf32> to vector<8x8xf32>
    %345 = arith.mulf %339, %344 : vector<8x8xf32>
    %cst_94 = arith.constant dense<0.000000e+00> : vector<8x128xf32>
    %346 = tpu.matmul %345, %323, %cst_94 {dimension_numbers = #tpu.dot_dimension_numbers<[0], [0], [1], [1], [0, 1, 1, 1], [], []>} : vector<8x8xf32>, vector<8x128xf32>, vector<8x128xf32> -> vector<8x128xf32>
    %cst_95 = arith.constant 0.000000e+00 : f32
    %347 = vector.broadcast %cst_95 : f32 to vector<8x128xf32>
    %348 = arith.cmpf ogt, %346, %347 : vector<8x128xf32>
    %349 = math.exp %346 : vector<8x128xf32>
    %cst_96 = arith.constant 1.000000e+00 : f32
    %350 = vector.broadcast %cst_96 : f32 to vector<8x128xf32>
    %351 = arith.subf %349, %350 : vector<8x128xf32>
    %352 = arith.select %348, %346, %351 : vector<8x128xi1>, vector<8x128xf32>
    %353 = vector.extract_strided_slice %7 {offsets = [8, 0], sizes = [8, 128], strides = [1, 1]} : vector<16x128xf32> to vector<8x128xf32>
    %354 = arith.addf %352, %353 : vector<8x128xf32>
    %355 = tpu.concatenate %303, %354 in 0 : vector<8x128xf32>, vector<8x128xf32> -> vector<16x128xf32>
    %c0_97 = arith.constant 0 : index
    %c0_98 = arith.constant 0 : index
    %356 = vector.load %arg5[%c0_97, %c0_98] : memref<16x128xf32, #tpu.memory_space<vmem>>, vector<16x128xf32>
    tpu.vector_store %arg5[%c0_97, %c0_98], %355 {strides = array<i32>} : memref<16x128xf32, #tpu.memory_space<vmem>>, vector<16x128xf32>,
    return
  }
  func.func @transform_0(%arg0: i32) -> (i32, i32) {
    %c0_i32 = arith.constant 0 : i32
    %c0_i32_0 = arith.constant 0 : i32
    return %arg0, %c0_i32 : i32, i32
  }
  func.func @transform_1(%arg0: i32) -> (i32, i32, i32) {
    %c0_i32 = arith.constant 0 : i32
    %c0_i32_0 = arith.constant 0 : i32
    %c0_i32_1 = arith.constant 0 : i32
    return %arg0, %c0_i32, %c0_i32_0 : i32, i32, i32
  }
  func.func @transform_2(%arg0: i32) -> (i32, i32, i32) {
    %c0_i32 = arith.constant 0 : i32
    %c0_i32_0 = arith.constant 0 : i32
    %c0_i32_1 = arith.constant 0 : i32
    %c0_i32_2 = arith.constant 0 : i32
    return %c0_i32, %c0_i32_0, %c0_i32_1 : i32, i32, i32
  }
  func.func @transform_3(%arg0: i32) -> i32 {
    %c0_i32 = arith.constant 0 : i32
    %c0_i32_0 = arith.constant 0 : i32
    return %c0_i32 : i32
  }
  func.func @transform_4(%arg0: i32) -> (i32, i32) {
    %c0_i32 = arith.constant 0 : i32
    %c0_i32_0 = arith.constant 0 : i32
    return %arg0, %c0_i32 : i32, i32
  }
}

module attributes {stable_mosaic.version = 11 : i64} {
  func.func @_hhgat_fused_kernel(%arg0: i32, %arg1: memref<16x128xf32, #tpu.memory_space<vmem>>, %arg2: memref<2x8x8xi8, #tpu.memory_space<vmem>>, %arg3: memref<3x128x128xf32, #tpu.memory_space<vmem>>, %arg4: memref<3xf32, #tpu.memory_space<smem>>, %arg5: memref<16x128xf32, #tpu.memory_space<vmem>>) attributes {dimension_semantics = [#tpu.dimension_semantics<parallel>], iteration_bounds = array<i64: 1>, scalar_prefetch = 0 : i64, scratch_operands = 0 : i64, tpu.core_type = #tpu.core_type<tc>, window_params = [{transform_indices = @transform_0, window_bounds = array<i64: 16, 128>}, {transform_indices = @transform_1, window_bounds = array<i64: 2, 8, 8>}, {pipeline_mode = #tpu.pipeline_mode<synchronous>, transform_indices = @transform_2, window_bounds = array<i64: 3, 128, 128>}, {transform_indices = @transform_3, window_bounds = array<i64: 3>}, {transform_indices = @transform_4, window_bounds = array<i64: 16, 128>}]} {
    %c0 = arith.constant 0 : index
    %c0_0 = arith.constant 0 : index
    %c0_1 = arith.constant 0 : index
    %0 = vector.load %arg2[%c0, %c0_0, %c0_1] : memref<2x8x8xi8, #tpu.memory_space<vmem>>, vector<2x8x8xi8>
    %1 = arith.sitofp %0 : vector<2x8x8xi8> to vector<2x8x8xf32>
    %cst = arith.constant 0.000000e+00 : f32
    %2 = vector.broadcast %cst : f32 to vector<2x8x8xf32>
    %3 = arith.cmpf ogt, %1, %2 : vector<2x8x8xf32>
    %cst_2 = arith.constant 0.000000e+00 : f32
    %cst_3 = arith.constant -9.000000e+15 : f32
    %4 = vector.broadcast %cst_2 : f32 to vector<2x8x8xf32>
    %5 = vector.broadcast %cst_3 : f32 to vector<2x8x8xf32>
    %6 = arith.select %3, %4, %5 : vector<2x8x8xi1>, vector<2x8x8xf32>
    %c0_4 = arith.constant 0 : index
    %c0_5 = arith.constant 0 : index
    %7 = vector.load %arg1[%c0_4, %c0_5] : memref<16x128xf32, #tpu.memory_space<vmem>>, vector<16x128xf32>
    %c0_6 = arith.constant 0 : index
    %c0_7 = arith.constant 0 : index
    %c0_8 = arith.constant 0 : index
    %8 = vector.load %arg3[%c0_6, %c0_7, %c0_8] : memref<3x128x128xf32, #tpu.memory_space<vmem>>, vector<1x128x128xf32>
    %9 = vector.shape_cast %8 : vector<1x128x128xf32> to vector<128x128xf32>
    %cst_9 = arith.constant dense<0.000000e+00> : vector<16x128xf32>
    %10 = tpu.matmul %7, %9, %cst_9 {dimension_numbers = #tpu.dot_dimension_numbers<[1], [0], [0], [1], [0, 0, 1, 1], [], []>} : vector<16x128xf32>, vector<128x128xf32>, vector<16x128xf32> -> vector<16x128xf32>
    %c0_10 = arith.constant 0 : index
    %11 = memref.load %arg4[%c0_10] : memref<3xf32, #tpu.memory_space<smem>>
    %12 = vector.extract_strided_slice %10 {offsets = [0, 32], sizes = [16, 1], strides = [1, 1]} : vector<16x128xf32> to vector<16x1xf32>
    %13 = vector.broadcast %11 : f32 to vector<16x1xf32>
    %14 = arith.addf %13, %12 : vector<16x1xf32>
    %cst_11 = arith.constant 0.000000e+00 : f32
    %15 = vector.broadcast %cst_11 : f32 to vector<16x1xf32>
    %16 = arith.cmpf ogt, %14, %15 : vector<16x1xf32>
    %cst_12 = arith.constant 2.000000e-01 : f32
    %17 = vector.broadcast %cst_12 : f32 to vector<16x1xf32>
    %18 = arith.mulf %17, %14 : vector<16x1xf32>
    %19 = arith.select %16, %14, %18 : vector<16x1xi1>, vector<16x1xf32>
    %20 = vector.extract_strided_slice %10 {offsets = [0, 33], sizes = [16, 1], strides = [1, 1]} : vector<16x128xf32> to vector<16x1xf32>
    %21 = vector.extract_strided_slice %6 {offsets = [0, 0, 0], sizes = [1, 8, 8], strides = [1, 1, 1]} : vector<2x8x8xf32> to vector<1x8x8xf32>
    %22 = vector.shape_cast %21 : vector<1x8x8xf32> to vector<8x8xf32>
    %23 = vector.extract_strided_slice %10 {offsets = [0, 0], sizes = [8, 128], strides = [1, 1]} : vector<16x128xf32> to vector<8x128xf32>
    %24 = vector.extract_strided_slice %19 {offsets = [0, 0], sizes = [8, 1], strides = [1, 1]} : vector<16x1xf32> to vector<8x1xf32>
    %25 = vector.extract_strided_slice %20 {offsets = [0, 0], sizes = [8, 1], strides = [1, 1]} : vector<16x1xf32> to vector<8x1xf32>
    %26 = tpu.transpose %24, [1, 0] : vector<8x1xf32> -> vector<1x8xf32>
    %27 = vector.broadcast %26 : vector<1x8xf32> to vector<8x8xf32>
    %28 = arith.addf %27, %22 : vector<8x8xf32>
    %cst_13 = arith.constant dense<0xFF800000> : vector<8xf32>
    %29 = vector.multi_reduction <maximumf>, %28, %cst_13 [1] : vector<8x8xf32> to vector<8xf32>
    %30 = vector.shape_cast %29 : vector<8xf32> to vector<8x1xf32>
    %31 = vector.broadcast %30 : vector<8x1xf32> to vector<8x8xf32>
    %32 = arith.subf %28, %31 : vector<8x8xf32>
    %33 = math.exp %32 : vector<8x8xf32>
    %cst_14 = arith.constant dense<0.000000e+00> : vector<8xf32>
    %34 = vector.multi_reduction <add>, %33, %cst_14 [1] : vector<8x8xf32> to vector<8xf32>
    %35 = vector.shape_cast %34 : vector<8xf32> to vector<8x1xf32>
    %cst_15 = arith.constant 1.000000e+00 : f32
    %36 = vector.broadcast %cst_15 : f32 to vector<8x1xf32>
    %37 = arith.divf %36, %35 : vector<8x1xf32>
    %38 = vector.broadcast %37 : vector<8x1xf32> to vector<8x8xf32>
    %39 = arith.mulf %33, %38 : vector<8x8xf32>
    %cst_16 = arith.constant dense<0.000000e+00> : vector<8x128xf32>
    %40 = tpu.matmul %39, %23, %cst_16 {dimension_numbers = #tpu.dot_dimension_numbers<[1], [0], [0], [1], [0, 0, 1, 1], [], []>} : vector<8x8xf32>, vector<8x128xf32>, vector<8x128xf32> -> vector<8x128xf32>
    %41 = vector.extract_strided_slice %40 {offsets = [0, 34], sizes = [8, 1], strides = [1, 1]} : vector<8x128xf32> to vector<8x1xf32>
    %42 = tpu.transpose %25, [1, 0] : vector<8x1xf32> -> vector<1x8xf32>
    %43 = vector.broadcast %41 : vector<8x1xf32> to vector<8x8xf32>
    %44 = vector.broadcast %42 : vector<1x8xf32> to vector<8x8xf32>
    %45 = arith.addf %43, %44 : vector<8x8xf32>
    %cst_17 = arith.constant 0.000000e+00 : f32
    %46 = vector.broadcast %cst_17 : f32 to vector<8x8xf32>
    %47 = arith.cmpf ogt, %45, %46 : vector<8x8xf32>
    %cst_18 = arith.constant 2.000000e-01 : f32
    %48 = vector.broadcast %cst_18 : f32 to vector<8x8xf32>
    %49 = arith.mulf %48, %45 : vector<8x8xf32>
    %50 = arith.select %47, %45, %49 : vector<8x8xi1>, vector<8x8xf32>
    %51 = arith.addf %50, %22 : vector<8x8xf32>
    %cst_19 = arith.constant dense<0xFF800000> : vector<8xf32>
    %52 = vector.multi_reduction <maximumf>, %51, %cst_19 [0] : vector<8x8xf32> to vector<8xf32>
    %53 = vector.shape_cast %52 : vector<8xf32> to vector<1x8xf32>
    %54 = vector.broadcast %53 : vector<1x8xf32> to vector<8x8xf32>
    %55 = arith.subf %51, %54 : vector<8x8xf32>
    %56 = math.exp %55 : vector<8x8xf32>
    %cst_20 = arith.constant dense<0.000000e+00> : vector<8xf32>
    %57 = vector.multi_reduction <add>, %56, %cst_20 [0] : vector<8x8xf32> to vector<8xf32>
    %58 = vector.shape_cast %57 : vector<8xf32> to vector<1x8xf32>
    %cst_21 = arith.constant 1.000000e+00 : f32
    %59 = vector.broadcast %cst_21 : f32 to vector<1x8xf32>
    %60 = arith.divf %59, %58 : vector<1x8xf32>
    %61 = vector.broadcast %60 : vector<1x8xf32> to vector<8x8xf32>
    %62 = arith.mulf %56, %61 : vector<8x8xf32>
    %cst_22 = arith.constant dense<0.000000e+00> : vector<8x128xf32>
    %63 = tpu.matmul %62, %40, %cst_22 {dimension_numbers = #tpu.dot_dimension_numbers<[0], [0], [1], [1], [0, 1, 1, 1], [], []>} : vector<8x8xf32>, vector<8x128xf32>, vector<8x128xf32> -> vector<8x128xf32>
    %cst_23 = arith.constant 0.000000e+00 : f32
    %64 = vector.broadcast %cst_23 : f32 to vector<8x128xf32>
    %65 = arith.cmpf ogt, %63, %64 : vector<8x128xf32>
    %66 = math.exp %63 : vector<8x128xf32>
    %cst_24 = arith.constant 1.000000e+00 : f32
    %67 = vector.broadcast %cst_24 : f32 to vector<8x128xf32>
    %68 = arith.subf %66, %67 : vector<8x128xf32>
    %69 = arith.select %65, %63, %68 : vector<8x128xi1>, vector<8x128xf32>
    %70 = vector.extract_strided_slice %7 {offsets = [0, 0], sizes = [8, 128], strides = [1, 1]} : vector<16x128xf32> to vector<8x128xf32>
    %71 = arith.addf %69, %70 : vector<8x128xf32>
    %72 = vector.extract_strided_slice %6 {offsets = [1, 0, 0], sizes = [1, 8, 8], strides = [1, 1, 1]} : vector<2x8x8xf32> to vector<1x8x8xf32>
    %73 = vector.shape_cast %72 : vector<1x8x8xf32> to vector<8x8xf32>
    %74 = vector.extract_strided_slice %10 {offsets = [8, 0], sizes = [8, 128], strides = [1, 1]} : vector<16x128xf32> to vector<8x128xf32>
    %75 = vector.extract_strided_slice %19 {offsets = [8, 0], sizes = [8, 1], strides = [1, 1]} : vector<16x1xf32> to vector<8x1xf32>
    %76 = vector.extract_strided_slice %20 {offsets = [8, 0], sizes = [8, 1], strides = [1, 1]} : vector<16x1xf32> to vector<8x1xf32>
    %77 = tpu.transpose %75, [1, 0] : vector<8x1xf32> -> vector<1x8xf32>
    %78 = vector.broadcast %77 : vector<1x8xf32> to vector<8x8xf32>
    %79 = arith.addf %78, %73 : vector<8x8xf32>
    %cst_25 = arith.constant dense<0xFF800000> : vector<8xf32>
    %80 = vector.multi_reduction <maximumf>, %79, %cst_25 [1] : vector<8x8xf32> to vector<8xf32>
    %81 = vector.shape_cast %80 : vector<8xf32> to vector<8x1xf32>
    %82 = vector.broadcast %81 : vector<8x1xf32> to vector<8x8xf32>
    %83 = arith.subf %79, %82 : vector<8x8xf32>
    %84 = math.exp %83 : vector<8x8xf32>
    %cst_26 = arith.constant dense<0.000000e+00> : vector<8xf32>
    %85 = vector.multi_reduction <add>, %84, %cst_26 [1] : vector<8x8xf32> to vector<8xf32>
    %86 = vector.shape_cast %85 : vector<8xf32> to vector<8x1xf32>
    %cst_27 = arith.constant 1.000000e+00 : f32
    %87 = vector.broadcast %cst_27 : f32 to vector<8x1xf32>
    %88 = arith.divf %87, %86 : vector<8x1xf32>
    %89 = vector.broadcast %88 : vector<8x1xf32> to vector<8x8xf32>
    %90 = arith.mulf %84, %89 : vector<8x8xf32>
    %cst_28 = arith.constant dense<0.000000e+00> : vector<8x128xf32>
    %91 = tpu.matmul %90, %74, %cst_28 {dimension_numbers = #tpu.dot_dimension_numbers<[1], [0], [0], [1], [0, 0, 1, 1], [], []>} : vector<8x8xf32>, vector<8x128xf32>, vector<8x128xf32> -> vector<8x128xf32>
    %92 = vector.extract_strided_slice %91 {offsets = [0, 34], sizes = [8, 1], strides = [1, 1]} : vector<8x128xf32> to vector<8x1xf32>
    %93 = tpu.transpose %76, [1, 0] : vector<8x1xf32> -> vector<1x8xf32>
    %94 = vector.broadcast %92 : vector<8x1xf32> to vector<8x8xf32>
    %95 = vector.broadcast %93 : vector<1x8xf32> to vector<8x8xf32>
    %96 = arith.addf %94, %95 : vector<8x8xf32>
    %cst_29 = arith.constant 0.000000e+00 : f32
    %97 = vector.broadcast %cst_29 : f32 to vector<8x8xf32>
    %98 = arith.cmpf ogt, %96, %97 : vector<8x8xf32>
    %cst_30 = arith.constant 2.000000e-01 : f32
    %99 = vector.broadcast %cst_30 : f32 to vector<8x8xf32>
    %100 = arith.mulf %99, %96 : vector<8x8xf32>
    %101 = arith.select %98, %96, %100 : vector<8x8xi1>, vector<8x8xf32>
    %102 = arith.addf %101, %73 : vector<8x8xf32>
    %cst_31 = arith.constant dense<0xFF800000> : vector<8xf32>
    %103 = vector.multi_reduction <maximumf>, %102, %cst_31 [0] : vector<8x8xf32> to vector<8xf32>
    %104 = vector.shape_cast %103 : vector<8xf32> to vector<1x8xf32>
    %105 = vector.broadcast %104 : vector<1x8xf32> to vector<8x8xf32>
    %106 = arith.subf %102, %105 : vector<8x8xf32>
    %107 = math.exp %106 : vector<8x8xf32>
    %cst_32 = arith.constant dense<0.000000e+00> : vector<8xf32>
    %108 = vector.multi_reduction <add>, %107, %cst_32 [0] : vector<8x8xf32> to vector<8xf32>
    %109 = vector.shape_cast %108 : vector<8xf32> to vector<1x8xf32>
    %cst_33 = arith.constant 1.000000e+00 : f32
    %110 = vector.broadcast %cst_33 : f32 to vector<1x8xf32>
    %111 = arith.divf %110, %109 : vector<1x8xf32>
    %112 = vector.broadcast %111 : vector<1x8xf32> to vector<8x8xf32>
    %113 = arith.mulf %107, %112 : vector<8x8xf32>
    %cst_34 = arith.constant dense<0.000000e+00> : vector<8x128xf32>
    %114 = tpu.matmul %113, %91, %cst_34 {dimension_numbers = #tpu.dot_dimension_numbers<[0], [0], [1], [1], [0, 1, 1, 1], [], []>} : vector<8x8xf32>, vector<8x128xf32>, vector<8x128xf32> -> vector<8x128xf32>
    %cst_35 = arith.constant 0.000000e+00 : f32
    %115 = vector.broadcast %cst_35 : f32 to vector<8x128xf32>
    %116 = arith.cmpf ogt, %114, %115 : vector<8x128xf32>
    %117 = math.exp %114 : vector<8x128xf32>
    %cst_36 = arith.constant 1.000000e+00 : f32
    %118 = vector.broadcast %cst_36 : f32 to vector<8x128xf32>
    %119 = arith.subf %117, %118 : vector<8x128xf32>
    %120 = arith.select %116, %114, %119 : vector<8x128xi1>, vector<8x128xf32>
    %121 = vector.extract_strided_slice %7 {offsets = [8, 0], sizes = [8, 128], strides = [1, 1]} : vector<16x128xf32> to vector<8x128xf32>
    %122 = arith.addf %120, %121 : vector<8x128xf32>
    %123 = tpu.concatenate %71, %122 in 0 : vector<8x128xf32>, vector<8x128xf32> -> vector<16x128xf32>
    %c1 = arith.constant 1 : index
    %c0_37 = arith.constant 0 : index
    %c0_38 = arith.constant 0 : index
    %124 = vector.load %arg3[%c1, %c0_37, %c0_38] : memref<3x128x128xf32, #tpu.memory_space<vmem>>, vector<1x128x128xf32>
    %125 = vector.shape_cast %124 : vector<1x128x128xf32> to vector<128x128xf32>
    %cst_39 = arith.constant dense<0.000000e+00> : vector<16x128xf32>
    %126 = tpu.matmul %123, %125, %cst_39 {dimension_numbers = #tpu.dot_dimension_numbers<[1], [0], [0], [1], [0, 0, 1, 1], [], []>} : vector<16x128xf32>, vector<128x128xf32>, vector<16x128xf32> -> vector<16x128xf32>
    %c1_40 = arith.constant 1 : index
    %127 = memref.load %arg4[%c1_40] : memref<3xf32, #tpu.memory_space<smem>>
    %128 = vector.extract_strided_slice %126 {offsets = [0, 32], sizes = [16, 1], strides = [1, 1]} : vector<16x128xf32> to vector<16x1xf32>
    %129 = vector.broadcast %127 : f32 to vector<16x1xf32>
    %130 = arith.addf %129, %128 : vector<16x1xf32>
    %cst_41 = arith.constant 0.000000e+00 : f32
    %131 = vector.broadcast %cst_41 : f32 to vector<16x1xf32>
    %132 = arith.cmpf ogt, %130, %131 : vector<16x1xf32>
    %cst_42 = arith.constant 2.000000e-01 : f32
    %133 = vector.broadcast %cst_42 : f32 to vector<16x1xf32>
    %134 = arith.mulf %133, %130 : vector<16x1xf32>
    %135 = arith.select %132, %130, %134 : vector<16x1xi1>, vector<16x1xf32>
    %136 = vector.extract_strided_slice %126 {offsets = [0, 33], sizes = [16, 1], strides = [1, 1]} : vector<16x128xf32> to vector<16x1xf32>
    %137 = vector.extract_strided_slice %6 {offsets = [0, 0, 0], sizes = [1, 8, 8], strides = [1, 1, 1]} : vector<2x8x8xf32> to vector<1x8x8xf32>
    %138 = vector.shape_cast %137 : vector<1x8x8xf32> to vector<8x8xf32>
    %139 = vector.extract_strided_slice %126 {offsets = [0, 0], sizes = [8, 128], strides = [1, 1]} : vector<16x128xf32> to vector<8x128xf32>
    %140 = vector.extract_strided_slice %135 {offsets = [0, 0], sizes = [8, 1], strides = [1, 1]} : vector<16x1xf32> to vector<8x1xf32>
    %141 = vector.extract_strided_slice %136 {offsets = [0, 0], sizes = [8, 1], strides = [1, 1]} : vector<16x1xf32> to vector<8x1xf32>
    %142 = tpu.transpose %140, [1, 0] : vector<8x1xf32> -> vector<1x8xf32>
    %143 = vector.broadcast %142 : vector<1x8xf32> to vector<8x8xf32>
    %144 = arith.addf %143, %138 : vector<8x8xf32>
    %cst_43 = arith.constant dense<0xFF800000> : vector<8xf32>
    %145 = vector.multi_reduction <maximumf>, %144, %cst_43 [1] : vector<8x8xf32> to vector<8xf32>
    %146 = vector.shape_cast %145 : vector<8xf32> to vector<8x1xf32>
    %147 = vector.broadcast %146 : vector<8x1xf32> to vector<8x8xf32>
    %148 = arith.subf %144, %147 : vector<8x8xf32>
    %149 = math.exp %148 : vector<8x8xf32>
    %cst_44 = arith.constant dense<0.000000e+00> : vector<8xf32>
    %150 = vector.multi_reduction <add>, %149, %cst_44 [1] : vector<8x8xf32> to vector<8xf32>
    %151 = vector.shape_cast %150 : vector<8xf32> to vector<8x1xf32>
    %cst_45 = arith.constant 1.000000e+00 : f32
    %152 = vector.broadcast %cst_45 : f32 to vector<8x1xf32>
    %153 = arith.divf %152, %151 : vector<8x1xf32>
    %154 = vector.broadcast %153 : vector<8x1xf32> to vector<8x8xf32>
    %155 = arith.mulf %149, %154 : vector<8x8xf32>
    %cst_46 = arith.constant dense<0.000000e+00> : vector<8x128xf32>
    %156 = tpu.matmul %155, %139, %cst_46 {dimension_numbers = #tpu.dot_dimension_numbers<[1], [0], [0], [1], [0, 0, 1, 1], [], []>} : vector<8x8xf32>, vector<8x128xf32>, vector<8x128xf32> -> vector<8x128xf32>
    %157 = vector.extract_strided_slice %156 {offsets = [0, 34], sizes = [8, 1], strides = [1, 1]} : vector<8x128xf32> to vector<8x1xf32>
    %158 = tpu.transpose %141, [1, 0] : vector<8x1xf32> -> vector<1x8xf32>
    %159 = vector.broadcast %157 : vector<8x1xf32> to vector<8x8xf32>
    %160 = vector.broadcast %158 : vector<1x8xf32> to vector<8x8xf32>
    %161 = arith.addf %159, %160 : vector<8x8xf32>
    %cst_47 = arith.constant 0.000000e+00 : f32
    %162 = vector.broadcast %cst_47 : f32 to vector<8x8xf32>
    %163 = arith.cmpf ogt, %161, %162 : vector<8x8xf32>
    %cst_48 = arith.constant 2.000000e-01 : f32
    %164 = vector.broadcast %cst_48 : f32 to vector<8x8xf32>
    %165 = arith.mulf %164, %161 : vector<8x8xf32>
    %166 = arith.select %163, %161, %165 : vector<8x8xi1>, vector<8x8xf32>
    %167 = arith.addf %166, %138 : vector<8x8xf32>
    %cst_49 = arith.constant dense<0xFF800000> : vector<8xf32>
    %168 = vector.multi_reduction <maximumf>, %167, %cst_49 [0] : vector<8x8xf32> to vector<8xf32>
    %169 = vector.shape_cast %168 : vector<8xf32> to vector<1x8xf32>
    %170 = vector.broadcast %169 : vector<1x8xf32> to vector<8x8xf32>
    %171 = arith.subf %167, %170 : vector<8x8xf32>
    %172 = math.exp %171 : vector<8x8xf32>
    %cst_50 = arith.constant dense<0.000000e+00> : vector<8xf32>
    %173 = vector.multi_reduction <add>, %172, %cst_50 [0] : vector<8x8xf32> to vector<8xf32>
    %174 = vector.shape_cast %173 : vector<8xf32> to vector<1x8xf32>
    %cst_51 = arith.constant 1.000000e+00 : f32
    %175 = vector.broadcast %cst_51 : f32 to vector<1x8xf32>
    %176 = arith.divf %175, %174 : vector<1x8xf32>
    %177 = vector.broadcast %176 : vector<1x8xf32> to vector<8x8xf32>
    %178 = arith.mulf %172, %177 : vector<8x8xf32>
    %cst_52 = arith.constant dense<0.000000e+00> : vector<8x128xf32>
    %179 = tpu.matmul %178, %156, %cst_52 {dimension_numbers = #tpu.dot_dimension_numbers<[0], [0], [1], [1], [0, 1, 1, 1], [], []>} : vector<8x8xf32>, vector<8x128xf32>, vector<8x128xf32> -> vector<8x128xf32>
    %cst_53 = arith.constant 0.000000e+00 : f32
    %180 = vector.broadcast %cst_53 : f32 to vector<8x128xf32>
    %181 = arith.cmpf ogt, %179, %180 : vector<8x128xf32>
    %182 = math.exp %179 : vector<8x128xf32>
    %cst_54 = arith.constant 1.000000e+00 : f32
    %183 = vector.broadcast %cst_54 : f32 to vector<8x128xf32>
    %184 = arith.subf %182, %183 : vector<8x128xf32>
    %185 = arith.select %181, %179, %184 : vector<8x128xi1>, vector<8x128xf32>
    %186 = vector.extract_strided_slice %7 {offsets = [0, 0], sizes = [8, 128], strides = [1, 1]} : vector<16x128xf32> to vector<8x128xf32>
    %187 = arith.addf %185, %186 : vector<8x128xf32>
    %188 = vector.extract_strided_slice %6 {offsets = [1, 0, 0], sizes = [1, 8, 8], strides = [1, 1, 1]} : vector<2x8x8xf32> to vector<1x8x8xf32>
    %189 = vector.shape_cast %188 : vector<1x8x8xf32> to vector<8x8xf32>
    %190 = vector.extract_strided_slice %126 {offsets = [8, 0], sizes = [8, 128], strides = [1, 1]} : vector<16x128xf32> to vector<8x128xf32>
    %191 = vector.extract_strided_slice %135 {offsets = [8, 0], sizes = [8, 1], strides = [1, 1]} : vector<16x1xf32> to vector<8x1xf32>
    %192 = vector.extract_strided_slice %136 {offsets = [8, 0], sizes = [8, 1], strides = [1, 1]} : vector<16x1xf32> to vector<8x1xf32>
    %193 = tpu.transpose %191, [1, 0] : vector<8x1xf32> -> vector<1x8xf32>
    %194 = vector.broadcast %193 : vector<1x8xf32> to vector<8x8xf32>
    %195 = arith.addf %194, %189 : vector<8x8xf32>
    %cst_55 = arith.constant dense<0xFF800000> : vector<8xf32>
    %196 = vector.multi_reduction <maximumf>, %195, %cst_55 [1] : vector<8x8xf32> to vector<8xf32>
    %197 = vector.shape_cast %196 : vector<8xf32> to vector<8x1xf32>
    %198 = vector.broadcast %197 : vector<8x1xf32> to vector<8x8xf32>
    %199 = arith.subf %195, %198 : vector<8x8xf32>
    %200 = math.exp %199 : vector<8x8xf32>
    %cst_56 = arith.constant dense<0.000000e+00> : vector<8xf32>
    %201 = vector.multi_reduction <add>, %200, %cst_56 [1] : vector<8x8xf32> to vector<8xf32>
    %202 = vector.shape_cast %201 : vector<8xf32> to vector<8x1xf32>
    %cst_57 = arith.constant 1.000000e+00 : f32
    %203 = vector.broadcast %cst_57 : f32 to vector<8x1xf32>
    %204 = arith.divf %203, %202 : vector<8x1xf32>
    %205 = vector.broadcast %204 : vector<8x1xf32> to vector<8x8xf32>
    %206 = arith.mulf %200, %205 : vector<8x8xf32>
    %cst_58 = arith.constant dense<0.000000e+00> : vector<8x128xf32>
    %207 = tpu.matmul %206, %190, %cst_58 {dimension_numbers = #tpu.dot_dimension_numbers<[1], [0], [0], [1], [0, 0, 1, 1], [], []>} : vector<8x8xf32>, vector<8x128xf32>, vector<8x128xf32> -> vector<8x128xf32>
    %208 = vector.extract_strided_slice %207 {offsets = [0, 34], sizes = [8, 1], strides = [1, 1]} : vector<8x128xf32> to vector<8x1xf32>
    %209 = tpu.transpose %192, [1, 0] : vector<8x1xf32> -> vector<1x8xf32>
    %210 = vector.broadcast %208 : vector<8x1xf32> to vector<8x8xf32>
    %211 = vector.broadcast %209 : vector<1x8xf32> to vector<8x8xf32>
    %212 = arith.addf %210, %211 : vector<8x8xf32>
    %cst_59 = arith.constant 0.000000e+00 : f32
    %213 = vector.broadcast %cst_59 : f32 to vector<8x8xf32>
    %214 = arith.cmpf ogt, %212, %213 : vector<8x8xf32>
    %cst_60 = arith.constant 2.000000e-01 : f32
    %215 = vector.broadcast %cst_60 : f32 to vector<8x8xf32>
    %216 = arith.mulf %215, %212 : vector<8x8xf32>
    %217 = arith.select %214, %212, %216 : vector<8x8xi1>, vector<8x8xf32>
    %218 = arith.addf %217, %189 : vector<8x8xf32>
    %cst_61 = arith.constant dense<0xFF800000> : vector<8xf32>
    %219 = vector.multi_reduction <maximumf>, %218, %cst_61 [0] : vector<8x8xf32> to vector<8xf32>
    %220 = vector.shape_cast %219 : vector<8xf32> to vector<1x8xf32>
    %221 = vector.broadcast %220 : vector<1x8xf32> to vector<8x8xf32>
    %222 = arith.subf %218, %221 : vector<8x8xf32>
    %223 = math.exp %222 : vector<8x8xf32>
    %cst_62 = arith.constant dense<0.000000e+00> : vector<8xf32>
    %224 = vector.multi_reduction <add>, %223, %cst_62 [0] : vector<8x8xf32> to vector<8xf32>
    %225 = vector.shape_cast %224 : vector<8xf32> to vector<1x8xf32>
    %cst_63 = arith.constant 1.000000e+00 : f32
    %226 = vector.broadcast %cst_63 : f32 to vector<1x8xf32>
    %227 = arith.divf %226, %225 : vector<1x8xf32>
    %228 = vector.broadcast %227 : vector<1x8xf32> to vector<8x8xf32>
    %229 = arith.mulf %223, %228 : vector<8x8xf32>
    %cst_64 = arith.constant dense<0.000000e+00> : vector<8x128xf32>
    %230 = tpu.matmul %229, %207, %cst_64 {dimension_numbers = #tpu.dot_dimension_numbers<[0], [0], [1], [1], [0, 1, 1, 1], [], []>} : vector<8x8xf32>, vector<8x128xf32>, vector<8x128xf32> -> vector<8x128xf32>
    %cst_65 = arith.constant 0.000000e+00 : f32
    %231 = vector.broadcast %cst_65 : f32 to vector<8x128xf32>
    %232 = arith.cmpf ogt, %230, %231 : vector<8x128xf32>
    %233 = math.exp %230 : vector<8x128xf32>
    %cst_66 = arith.constant 1.000000e+00 : f32
    %234 = vector.broadcast %cst_66 : f32 to vector<8x128xf32>
    %235 = arith.subf %233, %234 : vector<8x128xf32>
    %236 = arith.select %232, %230, %235 : vector<8x128xi1>, vector<8x128xf32>
    %237 = vector.extract_strided_slice %7 {offsets = [8, 0], sizes = [8, 128], strides = [1, 1]} : vector<16x128xf32> to vector<8x128xf32>
    %238 = arith.addf %236, %237 : vector<8x128xf32>
    %239 = tpu.concatenate %187, %238 in 0 : vector<8x128xf32>, vector<8x128xf32> -> vector<16x128xf32>
    %c2 = arith.constant 2 : index
    %c0_67 = arith.constant 0 : index
    %c0_68 = arith.constant 0 : index
    %240 = vector.load %arg3[%c2, %c0_67, %c0_68] : memref<3x128x128xf32, #tpu.memory_space<vmem>>, vector<1x128x128xf32>
    %241 = vector.shape_cast %240 : vector<1x128x128xf32> to vector<128x128xf32>
    %cst_69 = arith.constant dense<0.000000e+00> : vector<16x128xf32>
    %242 = tpu.matmul %239, %241, %cst_69 {dimension_numbers = #tpu.dot_dimension_numbers<[1], [0], [0], [1], [0, 0, 1, 1], [], []>} : vector<16x128xf32>, vector<128x128xf32>, vector<16x128xf32> -> vector<16x128xf32>
    %c2_70 = arith.constant 2 : index
    %243 = memref.load %arg4[%c2_70] : memref<3xf32, #tpu.memory_space<smem>>
    %244 = vector.extract_strided_slice %242 {offsets = [0, 32], sizes = [16, 1], strides = [1, 1]} : vector<16x128xf32> to vector<16x1xf32>
    %245 = vector.broadcast %243 : f32 to vector<16x1xf32>
    %246 = arith.addf %245, %244 : vector<16x1xf32>
    %cst_71 = arith.constant 0.000000e+00 : f32
    %247 = vector.broadcast %cst_71 : f32 to vector<16x1xf32>
    %248 = arith.cmpf ogt, %246, %247 : vector<16x1xf32>
    %cst_72 = arith.constant 2.000000e-01 : f32
    %249 = vector.broadcast %cst_72 : f32 to vector<16x1xf32>
    %250 = arith.mulf %249, %246 : vector<16x1xf32>
    %251 = arith.select %248, %246, %250 : vector<16x1xi1>, vector<16x1xf32>
    %252 = vector.extract_strided_slice %242 {offsets = [0, 33], sizes = [16, 1], strides = [1, 1]} : vector<16x128xf32> to vector<16x1xf32>
    %253 = vector.extract_strided_slice %6 {offsets = [0, 0, 0], sizes = [1, 8, 8], strides = [1, 1, 1]} : vector<2x8x8xf32> to vector<1x8x8xf32>
    %254 = vector.shape_cast %253 : vector<1x8x8xf32> to vector<8x8xf32>
    %255 = vector.extract_strided_slice %242 {offsets = [0, 0], sizes = [8, 128], strides = [1, 1]} : vector<16x128xf32> to vector<8x128xf32>
    %256 = vector.extract_strided_slice %251 {offsets = [0, 0], sizes = [8, 1], strides = [1, 1]} : vector<16x1xf32> to vector<8x1xf32>
    %257 = vector.extract_strided_slice %252 {offsets = [0, 0], sizes = [8, 1], strides = [1, 1]} : vector<16x1xf32> to vector<8x1xf32>
    %258 = tpu.transpose %256, [1, 0] : vector<8x1xf32> -> vector<1x8xf32>
    %259 = vector.broadcast %258 : vector<1x8xf32> to vector<8x8xf32>
    %260 = arith.addf %259, %254 : vector<8x8xf32>
    %cst_73 = arith.constant dense<0xFF800000> : vector<8xf32>
    %261 = vector.multi_reduction <maximumf>, %260, %cst_73 [1] : vector<8x8xf32> to vector<8xf32>
    %262 = vector.shape_cast %261 : vector<8xf32> to vector<8x1xf32>
    %263 = vector.broadcast %262 : vector<8x1xf32> to vector<8x8xf32>
    %264 = arith.subf %260, %263 : vector<8x8xf32>
    %265 = math.exp %264 : vector<8x8xf32>
    %cst_74 = arith.constant dense<0.000000e+00> : vector<8xf32>
    %266 = vector.multi_reduction <add>, %265, %cst_74 [1] : vector<8x8xf32> to vector<8xf32>
    %267 = vector.shape_cast %266 : vector<8xf32> to vector<8x1xf32>
    %cst_75 = arith.constant 1.000000e+00 : f32
    %268 = vector.broadcast %cst_75 : f32 to vector<8x1xf32>
    %269 = arith.divf %268, %267 : vector<8x1xf32>
    %270 = vector.broadcast %269 : vector<8x1xf32> to vector<8x8xf32>
    %271 = arith.mulf %265, %270 : vector<8x8xf32>
    %cst_76 = arith.constant dense<0.000000e+00> : vector<8x128xf32>
    %272 = tpu.matmul %271, %255, %cst_76 {dimension_numbers = #tpu.dot_dimension_numbers<[1], [0], [0], [1], [0, 0, 1, 1], [], []>} : vector<8x8xf32>, vector<8x128xf32>, vector<8x128xf32> -> vector<8x128xf32>
    %273 = vector.extract_strided_slice %272 {offsets = [0, 34], sizes = [8, 1], strides = [1, 1]} : vector<8x128xf32> to vector<8x1xf32>
    %274 = tpu.transpose %257, [1, 0] : vector<8x1xf32> -> vector<1x8xf32>
    %275 = vector.broadcast %273 : vector<8x1xf32> to vector<8x8xf32>
    %276 = vector.broadcast %274 : vector<1x8xf32> to vector<8x8xf32>
    %277 = arith.addf %275, %276 : vector<8x8xf32>
    %cst_77 = arith.constant 0.000000e+00 : f32
    %278 = vector.broadcast %cst_77 : f32 to vector<8x8xf32>
    %279 = arith.cmpf ogt, %277, %278 : vector<8x8xf32>
    %cst_78 = arith.constant 2.000000e-01 : f32
    %280 = vector.broadcast %cst_78 : f32 to vector<8x8xf32>
    %281 = arith.mulf %280, %277 : vector<8x8xf32>
    %282 = arith.select %279, %277, %281 : vector<8x8xi1>, vector<8x8xf32>
    %283 = arith.addf %282, %254 : vector<8x8xf32>
    %cst_79 = arith.constant dense<0xFF800000> : vector<8xf32>
    %284 = vector.multi_reduction <maximumf>, %283, %cst_79 [0] : vector<8x8xf32> to vector<8xf32>
    %285 = vector.shape_cast %284 : vector<8xf32> to vector<1x8xf32>
    %286 = vector.broadcast %285 : vector<1x8xf32> to vector<8x8xf32>
    %287 = arith.subf %283, %286 : vector<8x8xf32>
    %288 = math.exp %287 : vector<8x8xf32>
    %cst_80 = arith.constant dense<0.000000e+00> : vector<8xf32>
    %289 = vector.multi_reduction <add>, %288, %cst_80 [0] : vector<8x8xf32> to vector<8xf32>
    %290 = vector.shape_cast %289 : vector<8xf32> to vector<1x8xf32>
    %cst_81 = arith.constant 1.000000e+00 : f32
    %291 = vector.broadcast %cst_81 : f32 to vector<1x8xf32>
    %292 = arith.divf %291, %290 : vector<1x8xf32>
    %293 = vector.broadcast %292 : vector<1x8xf32> to vector<8x8xf32>
    %294 = arith.mulf %288, %293 : vector<8x8xf32>
    %cst_82 = arith.constant dense<0.000000e+00> : vector<8x128xf32>
    %295 = tpu.matmul %294, %272, %cst_82 {dimension_numbers = #tpu.dot_dimension_numbers<[0], [0], [1], [1], [0, 1, 1, 1], [], []>} : vector<8x8xf32>, vector<8x128xf32>, vector<8x128xf32> -> vector<8x128xf32>
    %cst_83 = arith.constant 0.000000e+00 : f32
    %296 = vector.broadcast %cst_83 : f32 to vector<8x128xf32>
    %297 = arith.cmpf ogt, %295, %296 : vector<8x128xf32>
    %298 = math.exp %295 : vector<8x128xf32>
    %cst_84 = arith.constant 1.000000e+00 : f32
    %299 = vector.broadcast %cst_84 : f32 to vector<8x128xf32>
    %300 = arith.subf %298, %299 : vector<8x128xf32>
    %301 = arith.select %297, %295, %300 : vector<8x128xi1>, vector<8x128xf32>
    %302 = vector.extract_strided_slice %7 {offsets = [0, 0], sizes = [8, 128], strides = [1, 1]} : vector<16x128xf32> to vector<8x128xf32>
    %303 = arith.addf %301, %302 : vector<8x128xf32>
    %304 = vector.extract_strided_slice %6 {offsets = [1, 0, 0], sizes = [1, 8, 8], strides = [1, 1, 1]} : vector<2x8x8xf32> to vector<1x8x8xf32>
    %305 = vector.shape_cast %304 : vector<1x8x8xf32> to vector<8x8xf32>
    %306 = vector.extract_strided_slice %242 {offsets = [8, 0], sizes = [8, 128], strides = [1, 1]} : vector<16x128xf32> to vector<8x128xf32>
    %307 = vector.extract_strided_slice %251 {offsets = [8, 0], sizes = [8, 1], strides = [1, 1]} : vector<16x1xf32> to vector<8x1xf32>
    %308 = vector.extract_strided_slice %252 {offsets = [8, 0], sizes = [8, 1], strides = [1, 1]} : vector<16x1xf32> to vector<8x1xf32>
    %309 = tpu.transpose %307, [1, 0] : vector<8x1xf32> -> vector<1x8xf32>
    %310 = vector.broadcast %309 : vector<1x8xf32> to vector<8x8xf32>
    %311 = arith.addf %310, %305 : vector<8x8xf32>
    %cst_85 = arith.constant dense<0xFF800000> : vector<8xf32>
    %312 = vector.multi_reduction <maximumf>, %311, %cst_85 [1] : vector<8x8xf32> to vector<8xf32>
    %313 = vector.shape_cast %312 : vector<8xf32> to vector<8x1xf32>
    %314 = vector.broadcast %313 : vector<8x1xf32> to vector<8x8xf32>
    %315 = arith.subf %311, %314 : vector<8x8xf32>
    %316 = math.exp %315 : vector<8x8xf32>
    %cst_86 = arith.constant dense<0.000000e+00> : vector<8xf32>
    %317 = vector.multi_reduction <add>, %316, %cst_86 [1] : vector<8x8xf32> to vector<8xf32>
    %318 = vector.shape_cast %317 : vector<8xf32> to vector<8x1xf32>
    %cst_87 = arith.constant 1.000000e+00 : f32
    %319 = vector.broadcast %cst_87 : f32 to vector<8x1xf32>
    %320 = arith.divf %319, %318 : vector<8x1xf32>
    %321 = vector.broadcast %320 : vector<8x1xf32> to vector<8x8xf32>
    %322 = arith.mulf %316, %321 : vector<8x8xf32>
    %cst_88 = arith.constant dense<0.000000e+00> : vector<8x128xf32>
    %323 = tpu.matmul %322, %306, %cst_88 {dimension_numbers = #tpu.dot_dimension_numbers<[1], [0], [0], [1], [0, 0, 1, 1], [], []>} : vector<8x8xf32>, vector<8x128xf32>, vector<8x128xf32> -> vector<8x128xf32>
    %324 = vector.extract_strided_slice %323 {offsets = [0, 34], sizes = [8, 1], strides = [1, 1]} : vector<8x128xf32> to vector<8x1xf32>
    %325 = tpu.transpose %308, [1, 0] : vector<8x1xf32> -> vector<1x8xf32>
    %326 = vector.broadcast %324 : vector<8x1xf32> to vector<8x8xf32>
    %327 = vector.broadcast %325 : vector<1x8xf32> to vector<8x8xf32>
    %328 = arith.addf %326, %327 : vector<8x8xf32>
    %cst_89 = arith.constant 0.000000e+00 : f32
    %329 = vector.broadcast %cst_89 : f32 to vector<8x8xf32>
    %330 = arith.cmpf ogt, %328, %329 : vector<8x8xf32>
    %cst_90 = arith.constant 2.000000e-01 : f32
    %331 = vector.broadcast %cst_90 : f32 to vector<8x8xf32>
    %332 = arith.mulf %331, %328 : vector<8x8xf32>
    %333 = arith.select %330, %328, %332 : vector<8x8xi1>, vector<8x8xf32>
    %334 = arith.addf %333, %305 : vector<8x8xf32>
    %cst_91 = arith.constant dense<0xFF800000> : vector<8xf32>
    %335 = vector.multi_reduction <maximumf>, %334, %cst_91 [0] : vector<8x8xf32> to vector<8xf32>
    %336 = vector.shape_cast %335 : vector<8xf32> to vector<1x8xf32>
    %337 = vector.broadcast %336 : vector<1x8xf32> to vector<8x8xf32>
    %338 = arith.subf %334, %337 : vector<8x8xf32>
    %339 = math.exp %338 : vector<8x8xf32>
    %cst_92 = arith.constant dense<0.000000e+00> : vector<8xf32>
    %340 = vector.multi_reduction <add>, %339, %cst_92 [0] : vector<8x8xf32> to vector<8xf32>
    %341 = vector.shape_cast %340 : vector<8xf32> to vector<1x8xf32>
    %cst_93 = arith.constant 1.000000e+00 : f32
    %342 = vector.broadcast %cst_93 : f32 to vector<1x8xf32>
    %343 = arith.divf %342, %341 : vector<1x8xf32>
    %344 = vector.broadcast %343 : vector<1x8xf32> to vector<8x8xf32>
    %345 = arith.mulf %339, %344 : vector<8x8xf32>
    %cst_94 = arith.constant dense<0.000000e+00> : vector<8x128xf32>
    %346 = tpu.matmul %345, %323, %cst_94 {dimension_numbers = #tpu.dot_dimension_numbers<[0], [0], [1], [1], [0, 1, 1, 1], [], []>} : vector<8x8xf32>, vector<8x128xf32>, vector<8x128xf32> -> vector<8x128xf32>
    %cst_95 = arith.constant 0.000000e+00 : f32
    %347 = vector.broadcast %cst_95 : f32 to vector<8x128xf32>
    %348 = arith.cmpf ogt, %346, %347 : vector<8x128xf32>
    %349 = math.exp %346 : vector<8x128xf32>
    %cst_96 = arith.constant 1.000000e+00 : f32
    %350 = vector.broadcast %cst_96 : f32 to vector<8x128xf32>
    %351 = arith.subf %349, %350 : vector<8x128xf32>
    %352 = arith.select %348, %346, %351 : vector<8x128xi1>, vector<8x128xf32>
    %353 = vector.extract_strided_slice %7 {offsets = [8, 0], sizes = [8, 128], strides = [1, 1]} : vector<16x128xf32> to vector<8x128xf32>
    %354 = arith.addf %352, %353 : vector<8x128xf32>
    %355 = tpu.concatenate %303, %354 in 0 : vector<8x128xf32>, vector<8x128xf32> -> vector<16x128xf32>
    %c0_97 = arith.constant 0 : index
    %c0_98 = arith.constant 0 : index
    %356 = vector.load %arg5[%c0_97, %c0_98] : memref<16x128xf32, #tpu.memory_space<vmem>>, vector<16x128xf32>
    tpu.vector_store %arg5[%c0_97, %c0_98], %355 {strides = array<i32>} : memref<16x128xf32, #tpu.memory_space<vmem>>, vector<16x128xf32>,
    return
  }
  func.func @transform_0(%arg0: i32) -> (i32, i32) {
    %c0_i32 = arith.constant 0 : i32
    %c0_i32_0 = arith.constant 0 : i32
    return %arg0, %c0_i32 : i32, i32
  }
  func.func @transform_1(%arg0: i32) -> (i32, i32, i32) {
    %c0_i32 = arith.constant 0 : i32
    %c0_i32_0 = arith.constant 0 : i32
    %c0_i32_1 = arith.constant 0 : i32
    return %arg0, %c0_i32, %c0_i32_0 : i32, i32, i32
  }
  func.func @transform_2(%arg0: i32) -> (i32, i32, i32) {
    %c0_i32 = arith.constant 0 : i32
    %c0_i32_0 = arith.constant 0 : i32
    %c0_i32_1 = arith.constant 0 : i32
    %c0_i32_2 = arith.constant 0 : i32
    return %c0_i32, %c0_i32_0, %c0_i32_1 : i32, i32, i32
  }
  func.func @transform_3(%arg0: i32) -> i32 {
    %c0_i32 = arith.constant 0 : i32
    %c0_i32_0 = arith.constant 0 : i32
    return %c0_i32 : i32
  }
  func.func @transform_4(%arg0: i32) -> (i32, i32) {
    %c0_i32 = arith.constant 0 : i32
    %c0_i32_0 = arith.constant 0 : i32
    return %arg0, %c0_i32 : i32, i32
  }
}

</mosaic_0001>

<llo_original>
// kernel: tpu_custom_call.1
$region0: #{tpu_custom_call.1}
  #allocation0 [shape = 'u32[]', space=smem, size = 0x4, offset = 0x4, fixed_abs, tag = 'smem constant byte address 0x4 - core index']
  #allocation1 [shape = 'u32[144,128]{1,0:T(1,128)}', space=vmem, size = 0x12000, scoped, tag = 'internal scratch']
  %s0 = inlined_call_operand.hbm [shape: f32[16,128], index: 0, kind: input, shape index: {}]
  %s1 = inlined_call_operand.hbm [shape: s8[2,8,8], index: 1, kind: input, shape index: {}]
  %s2 = inlined_call_operand.hbm [shape: f32[3,128,128], index: 2, kind: input, shape index: {}]
  %s3 = inlined_call_operand.vmem [shape: f32[3], index: 3, kind: input, shape index: {}]
  %s4 = inlined_call_operand.hbm [shape: f32[16,128], index: 4, kind: output, shape index: {}]
  %s5 = sld [smem:[#allocation0]]
  $region42: #{tpu_custom_call.1} parent=0
    _
  %s7 = ssub.s32 1, %s5
  %s8 = scalar_select 0, %s7, %s5
  $region1: #{tpu_custom_call.1} parent=0
    #allocation2 [shape = 'u8[8192]{0}', space=vmem, size = 0x2000, scoped, tag = 'input window, operand 0, single buffered']
    #allocation3 [shape = 's32[1]{0}', space=sflag, size = 0x4, scoped, tag = 'scoped memory for tpu_custom_call.1']
    #allocation4 [shape = 's32[1]{0}', space=sflag, size = 0x4, scoped, tag = 'scoped memory for tpu_custom_call.1']
    #allocation5 [shape = 's32[1]{0}', space=sflag, size = 0x4, scoped, tag = 'scoped memory for tpu_custom_call.1']
    #allocation6 [shape = 'u8[2048]{0}', space=vmem, size = 0x800, scoped, tag = 'input window, operand 1, single buffered']
    #allocation7 [shape = 's32[1]{0}', space=sflag, size = 0x4, scoped, tag = 'scoped memory for tpu_custom_call.1']
    #allocation8 [shape = 'u8[196608]{0}', space=vmem, size = 0x30000, scoped, tag = 'input window, operand 2, single buffered']
    #allocation9 [shape = 'u8[512]{0}', space=smem, size = 0x200, scoped, tag = 'input window, operand 3, single buffered']
    #allocation10 [shape = 'u8[8192]{0}', space=vmem, size = 0x2000, scoped, tag = 'output window, operand 0, single buffered']
    %9 = vsyncpa [#allocation3], 0
    %10 = vsyncpa [#allocation7], 0
    %11 = vsyncpa [#allocation5], 0
    %12 = vsyncpa [#allocation4], 0
    // Predicated region
    $region2: #{tpu_custom_call.1} parent=1 // pred_check
      _
    $region3: #{tpu_custom_call.1} parent=1 // pred_check_branch
      %14 = sbr.rel (0) target = $region5
    $region4: #{tpu_custom_call.1} parent=1 // pred_region
      %s16 = ssub.s32 256, 256
      %17 = vsyncadd [#allocation3], %s16
      %s18 = sshll.u32 [#allocation2], 4
      %s19 = int_to_ptr.vmem [resolvable:$true] %s18
      %24 = dma.hbm_to_vmem [thread:$0]  %s0, 256, %s19, [#allocation3], 128, 128, 8
    $region5: #{tpu_custom_call.1} parent=1 // pred_fallthru
      _
    // Predicated region
    $region6: #{tpu_custom_call.1} parent=1 // pred_check
      _
    $region7: #{tpu_custom_call.1} parent=1 // pred_check_branch
      %26 = sbr.rel (0) target = $region9
    $region8: #{tpu_custom_call.1} parent=1 // pred_region
      %s28 = ssub.s32 64, 64
      %29 = vsyncadd [#allocation7], %s28
      %s30 = sshll.u32 [#allocation6], 4
      %s31 = int_to_ptr.vmem [resolvable:$true] %s30
      %36 = dma.hbm_to_vmem [thread:$0]  %s1, 64, %s31, [#allocation7], 32, 32, 2
    $region9: #{tpu_custom_call.1} parent=1 // pred_fallthru
      _
    // Predicated region
    $region10: #{tpu_custom_call.1} parent=1 // pred_check
      _
    $region11: #{tpu_custom_call.1} parent=1 // pred_check_branch
      %38 = sbr.rel (0) target = $region13
    $region12: #{tpu_custom_call.1} parent=1 // pred_region
      %s40 = ssub.s32 6144, 6144
      %41 = vsyncadd [#allocation7], %s40
      %s42 = sshll.u32 [#allocation8], 4
      %s43 = int_to_ptr.vmem [resolvable:$true] %s42
      %48 = dma.hbm_to_vmem [thread:$0]  %s2, 6144, %s43, [#allocation7], 128, 128, 8
    $region13: #{tpu_custom_call.1} parent=1 // pred_fallthru
      _
    // Predicated region
    $region14: #{tpu_custom_call.1} parent=1 // pred_check
      _
    $region15: #{tpu_custom_call.1} parent=1 // pred_check_branch
      %50 = sbr.rel (0) target = $region17
    $region16: #{tpu_custom_call.1} parent=1 // pred_region
      %s52 = ssub.s32 16, 16
      %53 = vsyncadd [#allocation5], %s52
      %s55 = sshll.u32 %s3, 4
      %s56 = int_to_ptr.vmem [resolvable:$true] %s55
      %58 = dma.vmem_to_smem %s56, 16, [#allocation9], [#allocation5]
    $region17: #{tpu_custom_call.1} parent=1 // pred_fallthru
      _
    // Predicated region
    $region18: #{tpu_custom_call.1} parent=1 // pred_check
      _
    $region19: #{tpu_custom_call.1} parent=1 // pred_check_branch
      %60 = sbr.rel (0) target = $region21
    $region20: #{tpu_custom_call.1} parent=1 // pred_region
      %61 = dma.done [#allocation3], 256
    $region21: #{tpu_custom_call.1} parent=1 // pred_fallthru
      _
    // Predicated region
    $region22: #{tpu_custom_call.1} parent=1 // pred_check
      _
    $region23: #{tpu_custom_call.1} parent=1 // pred_check_branch
      %63 = sbr.rel (0) target = $region25
    $region24: #{tpu_custom_call.1} parent=1 // pred_region
      %64 = dma.done [#allocation7], 64
    $region25: #{tpu_custom_call.1} parent=1 // pred_fallthru
      _
    // Predicated region
    $region26: #{tpu_custom_call.1} parent=1 // pred_check
      _
    $region27: #{tpu_custom_call.1} parent=1 // pred_check_branch
      %66 = sbr.rel (0) target = $region29
    $region28: #{tpu_custom_call.1} parent=1 // pred_region
      %67 = dma.done [#allocation7], 6144
    $region29: #{tpu_custom_call.1} parent=1 // pred_fallthru
      _
    // Predicated region
    $region30: #{tpu_custom_call.1} parent=1 // pred_check
      _
    $region31: #{tpu_custom_call.1} parent=1 // pred_check_branch
      %69 = sbr.rel (0) target = $region33
    $region32: #{tpu_custom_call.1} parent=1 // pred_region
      %70 = dma.done [#allocation5], 16
    $region33: #{tpu_custom_call.1} parent=1 // pred_fallthru
      _
    %71 = sfence
    %v72 = vld [vmem:[#allocation6] sm:$0x3]
    %v73 = vld [vmem:[#allocation6 + $0x2] sm:$0x3]
    %v74 = vunpack.c.0.s8 %v72
    %v75 = vunpack.c.0.s8 %v73
    %v76 = vcvt.s32.f32 %v74
    %v77 = vcvt.s32.f32 %v75
    %vm78 = vcmp.gt.f32.partialorder %v76, 0.0
    %vm79 = vcmp.gt.f32.partialorder %v77, 0.0
    %v80 = vsel %vm78, 0.0, -9e+15
    %v81 = vsel %vm79, 0.0, -9e+15
    %v82 = vld [vmem:[#allocation2] sm:$0xff]
    %v83 = vld [vmem:[#allocation2 + $0x8] sm:$0xff]
    %v84 = vld [vmem:[#allocation8] sm:$0xff]
    %v85 = vld [vmem:[#allocation8 + $0x8] sm:$0xff]
    %v86 = vld [vmem:[#allocation8 + $0x10] sm:$0xff]
    %v87 = vld [vmem:[#allocation8 + $0x18] sm:$0xff]
    %v88 = vld [vmem:[#allocation8 + $0x20] sm:$0xff]
    %v89 = vld [vmem:[#allocation8 + $0x28] sm:$0xff]
    %v90 = vld [vmem:[#allocation8 + $0x30] sm:$0xff]
    %v91 = vld [vmem:[#allocation8 + $0x38] sm:$0xff]
    %v92 = vld [vmem:[#allocation8 + $0x40] sm:$0xff]
    %v93 = vld [vmem:[#allocation8 + $0x48] sm:$0xff]
    %v94 = vld [vmem:[#allocation8 + $0x50] sm:$0xff]
    %v95 = vld [vmem:[#allocation8 + $0x58] sm:$0xff]
    %v96 = vld [vmem:[#allocation8 + $0x60] sm:$0xff]
    %v97 = vld [vmem:[#allocation8 + $0x68] sm:$0xff]
    %v98 = vld [vmem:[#allocation8 + $0x70] sm:$0xff]
    %v99 = vld [vmem:[#allocation8 + $0x78] sm:$0xff]
    %100 = vmatprep.subr.mxu0 0.0
    %101 = vmatpush1.msra.mxu0 %v84
    %102 = vmatprep.subr.mxu0 0.0
    %103 = vmatpush1.msra.mxu0 %v85
    %104 = vmatprep.subr.mxu0 0.0
    %105 = vmatpush1.msra.mxu0 %v86
    %106 = vmatprep.subr.mxu0 0.0
    %107 = vmatpush1.msra.mxu0 %v87
    %108 = vmatprep.subr.mxu0 0.0
    %109 = vmatpush1.msra.mxu0 %v88
    %110 = vmatprep.subr.mxu0 0.0
    %111 = vmatpush1.msra.mxu0 %v89
    %112 = vmatprep.subr.mxu0 0.0
    %113 = vmatpush1.msra.mxu0 %v90
    %114 = vmatprep.subr.mxu0 0.0
    %115 = vmatpush1.msra.mxu0 %v91
    %116 = vmatprep.subr.mxu0 0.0
    %117 = vmatpush1.msra.mxu0 %v92
    %118 = vmatprep.subr.mxu0 0.0
    %119 = vmatpush1.msra.mxu0 %v93
    %120 = vmatprep.subr.mxu0 0.0
    %121 = vmatpush1.msra.mxu0 %v94
    %122 = vmatprep.subr.mxu0 0.0
    %123 = vmatpush1.msra.mxu0 %v95
    %124 = vmatprep.subr.mxu0 0.0
    %125 = vmatpush1.msra.mxu0 %v96
    %126 = vmatprep.subr.mxu0 0.0
    %127 = vmatpush1.msra.mxu0 %v97
    %128 = vmatprep.subr.mxu0 0.0
    %129 = vmatpush1.msra.mxu0 %v98
    %130 = vmatprep.subr.mxu0 0.0
    %131 = vmatpush1.msra.mxu0 %v99
    %132 = vmatprep.subr.mxu0 0.0
    %133 = vmatpush1.msra.mxu0 0.0
    %134 = vmatprep.subr.mxu0 0.0
    %135 = vmatpush1.msra.mxu0 0.0
    %136 = vmatprep.subr.mxu0 0.0
    %137 = vmatpush1.msra.mxu0 0.0
    %138 = vmatprep.subr.mxu0 0.0
    %139 = vmatpush1.msra.mxu0 0.0
    %140 = vmatprep.subr.mxu0 0.0
    %141 = vmatpush1.msra.mxu0 0.0
    %142 = vmatprep.subr.mxu0 0.0
    %143 = vmatpush1.msra.mxu0 0.0
    %144 = vmatprep.subr.mxu0 0.0
    %145 = vmatpush1.msra.mxu0 0.0
    %146 = vmatprep.subr.mxu0 0.0
    %147 = vmatpush1.msra.mxu0 0.0
    %148 = vmatprep.subr.mxu0 0.0
    %149 = vmatpush1.msra.mxu0 0.0
    %150 = vmatprep.subr.mxu0 0.0
    %151 = vmatpush1.msra.mxu0 0.0
    %152 = vmatprep.subr.mxu0 0.0
    %153 = vmatpush1.msra.mxu0 0.0
    %154 = vmatprep.subr.mxu0 0.0
    %155 = vmatpush1.msra.mxu0 0.0
    %156 = vmatprep.subr.mxu0 0.0
    %157 = vmatpush1.msra.mxu0 0.0
    %158 = vmatprep.subr.mxu0 0.0
    %159 = vmatpush1.msra.mxu0 0.0
    %160 = vmatprep.subr.mxu0 0.0
    %161 = vmatpush1.msra.mxu0 0.0
    %162 = vmatprep.subr.mxu0 0.0
    %163 = vmatpush1.msra.mxu0 0.0
    %164 = vmatprep.mubr.f32.mxu0 0.0
    %165 = vmatmul.mubr.f32.gmra.mrb[0].mxu0 %v82
    %v166 = vpop.f32.mrb[0].mxu0
    %v167 = vadd.f32 0.0, %v166
    %v168 = vpop.f32.mrb[0].mxu0
    %169 = vmatprep.mubr.f32.mxu0 0.0
    %170 = vmatmul.mubr.f32.gmra.mrb[0].mxu0 %v83
    %v171 = vpop.f32.mrb[0].mxu0
    %v172 = vadd.f32 0.0, %v171
    %v173 = vpop.f32.mrb[0].mxu0
    %174 = vdwg.mxu0
    %s175 = sld [smem:[#allocation9]]
    %v176 = vstv %s175
    %v177 = vadd.f32 %v176, %v167
    %v178 = vadd.f32 %v176, %v172
    %vm179 = vcmp.gt.f32.partialorder %v177, 0.0
    %vm180 = vcmp.gt.f32.partialorder %v178, 0.0
    %v181 = vmul.f32 %v177, 0.2
    %v182 = vmul.f32 %v178, 0.2
    %v183 = vsel %vm179, %v177, %v181
    %v184 = vsel %vm180, %v178, %v182
    %186 = vrot.lane.b32.xlu0 %v183, 96
    %v187 = vpop.permute.xlu0 %186
    %189 = vxpose.xlu0.b32.start [1/16] %v187, 128
    %190 = vxpose.xlu0.b32.cont [2/16] 0.0, 128
    %191 = vxpose.xlu0.b32.cont [3/16] 0.0, 128
    %192 = vxpose.xlu0.b32.cont [4/16] 0.0, 128
    %193 = vxpose.xlu0.b32.cont [5/16] 0.0, 128
    %194 = vxpose.xlu0.b32.cont [6/16] 0.0, 128
    %195 = vxpose.xlu0.b32.cont [7/16] 0.0, 128
    %196 = vxpose.xlu0.b32.cont [8/16] 0.0, 128
    %197 = vxpose.xlu0.b32.cont [9/16] 0.0, 128
    %198 = vxpose.xlu0.b32.cont [10/16] 0.0, 128
    %199 = vxpose.xlu0.b32.cont [11/16] 0.0, 128
    %200 = vxpose.xlu0.b32.cont [12/16] 0.0, 128
    %201 = vxpose.xlu0.b32.cont [13/16] 0.0, 128
    %202 = vxpose.xlu0.b32.cont [14/16] 0.0, 128
    %203 = vxpose.xlu0.b32.cont [15/16] 0.0, 128
    %204 = vxpose.xlu0.b32.end [16/16] 0.0, 128
    %v205 = vpop.trf.xlu0
    %v206 = vpop.trf.xlu0
    %v207 = vpop.trf.xlu0
    %v208 = vpop.trf.xlu0
    %v209 = vpop.trf.xlu0
    %v210 = vpop.trf.xlu0
    %v211 = vpop.trf.xlu0
    %v212 = vpop.trf.xlu0
    %v213 = vpop.trf.xlu0
    %v214 = vpop.trf.xlu0
    %v215 = vpop.trf.xlu0
    %v216 = vpop.trf.xlu0
    %v217 = vpop.trf.xlu0
    %v218 = vpop.trf.xlu0
    %v219 = vpop.trf.xlu0
    %v220 = vpop.trf.xlu0
    %v221 = vlaneseq
    %v222 = vshrl.u32 %v221, 7
    %v223 = vsub.s32 0, %v222
    %v224 = vrot.slane %v205, %v223
    %v225 = vadd.f32 %v224, %v80
    %vm226 = vcmask 64512
    %v227 = vsel %vm226, %v225, -inf
    %228 = vmax.xlane.f32.xlu0 %v227
    %v229 = vpop.xlane.xlu0 %228
    %v230 = vsub.f32 %v225, %v229
    %v231 = vmul.f32 %v230, 1.442695
    %v232 = vpow.pop %v231
    %v233 = vsel %vm226, %v232, 0.0
    %234 = vadd.xlane.f32.xlu0 %v233
    %v235 = vpop.xlane.xlu0 %234
    %v236 = vrcp.pop %v235
    %v237 = vmul.f32 1.0, %v236
    %v238 = vmul.f32 %v232, %v237
    %v240 = vsel %vm226, %v238, 0
    %242 = vmatprep.subr.mxu0 0.0
    %243 = vmatpush1.msra.mxu0 %v167
    %244 = vmatprep.subr.mxu0 0.0
    %245 = vmatpush1.msra.mxu0 0.0
    %246 = vmatprep.subr.mxu0 0.0
    %247 = vmatpush1.msra.mxu0 0.0
    %248 = vmatprep.subr.mxu0 0.0
    %249 = vmatpush1.msra.mxu0 0.0
    %250 = vmatprep.subr.mxu0 0.0
    %251 = vmatpush1.msra.mxu0 0.0
    %252 = vmatprep.subr.mxu0 0.0
    %253 = vmatpush1.msra.mxu0 0.0
    %254 = vmatprep.subr.mxu0 0.0
    %255 = vmatpush1.msra.mxu0 0.0
    %256 = vmatprep.subr.mxu0 0.0
    %257 = vmatpush1.msra.mxu0 0.0
    %258 = vmatprep.subr.mxu0 0.0
    %259 = vmatpush1.msra.mxu0 0.0
    %260 = vmatprep.subr.mxu0 0.0
    %261 = vmatpush1.msra.mxu0 0.0
    %262 = vmatprep.subr.mxu0 0.0
    %263 = vmatpush1.msra.mxu0 0.0
    %264 = vmatprep.subr.mxu0 0.0
    %265 = vmatpush1.msra.mxu0 0.0
    %266 = vmatprep.subr.mxu0 0.0
    %267 = vmatpush1.msra.mxu0 0.0
    %268 = vmatprep.subr.mxu0 0.0
    %269 = vmatpush1.msra.mxu0 0.0
    %270 = vmatprep.subr.mxu0 0.0
    %271 = vmatpush1.msra.mxu0 0.0
    %272 = vmatprep.subr.mxu0 0.0
    %273 = vmatpush1.msra.mxu0 0.0
    %274 = vmatprep.subr.mxu0 0.0
    %275 = vmatpush1.msra.mxu0 0.0
    %276 = vmatprep.subr.mxu0 0.0
    %277 = vmatpush1.msra.mxu0 0.0
    %278 = vmatprep.subr.mxu0 0.0
    %279 = vmatpush1.msra.mxu0 0.0
    %280 = vmatprep.subr.mxu0 0.0
    %281 = vmatpush1.msra.mxu0 0.0
    %282 = vmatprep.subr.mxu0 0.0
    %283 = vmatpush1.msra.mxu0 0.0
    %284 = vmatprep.subr.mxu0 0.0
    %285 = vmatpush1.msra.mxu0 0.0
    %286 = vmatprep.subr.mxu0 0.0
    %287 = vmatpush1.msra.mxu0 0.0
    %288 = vmatprep.subr.mxu0 0.0
    %289 = vmatpush1.msra.mxu0 0.0
    %290 = vmatprep.subr.mxu0 0.0
    %291 = vmatpush1.msra.mxu0 0.0
    %292 = vmatprep.subr.mxu0 0.0
    %293 = vmatpush1.msra.mxu0 0.0
    %294 = vmatprep.subr.mxu0 0.0
    %295 = vmatpush1.msra.mxu0 0.0
    %296 = vmatprep.subr.mxu0 0.0
    %297 = vmatpush1.msra.mxu0 0.0
    %298 = vmatprep.subr.mxu0 0.0
    %299 = vmatpush1.msra.mxu0 0.0
    %300 = vmatprep.subr.mxu0 0.0
    %301 = vmatpush1.msra.mxu0 0.0
    %302 = vmatprep.subr.mxu0 0.0
    %303 = vmatpush1.msra.mxu0 0.0
    %304 = vmatprep.subr.mxu0 0.0
    %305 = vmatpush1.msra.mxu0 0.0
    %306 = vmatprep.mubr.f32.mxu0 0.0
    %307 = vmatmul.mubr.f32.gmra.mrb[0].mxu0 %v240
    %v308 = vpop.f32.mrb[0].mxu0
    %v309 = vadd.f32 0.0, %v308
    %v310 = vpop.f32.mrb[0].mxu0
    %311 = vdwg.mxu0
    %313 = vrot.lane.b32.xlu0 %v167, 95
    %v314 = vpop.permute.xlu0 %313
    %316 = vxpose.xlu0.b32.start [1/16] %v314, 128
    %317 = vxpose.xlu0.b32.cont [2/16] 0.0, 128
    %318 = vxpose.xlu0.b32.cont [3/16] 0.0, 128
    %319 = vxpose.xlu0.b32.cont [4/16] 0.0, 128
    %320 = vxpose.xlu0.b32.cont [5/16] 0.0, 128
    %321 = vxpose.xlu0.b32.cont [6/16] 0.0, 128
    %322 = vxpose.xlu0.b32.cont [7/16] 0.0, 128
    %323 = vxpose.xlu0.b32.cont [8/16] 0.0, 128
    %324 = vxpose.xlu0.b32.cont [9/16] 0.0, 128
    %325 = vxpose.xlu0.b32.cont [10/16] 0.0, 128
    %326 = vxpose.xlu0.b32.cont [11/16] 0.0, 128
    %327 = vxpose.xlu0.b32.cont [12/16] 0.0, 128
    %328 = vxpose.xlu0.b32.cont [13/16] 0.0, 128
    %329 = vxpose.xlu0.b32.cont [14/16] 0.0, 128
    %330 = vxpose.xlu0.b32.cont [15/16] 0.0, 128
    %331 = vxpose.xlu0.b32.end [16/16] 0.0, 128
    %v332 = vpop.trf.xlu0
    %v333 = vpop.trf.xlu0
    %v334 = vpop.trf.xlu0
    %v335 = vpop.trf.xlu0
    %v336 = vpop.trf.xlu0
    %v337 = vpop.trf.xlu0
    %v338 = vpop.trf.xlu0
    %v339 = vpop.trf.xlu0
    %v340 = vpop.trf.xlu0
    %v341 = vpop.trf.xlu0
    %v342 = vpop.trf.xlu0
    %v343 = vpop.trf.xlu0
    %v344 = vpop.trf.xlu0
    %v345 = vpop.trf.xlu0
    %v346 = vpop.trf.xlu0
    %v347 = vpop.trf.xlu0
    %349 = vset.pattern.permute.xlu0 34
    %350 = vperm.xlu0 %349, %v309
    %v351 = vpop.permute.xlu0 %350
    %v353 = vlaneseq
    %v354 = vshrl.u32 %v353, 7
    %v355 = vsub.s32 0, %v354
    %v356 = vrot.slane %v332, %v355
    %v357 = vadd.f32 %v351, %v356
    %vm358 = vcmp.gt.f32.partialorder %v357, 0.0
    %v359 = vmul.f32 %v357, 0.2
    %v360 = vsel %vm358, %v357, %v359
    %v361 = vadd.f32 %v360, %v80
    %v362 = vsel %vm226, %v361, -inf
    %v363 = vrot.slane %v362, 4
    %v364 = vmax.f32 %v362, %v363
    %v365 = vrot.slane %v364, 2
    %v366 = vmax.f32 %v364, %v365
    %v367 = vrot.slane %v366, 1
    %v368 = vmax.f32 %v366, %v367
    %v369 = vsub.f32 %v361, %v368
    %v370 = vmul.f32 %v369, 1.442695
    %v371 = vpow.pop %v370
    %v372 = vsel %vm226, %v371, 0.0
    %v373 = vrot.slane %v372, 4
    %v374 = vadd.f32 %v372, %v373
    %v375 = vrot.slane %v374, 2
    %v376 = vadd.f32 %v374, %v375
    %v377 = vrot.slane %v376, 1
    %v378 = vadd.f32 %v376, %v377
    %v379 = vrcp.pop %v378
    %v380 = vmul.f32 1.0, %v379
    %v381 = vmul.f32 %v371, %v380
    %382 = vxpose.xlu0.b32.start [1/16] %v381, 128
    %383 = vxpose.xlu0.b32.cont [2/16] 0.0, 128
    %384 = vxpose.xlu0.b32.cont [3/16] 0.0, 128
    %385 = vxpose.xlu0.b32.cont [4/16] 0.0, 128
    %386 = vxpose.xlu0.b32.cont [5/16] 0.0, 128
    %387 = vxpose.xlu0.b32.cont [6/16] 0.0, 128
    %388 = vxpose.xlu0.b32.cont [7/16] 0.0, 128
    %389 = vxpose.xlu0.b32.cont [8/16] 0.0, 128
    %390 = vxpose.xlu0.b32.cont [9/16] 0.0, 128
    %391 = vxpose.xlu0.b32.cont [10/16] 0.0, 128
    %392 = vxpose.xlu0.b32.cont [11/16] 0.0, 128
    %393 = vxpose.xlu0.b32.cont [12/16] 0.0, 128
    %394 = vxpose.xlu0.b32.cont [13/16] 0.0, 128
    %395 = vxpose.xlu0.b32.cont [14/16] 0.0, 128
    %396 = vxpose.xlu0.b32.cont [15/16] 0.0, 128
    %397 = vxpose.xlu0.b32.end [16/16] 0.0, 128
    %v398 = vpop.trf.xlu0
    %v399 = vpop.trf.xlu0
    %v400 = vpop.trf.xlu0
    %v401 = vpop.trf.xlu0
    %v402 = vpop.trf.xlu0
    %v403 = vpop.trf.xlu0
    %v404 = vpop.trf.xlu0
    %v405 = vpop.trf.xlu0
    %v406 = vpop.trf.xlu0
    %v407 = vpop.trf.xlu0
    %v408 = vpop.trf.xlu0
    %v409 = vpop.trf.xlu0
    %v410 = vpop.trf.xlu0
    %v411 = vpop.trf.xlu0
    %v412 = vpop.trf.xlu0
    %v413 = vpop.trf.xlu0
    %v415 = vsel %vm226, %v398, 0
    %417 = vmatprep.subr.mxu0 0.0
    %418 = vmatpush1.msra.mxu0 %v309
    %419 = vmatprep.subr.mxu0 0.0
    %420 = vmatpush1.msra.mxu0 0.0
    %421 = vmatprep.subr.mxu0 0.0
    %422 = vmatpush1.msra.mxu0 0.0
    %423 = vmatprep.subr.mxu0 0.0
    %424 = vmatpush1.msra.mxu0 0.0
    %425 = vmatprep.subr.mxu0 0.0
    %426 = vmatpush1.msra.mxu0 0.0
    %427 = vmatprep.subr.mxu0 0.0
    %428 = vmatpush1.msra.mxu0 0.0
    %429 = vmatprep.subr.mxu0 0.0
    %430 = vmatpush1.msra.mxu0 0.0
    %431 = vmatprep.subr.mxu0 0.0
    %432 = vmatpush1.msra.mxu0 0.0
    %433 = vmatprep.subr.mxu0 0.0
    %434 = vmatpush1.msra.mxu0 0.0
    %435 = vmatprep.subr.mxu0 0.0
    %436 = vmatpush1.msra.mxu0 0.0
    %437 = vmatprep.subr.mxu0 0.0
    %438 = vmatpush1.msra.mxu0 0.0
    %439 = vmatprep.subr.mxu0 0.0
    %440 = vmatpush1.msra.mxu0 0.0
    %441 = vmatprep.subr.mxu0 0.0
    %442 = vmatpush1.msra.mxu0 0.0
    %443 = vmatprep.subr.mxu0 0.0
    %444 = vmatpush1.msra.mxu0 0.0
    %445 = vmatprep.subr.mxu0 0.0
    %446 = vmatpush1.msra.mxu0 0.0
    %447 = vmatprep.subr.mxu0 0.0
    %448 = vmatpush1.msra.mxu0 0.0
    %449 = vmatprep.subr.mxu0 0.0
    %450 = vmatpush1.msra.mxu0 0.0
    %451 = vmatprep.subr.mxu0 0.0
    %452 = vmatpush1.msra.mxu0 0.0
    %453 = vmatprep.subr.mxu0 0.0
    %454 = vmatpush1.msra.mxu0 0.0
    %455 = vmatprep.subr.mxu0 0.0
    %456 = vmatpush1.msra.mxu0 0.0
    %457 = vmatprep.subr.mxu0 0.0
    %458 = vmatpush1.msra.mxu0 0.0
    %459 = vmatprep.subr.mxu0 0.0
    %460 = vmatpush1.msra.mxu0 0.0
    %461 = vmatprep.subr.mxu0 0.0
    %462 = vmatpush1.msra.mxu0 0.0
    %463 = vmatprep.subr.mxu0 0.0
    %464 = vmatpush1.msra.mxu0 0.0
    %465 = vmatprep.subr.mxu0 0.0
    %466 = vmatpush1.msra.mxu0 0.0
    %467 = vmatprep.subr.mxu0 0.0
    %468 = vmatpush1.msra.mxu0 0.0
    %469 = vmatprep.subr.mxu0 0.0
    %470 = vmatpush1.msra.mxu0 0.0
    %471 = vmatprep.subr.mxu0 0.0
    %472 = vmatpush1.msra.mxu0 0.0
    %473 = vmatprep.subr.mxu0 0.0
    %474 = vmatpush1.msra.mxu0 0.0
    %475 = vmatprep.subr.mxu0 0.0
    %476 = vmatpush1.msra.mxu0 0.0
    %477 = vmatprep.subr.mxu0 0.0
    %478 = vmatpush1.msra.mxu0 0.0
    %479 = vmatprep.subr.mxu0 0.0
    %480 = vmatpush1.msra.mxu0 0.0
    %481 = vmatprep.mubr.f32.mxu0 0.0
    %482 = vmatmul.mubr.f32.gmra.mrb[0].mxu0 %v415
    %v483 = vpop.f32.mrb[0].mxu0
    %v484 = vadd.f32 0.0, %v483
    %v485 = vpop.f32.mrb[0].mxu0
    %486 = vdwg.mxu0
    %vm487 = vcmp.gt.f32.partialorder %v484, 0.0
    %v488 = vmul.f32 %v484, 1.442695
    %v489 = vpow.pop %v488
    %v490 = vsub.f32 %v489, 1.0
    %v491 = vsel %vm487, %v484, %v490
    %v492 = vadd.f32 %v491, %v82
    %494 = vrot.lane.b32.xlu0 %v184, 96
    %v495 = vpop.permute.xlu0 %494
    %497 = vxpose.xlu0.b32.start [1/16] %v495, 128
    %498 = vxpose.xlu0.b32.cont [2/16] 0.0, 128
    %499 = vxpose.xlu0.b32.cont [3/16] 0.0, 128
    %500 = vxpose.xlu0.b32.cont [4/16] 0.0, 128
    %501 = vxpose.xlu0.b32.cont [5/16] 0.0, 128
    %502 = vxpose.xlu0.b32.cont [6/16] 0.0, 128
    %503 = vxpose.xlu0.b32.cont [7/16] 0.0, 128
    %504 = vxpose.xlu0.b32.cont [8/16] 0.0, 128
    %505 = vxpose.xlu0.b32.cont [9/16] 0.0, 128
    %506 = vxpose.xlu0.b32.cont [10/16] 0.0, 128
    %507 = vxpose.xlu0.b32.cont [11/16] 0.0, 128
    %508 = vxpose.xlu0.b32.cont [12/16] 0.0, 128
    %509 = vxpose.xlu0.b32.cont [13/16] 0.0, 128
    %510 = vxpose.xlu0.b32.cont [14/16] 0.0, 128
    %511 = vxpose.xlu0.b32.cont [15/16] 0.0, 128
    %512 = vxpose.xlu0.b32.end [16/16] 0.0, 128
    %v513 = vpop.trf.xlu0
    %v514 = vpop.trf.xlu0
    %v515 = vpop.trf.xlu0
    %v516 = vpop.trf.xlu0
    %v517 = vpop.trf.xlu0
    %v518 = vpop.trf.xlu0
    %v519 = vpop.trf.xlu0
    %v520 = vpop.trf.xlu0
    %v521 = vpop.trf.xlu0
    %v522 = vpop.trf.xlu0
    %v523 = vpop.trf.xlu0
    %v524 = vpop.trf.xlu0
    %v525 = vpop.trf.xlu0
    %v526 = vpop.trf.xlu0
    %v527 = vpop.trf.xlu0
    %v528 = vpop.trf.xlu0
    %v529 = vlaneseq
    %v530 = vshrl.u32 %v529, 7
    %v531 = vsub.s32 0, %v530
    %v532 = vrot.slane %v513, %v531
    %v533 = vadd.f32 %v532, %v81
    %v534 = vsel %vm226, %v533, -inf
    %535 = vmax.xlane.f32.xlu0 %v534
    %v536 = vpop.xlane.xlu0 %535
    %v537 = vsub.f32 %v533, %v536
    %v538 = vmul.f32 %v537, 1.442695
    %v539 = vpow.pop %v538
    %v540 = vsel %vm226, %v539, 0.0
    %541 = vadd.xlane.f32.xlu0 %v540
    %v542 = vpop.xlane.xlu0 %541
    %v543 = vrcp.pop %v542
    %v544 = vmul.f32 1.0, %v543
    %v545 = vmul.f32 %v539, %v544
    %v547 = vsel %vm226, %v545, 0
    %549 = vmatprep.subr.mxu0 0.0
    %550 = vmatpush1.msra.mxu0 %v172
    %551 = vmatprep.subr.mxu0 0.0
    %552 = vmatpush1.msra.mxu0 0.0
    %553 = vmatprep.subr.mxu0 0.0
    %554 = vmatpush1.msra.mxu0 0.0
    %555 = vmatprep.subr.mxu0 0.0
    %556 = vmatpush1.msra.mxu0 0.0
    %557 = vmatprep.subr.mxu0 0.0
    %558 = vmatpush1.msra.mxu0 0.0
    %559 = vmatprep.subr.mxu0 0.0
    %560 = vmatpush1.msra.mxu0 0.0
    %561 = vmatprep.subr.mxu0 0.0
    %562 = vmatpush1.msra.mxu0 0.0
    %563 = vmatprep.subr.mxu0 0.0
    %564 = vmatpush1.msra.mxu0 0.0
    %565 = vmatprep.subr.mxu0 0.0
    %566 = vmatpush1.msra.mxu0 0.0
    %567 = vmatprep.subr.mxu0 0.0
    %568 = vmatpush1.msra.mxu0 0.0
    %569 = vmatprep.subr.mxu0 0.0
    %570 = vmatpush1.msra.mxu0 0.0
    %571 = vmatprep.subr.mxu0 0.0
    %572 = vmatpush1.msra.mxu0 0.0
    %573 = vmatprep.subr.mxu0 0.0
    %574 = vmatpush1.msra.mxu0 0.0
    %575 = vmatprep.subr.mxu0 0.0
    %576 = vmatpush1.msra.mxu0 0.0
    %577 = vmatprep.subr.mxu0 0.0
    %578 = vmatpush1.msra.mxu0 0.0
    %579 = vmatprep.subr.mxu0 0.0
    %580 = vmatpush1.msra.mxu0 0.0
    %581 = vmatprep.subr.mxu0 0.0
    %582 = vmatpush1.msra.mxu0 0.0
    %583 = vmatprep.subr.mxu0 0.0
    %584 = vmatpush1.msra.mxu0 0.0
    %585 = vmatprep.subr.mxu0 0.0
    %586 = vmatpush1.msra.mxu0 0.0
    %587 = vmatprep.subr.mxu0 0.0
    %588 = vmatpush1.msra.mxu0 0.0
    %589 = vmatprep.subr.mxu0 0.0
    %590 = vmatpush1.msra.mxu0 0.0
    %591 = vmatprep.subr.mxu0 0.0
    %592 = vmatpush1.msra.mxu0 0.0
    %593 = vmatprep.subr.mxu0 0.0
    %594 = vmatpush1.msra.mxu0 0.0
    %595 = vmatprep.subr.mxu0 0.0
    %596 = vmatpush1.msra.mxu0 0.0
    %597 = vmatprep.subr.mxu0 0.0
    %598 = vmatpush1.msra.mxu0 0.0
    %599 = vmatprep.subr.mxu0 0.0
    %600 = vmatpush1.msra.mxu0 0.0
    %601 = vmatprep.subr.mxu0 0.0
    %602 = vmatpush1.msra.mxu0 0.0
    %603 = vmatprep.subr.mxu0 0.0
    %604 = vmatpush1.msra.mxu0 0.0
    %605 = vmatprep.subr.mxu0 0.0
    %606 = vmatpush1.msra.mxu0 0.0
    %607 = vmatprep.subr.mxu0 0.0
    %608 = vmatpush1.msra.mxu0 0.0
    %609 = vmatprep.subr.mxu0 0.0
    %610 = vmatpush1.msra.mxu0 0.0
    %611 = vmatprep.subr.mxu0 0.0
    %612 = vmatpush1.msra.mxu0 0.0
    %613 = vmatprep.mubr.f32.mxu0 0.0
    %614 = vmatmul.mubr.f32.gmra.mrb[0].mxu0 %v547
    %v615 = vpop.f32.mrb[0].mxu0
    %v616 = vadd.f32 0.0, %v615
    %v617 = vpop.f32.mrb[0].mxu0
    %618 = vdwg.mxu0
    %620 = vrot.lane.b32.xlu0 %v172, 95
    %v621 = vpop.permute.xlu0 %620
    %623 = vxpose.xlu0.b32.start [1/16] %v621, 128
    %624 = vxpose.xlu0.b32.cont [2/16] 0.0, 128
    %625 = vxpose.xlu0.b32.cont [3/16] 0.0, 128
    %626 = vxpose.xlu0.b32.cont [4/16] 0.0, 128
    %627 = vxpose.xlu0.b32.cont [5/16] 0.0, 128
    %628 = vxpose.xlu0.b32.cont [6/16] 0.0, 128
    %629 = vxpose.xlu0.b32.cont [7/16] 0.0, 128
    %630 = vxpose.xlu0.b32.cont [8/16] 0.0, 128
    %631 = vxpose.xlu0.b32.cont [9/16] 0.0, 128
    %632 = vxpose.xlu0.b32.cont [10/16] 0.0, 128
    %633 = vxpose.xlu0.b32.cont [11/16] 0.0, 128
    %634 = vxpose.xlu0.b32.cont [12/16] 0.0, 128
    %635 = vxpose.xlu0.b32.cont [13/16] 0.0, 128
    %636 = vxpose.xlu0.b32.cont [14/16] 0.0, 128
    %637 = vxpose.xlu0.b32.cont [15/16] 0.0, 128
    %638 = vxpose.xlu0.b32.end [16/16] 0.0, 128
    %v639 = vpop.trf.xlu0
    %v640 = vpop.trf.xlu0
    %v641 = vpop.trf.xlu0
    %v642 = vpop.trf.xlu0
    %v643 = vpop.trf.xlu0
    %v644 = vpop.trf.xlu0
    %v645 = vpop.trf.xlu0
    %v646 = vpop.trf.xlu0
    %v647 = vpop.trf.xlu0
    %v648 = vpop.trf.xlu0
    %v649 = vpop.trf.xlu0
    %v650 = vpop.trf.xlu0
    %v651 = vpop.trf.xlu0
    %v652 = vpop.trf.xlu0
    %v653 = vpop.trf.xlu0
    %v654 = vpop.trf.xlu0
    %656 = vset.pattern.permute.xlu0 34
    %657 = vperm.xlu0 %656, %v616
    %v658 = vpop.permute.xlu0 %657
    %v660 = vlaneseq
    %v661 = vshrl.u32 %v660, 7
    %v662 = vsub.s32 0, %v661
    %v663 = vrot.slane %v639, %v662
    %v664 = vadd.f32 %v658, %v663
    %vm665 = vcmp.gt.f32.partialorder %v664, 0.0
    %v666 = vmul.f32 %v664, 0.2
    %v667 = vsel %vm665, %v664, %v666
    %v668 = vadd.f32 %v667, %v81
    %v669 = vsel %vm226, %v668, -inf
    %v670 = vrot.slane %v669, 4
    %v671 = vmax.f32 %v669, %v670
    %v672 = vrot.slane %v671, 2
    %v673 = vmax.f32 %v671, %v672
    %v674 = vrot.slane %v673, 1
    %v675 = vmax.f32 %v673, %v674
    %v676 = vsub.f32 %v668, %v675
    %v677 = vmul.f32 %v676, 1.442695
    %v678 = vpow.pop %v677
    %v679 = vsel %vm226, %v678, 0.0
    %v680 = vrot.slane %v679, 4
    %v681 = vadd.f32 %v679, %v680
    %v682 = vrot.slane %v681, 2
    %v683 = vadd.f32 %v681, %v682
    %v684 = vrot.slane %v683, 1
    %v685 = vadd.f32 %v683, %v684
    %v686 = vrcp.pop %v685
    %v687 = vmul.f32 1.0, %v686
    %v688 = vmul.f32 %v678, %v687
    %689 = vxpose.xlu0.b32.start [1/16] %v688, 128
    %690 = vxpose.xlu0.b32.cont [2/16] 0.0, 128
    %691 = vxpose.xlu0.b32.cont [3/16] 0.0, 128
    %692 = vxpose.xlu0.b32.cont [4/16] 0.0, 128
    %693 = vxpose.xlu0.b32.cont [5/16] 0.0, 128
    %694 = vxpose.xlu0.b32.cont [6/16] 0.0, 128
    %695 = vxpose.xlu0.b32.cont [7/16] 0.0, 128
    %696 = vxpose.xlu0.b32.cont [8/16] 0.0, 128
    %697 = vxpose.xlu0.b32.cont [9/16] 0.0, 128
    %698 = vxpose.xlu0.b32.cont [10/16] 0.0, 128
    %699 = vxpose.xlu0.b32.cont [11/16] 0.0, 128
    %700 = vxpose.xlu0.b32.cont [12/16] 0.0, 128
    %701 = vxpose.xlu0.b32.cont [13/16] 0.0, 128
    %702 = vxpose.xlu0.b32.cont [14/16] 0.0, 128
    %703 = vxpose.xlu0.b32.cont [15/16] 0.0, 128
    %704 = vxpose.xlu0.b32.end [16/16] 0.0, 128
    %v705 = vpop.trf.xlu0
    %v706 = vpop.trf.xlu0
    %v707 = vpop.trf.xlu0
    %v708 = vpop.trf.xlu0
    %v709 = vpop.trf.xlu0
    %v710 = vpop.trf.xlu0
    %v711 = vpop.trf.xlu0
    %v712 = vpop.trf.xlu0
    %v713 = vpop.trf.xlu0
    %v714 = vpop.trf.xlu0
    %v715 = vpop.trf.xlu0
    %v716 = vpop.trf.xlu0
    %v717 = vpop.trf.xlu0
    %v718 = vpop.trf.xlu0
    %v719 = vpop.trf.xlu0
    %v720 = vpop.trf.xlu0
    %v722 = vsel %vm226, %v705, 0
    %724 = vmatprep.subr.mxu0 0.0
    %725 = vmatpush1.msra.mxu0 %v616
    %726 = vmatprep.subr.mxu0 0.0
    %727 = vmatpush1.msra.mxu0 0.0
    %728 = vmatprep.subr.mxu0 0.0
    %729 = vmatpush1.msra.mxu0 0.0
    %730 = vmatprep.subr.mxu0 0.0
    %731 = vmatpush1.msra.mxu0 0.0
    %732 = vmatprep.subr.mxu0 0.0
    %733 = vmatpush1.msra.mxu0 0.0
    %734 = vmatprep.subr.mxu0 0.0
    %735 = vmatpush1.msra.mxu0 0.0
    %736 = vmatprep.subr.mxu0 0.0
    %737 = vmatpush1.msra.mxu0 0.0
    %738 = vmatprep.subr.mxu0 0.0
    %739 = vmatpush1.msra.mxu0 0.0
    %740 = vmatprep.subr.mxu0 0.0
    %741 = vmatpush1.msra.mxu0 0.0
    %742 = vmatprep.subr.mxu0 0.0
    %743 = vmatpush1.msra.mxu0 0.0
    %744 = vmatprep.subr.mxu0 0.0
    %745 = vmatpush1.msra.mxu0 0.0
    %746 = vmatprep.subr.mxu0 0.0
    %747 = vmatpush1.msra.mxu0 0.0
    %748 = vmatprep.subr.mxu0 0.0
    %749 = vmatpush1.msra.mxu0 0.0
    %750 = vmatprep.subr.mxu0 0.0
    %751 = vmatpush1.msra.mxu0 0.0
    %752 = vmatprep.subr.mxu0 0.0
    %753 = vmatpush1.msra.mxu0 0.0
    %754 = vmatprep.subr.mxu0 0.0
    %755 = vmatpush1.msra.mxu0 0.0
    %756 = vmatprep.subr.mxu0 0.0
    %757 = vmatpush1.msra.mxu0 0.0
    %758 = vmatprep.subr.mxu0 0.0
    %759 = vmatpush1.msra.mxu0 0.0
    %760 = vmatprep.subr.mxu0 0.0
    %761 = vmatpush1.msra.mxu0 0.0
    %762 = vmatprep.subr.mxu0 0.0
    %763 = vmatpush1.msra.mxu0 0.0
    %764 = vmatprep.subr.mxu0 0.0
    %765 = vmatpush1.msra.mxu0 0.0
    %766 = vmatprep.subr.mxu0 0.0
    %767 = vmatpush1.msra.mxu0 0.0
    %768 = vmatprep.subr.mxu0 0.0
    %769 = vmatpush1.msra.mxu0 0.0
    %770 = vmatprep.subr.mxu0 0.0
    %771 = vmatpush1.msra.mxu0 0.0
    %772 = vmatprep.subr.mxu0 0.0
    %773 = vmatpush1.msra.mxu0 0.0
    %774 = vmatprep.subr.mxu0 0.0
    %775 = vmatpush1.msra.mxu0 0.0
    %776 = vmatprep.subr.mxu0 0.0
    %777 = vmatpush1.msra.mxu0 0.0
    %778 = vmatprep.subr.mxu0 0.0
    %779 = vmatpush1.msra.mxu0 0.0
    %780 = vmatprep.subr.mxu0 0.0
    %781 = vmatpush1.msra.mxu0 0.0
    %782 = vmatprep.subr.mxu0 0.0
    %783 = vmatpush1.msra.mxu0 0.0
    %784 = vmatprep.subr.mxu0 0.0
    %785 = vmatpush1.msra.mxu0 0.0
    %786 = vmatprep.subr.mxu0 0.0
    %787 = vmatpush1.msra.mxu0 0.0
    %788 = vmatprep.mubr.f32.mxu0 0.0
    %789 = vmatmul.mubr.f32.gmra.mrb[0].mxu0 %v722
    %v790 = vpop.f32.mrb[0].mxu0
    %v791 = vadd.f32 0.0, %v790
    %v792 = vpop.f32.mrb[0].mxu0
    %793 = vdwg.mxu0
    %vm794 = vcmp.gt.f32.partialorder %v791, 0.0
    %v795 = vmul.f32 %v791, 1.442695
    %v796 = vpow.pop %v795
    %v797 = vsub.f32 %v796, 1.0
    %v798 = vsel %vm794, %v791, %v797
    %v799 = vadd.f32 %v798, %v83
    %s800 = scalar_lea.vmem [#allocation8], 128
    %v801 = vld [vmem:[%s800] sm:$0xff]
    %v802 = vld [vmem:[%s800 + $0x8] sm:$0xff]
    %v803 = vld [vmem:[%s800 + $0x10] sm:$0xff]
    %v804 = vld [vmem:[%s800 + $0x18] sm:$0xff]
    %v805 = vld [vmem:[%s800 + $0x20] sm:$0xff]
    %v806 = vld [vmem:[%s800 + $0x28] sm:$0xff]
    %v807 = vld [vmem:[%s800 + $0x30] sm:$0xff]
    %v808 = vld [vmem:[%s800 + $0x38] sm:$0xff]
    %v809 = vld [vmem:[%s800 + $0x40] sm:$0xff]
    %v810 = vld [vmem:[%s800 + $0x48] sm:$0xff]
    %v811 = vld [vmem:[%s800 + $0x50] sm:$0xff]
    %v812 = vld [vmem:[%s800 + $0x58] sm:$0xff]
    %v813 = vld [vmem:[%s800 + $0x60] sm:$0xff]
    %v814 = vld [vmem:[%s800 + $0x68] sm:$0xff]
    %v815 = vld [vmem:[%s800 + $0x70] sm:$0xff]
    %v816 = vld [vmem:[%s800 + $0x78] sm:$0xff]
    %817 = vmatprep.subr.mxu0 0.0
    %818 = vmatpush1.msra.mxu0 %v801
    %819 = vmatprep.subr.mxu0 0.0
    %820 = vmatpush1.msra.mxu0 %v802
    %821 = vmatprep.subr.mxu0 0.0
    %822 = vmatpush1.msra.mxu0 %v803
    %823 = vmatprep.subr.mxu0 0.0
    %824 = vmatpush1.msra.mxu0 %v804
    %825 = vmatprep.subr.mxu0 0.0
    %826 = vmatpush1.msra.mxu0 %v805
    %827 = vmatprep.subr.mxu0 0.0
    %828 = vmatpush1.msra.mxu0 %v806
    %829 = vmatprep.subr.mxu0 0.0
    %830 = vmatpush1.msra.mxu0 %v807
    %831 = vmatprep.subr.mxu0 0.0
    %832 = vmatpush1.msra.mxu0 %v808
    %833 = vmatprep.subr.mxu0 0.0
    %834 = vmatpush1.msra.mxu0 %v809
    %835 = vmatprep.subr.mxu0 0.0
    %836 = vmatpush1.msra.mxu0 %v810
    %837 = vmatprep.subr.mxu0 0.0
    %838 = vmatpush1.msra.mxu0 %v811
    %839 = vmatprep.subr.mxu0 0.0
    %840 = vmatpush1.msra.mxu0 %v812
    %841 = vmatprep.subr.mxu0 0.0
    %842 = vmatpush1.msra.mxu0 %v813
    %843 = vmatprep.subr.mxu0 0.0
    %844 = vmatpush1.msra.mxu0 %v814
    %845 = vmatprep.subr.mxu0 0.0
    %846 = vmatpush1.msra.mxu0 %v815
    %847 = vmatprep.subr.mxu0 0.0
    %848 = vmatpush1.msra.mxu0 %v816
    %849 = vmatprep.subr.mxu0 0.0
    %850 = vmatpush1.msra.mxu0 0.0
    %851 = vmatprep.subr.mxu0 0.0
    %852 = vmatpush1.msra.mxu0 0.0
    %853 = vmatprep.subr.mxu0 0.0
    %854 = vmatpush1.msra.mxu0 0.0
    %855 = vmatprep.subr.mxu0 0.0
    %856 = vmatpush1.msra.mxu0 0.0
    %857 = vmatprep.subr.mxu0 0.0
    %858 = vmatpush1.msra.mxu0 0.0
    %859 = vmatprep.subr.mxu0 0.0
    %860 = vmatpush1.msra.mxu0 0.0
    %861 = vmatprep.subr.mxu0 0.0
    %862 = vmatpush1.msra.mxu0 0.0
    %863 = vmatprep.subr.mxu0 0.0
    %864 = vmatpush1.msra.mxu0 0.0
    %865 = vmatprep.subr.mxu0 0.0
    %866 = vmatpush1.msra.mxu0 0.0
    %867 = vmatprep.subr.mxu0 0.0
    %868 = vmatpush1.msra.mxu0 0.0
    %869 = vmatprep.subr.mxu0 0.0
    %870 = vmatpush1.msra.mxu0 0.0
    %871 = vmatprep.subr.mxu0 0.0
    %872 = vmatpush1.msra.mxu0 0.0
    %873 = vmatprep.subr.mxu0 0.0
    %874 = vmatpush1.msra.mxu0 0.0
    %875 = vmatprep.subr.mxu0 0.0
    %876 = vmatpush1.msra.mxu0 0.0
    %877 = vmatprep.subr.mxu0 0.0
    %878 = vmatpush1.msra.mxu0 0.0
    %879 = vmatprep.subr.mxu0 0.0
    %880 = vmatpush1.msra.mxu0 0.0
    %881 = vmatprep.mubr.f32.mxu0 0.0
    %882 = vmatmul.mubr.f32.gmra.mrb[0].mxu0 %v492
    %v883 = vpop.f32.mrb[0].mxu0
    %v884 = vadd.f32 0.0, %v883
    %v885 = vpop.f32.mrb[0].mxu0
    %886 = vmatprep.mubr.f32.mxu0 0.0
    %887 = vmatmul.mubr.f32.gmra.mrb[0].mxu0 %v799
    %v888 = vpop.f32.mrb[0].mxu0
    %v889 = vadd.f32 0.0, %v888
    %v890 = vpop.f32.mrb[0].mxu0
    %891 = vdwg.mxu0
    %s892 = sld [smem:[#allocation9 + $0x1]]
    %v893 = vstv %s892
    %v894 = vadd.f32 %v893, %v884
    %v895 = vadd.f32 %v893, %v889
    %vm896 = vcmp.gt.f32.partialorder %v894, 0.0
    %vm897 = vcmp.gt.f32.partialorder %v895, 0.0
    %v898 = vmul.f32 %v894, 0.2
    %v899 = vmul.f32 %v895, 0.2
    %v900 = vsel %vm896, %v894, %v898
    %v901 = vsel %vm897, %v895, %v899
    %903 = vrot.lane.b32.xlu0 %v900, 96
    %v904 = vpop.permute.xlu0 %903
    %906 = vxpose.xlu0.b32.start [1/16] %v904, 128
    %907 = vxpose.xlu0.b32.cont [2/16] 0.0, 128
    %908 = vxpose.xlu0.b32.cont [3/16] 0.0, 128
    %909 = vxpose.xlu0.b32.cont [4/16] 0.0, 128
    %910 = vxpose.xlu0.b32.cont [5/16] 0.0, 128
    %911 = vxpose.xlu0.b32.cont [6/16] 0.0, 128
    %912 = vxpose.xlu0.b32.cont [7/16] 0.0, 128
    %913 = vxpose.xlu0.b32.cont [8/16] 0.0, 128
    %914 = vxpose.xlu0.b32.cont [9/16] 0.0, 128
    %915 = vxpose.xlu0.b32.cont [10/16] 0.0, 128
    %916 = vxpose.xlu0.b32.cont [11/16] 0.0, 128
    %917 = vxpose.xlu0.b32.cont [12/16] 0.0, 128
    %918 = vxpose.xlu0.b32.cont [13/16] 0.0, 128
    %919 = vxpose.xlu0.b32.cont [14/16] 0.0, 128
    %920 = vxpose.xlu0.b32.cont [15/16] 0.0, 128
    %921 = vxpose.xlu0.b32.end [16/16] 0.0, 128
    %v922 = vpop.trf.xlu0
    %v923 = vpop.trf.xlu0
    %v924 = vpop.trf.xlu0
    %v925 = vpop.trf.xlu0
    %v926 = vpop.trf.xlu0
    %v927 = vpop.trf.xlu0
    %v928 = vpop.trf.xlu0
    %v929 = vpop.trf.xlu0
    %v930 = vpop.trf.xlu0
    %v931 = vpop.trf.xlu0
    %v932 = vpop.trf.xlu0
    %v933 = vpop.trf.xlu0
    %v934 = vpop.trf.xlu0
    %v935 = vpop.trf.xlu0
    %v936 = vpop.trf.xlu0
    %v937 = vpop.trf.xlu0
    %v938 = vlaneseq
    %v939 = vshrl.u32 %v938, 7
    %v940 = vsub.s32 0, %v939
    %v941 = vrot.slane %v922, %v940
    %v942 = vadd.f32 %v941, %v80
    %v943 = vsel %vm226, %v942, -inf
    %944 = vmax.xlane.f32.xlu0 %v943
    %v945 = vpop.xlane.xlu0 %944
    %v946 = vsub.f32 %v942, %v945
    %v947 = vmul.f32 %v946, 1.442695
    %v948 = vpow.pop %v947
    %v949 = vsel %vm226, %v948, 0.0
    %950 = vadd.xlane.f32.xlu0 %v949
    %v951 = vpop.xlane.xlu0 %950
    %v952 = vrcp.pop %v951
    %v953 = vmul.f32 1.0, %v952
    %v954 = vmul.f32 %v948, %v953
    %v956 = vsel %vm226, %v954, 0
    %958 = vmatprep.subr.mxu0 0.0
    %959 = vmatpush1.msra.mxu0 %v884
    %960 = vmatprep.subr.mxu0 0.0
    %961 = vmatpush1.msra.mxu0 0.0
    %962 = vmatprep.subr.mxu0 0.0
    %963 = vmatpush1.msra.mxu0 0.0
    %964 = vmatprep.subr.mxu0 0.0
    %965 = vmatpush1.msra.mxu0 0.0
    %966 = vmatprep.subr.mxu0 0.0
    %967 = vmatpush1.msra.mxu0 0.0
    %968 = vmatprep.subr.mxu0 0.0
    %969 = vmatpush1.msra.mxu0 0.0
    %970 = vmatprep.subr.mxu0 0.0
    %971 = vmatpush1.msra.mxu0 0.0
    %972 = vmatprep.subr.mxu0 0.0
    %973 = vmatpush1.msra.mxu0 0.0
    %974 = vmatprep.subr.mxu0 0.0
    %975 = vmatpush1.msra.mxu0 0.0
    %976 = vmatprep.subr.mxu0 0.0
    %977 = vmatpush1.msra.mxu0 0.0
    %978 = vmatprep.subr.mxu0 0.0
    %979 = vmatpush1.msra.mxu0 0.0
    %980 = vmatprep.subr.mxu0 0.0
    %981 = vmatpush1.msra.mxu0 0.0
    %982 = vmatprep.subr.mxu0 0.0
    %983 = vmatpush1.msra.mxu0 0.0
    %984 = vmatprep.subr.mxu0 0.0
    %985 = vmatpush1.msra.mxu0 0.0
    %986 = vmatprep.subr.mxu0 0.0
    %987 = vmatpush1.msra.mxu0 0.0
    %988 = vmatprep.subr.mxu0 0.0
    %989 = vmatpush1.msra.mxu0 0.0
    %990 = vmatprep.subr.mxu0 0.0
    %991 = vmatpush1.msra.mxu0 0.0
    %992 = vmatprep.subr.mxu0 0.0
    %993 = vmatpush1.msra.mxu0 0.0
    %994 = vmatprep.subr.mxu0 0.0
    %995 = vmatpush1.msra.mxu0 0.0
    %996 = vmatprep.subr.mxu0 0.0
    %997 = vmatpush1.msra.mxu0 0.0
    %998 = vmatprep.subr.mxu0 0.0
    %999 = vmatpush1.msra.mxu0 0.0
    %1000 = vmatprep.subr.mxu0 0.0
    %1001 = vmatpush1.msra.mxu0 0.0
    %1002 = vmatprep.subr.mxu0 0.0
    %1003 = vmatpush1.msra.mxu0 0.0
    %1004 = vmatprep.subr.mxu0 0.0
    %1005 = vmatpush1.msra.mxu0 0.0
    %1006 = vmatprep.subr.mxu0 0.0
    %1007 = vmatpush1.msra.mxu0 0.0
    %1008 = vmatprep.subr.mxu0 0.0
    %1009 = vmatpush1.msra.mxu0 0.0
    %1010 = vmatprep.subr.mxu0 0.0
    %1011 = vmatpush1.msra.mxu0 0.0
    %1012 = vmatprep.subr.mxu0 0.0
    %1013 = vmatpush1.msra.mxu0 0.0
    %1014 = vmatprep.subr.mxu0 0.0
    %1015 = vmatpush1.msra.mxu0 0.0
    %1016 = vmatprep.subr.mxu0 0.0
    %1017 = vmatpush1.msra.mxu0 0.0
    %1018 = vmatprep.subr.mxu0 0.0
    %1019 = vmatpush1.msra.mxu0 0.0
    %1020 = vmatprep.subr.mxu0 0.0
    %1021 = vmatpush1.msra.mxu0 0.0
    %1022 = vmatprep.mubr.f32.mxu0 0.0
    %1023 = vmatmul.mubr.f32.gmra.mrb[0].mxu0 %v956
    %v1024 = vpop.f32.mrb[0].mxu0
    %v1025 = vadd.f32 0.0, %v1024
    %v1026 = vpop.f32.mrb[0].mxu0
    %1027 = vdwg.mxu0
    %1029 = vrot.lane.b32.xlu0 %v884, 95
    %v1030 = vpop.permute.xlu0 %1029
    %1032 = vxpose.xlu0.b32.start [1/16] %v1030, 128
    %1033 = vxpose.xlu0.b32.cont [2/16] 0.0, 128
    %1034 = vxpose.xlu0.b32.cont [3/16] 0.0, 128
    %1035 = vxpose.xlu0.b32.cont [4/16] 0.0, 128
    %1036 = vxpose.xlu0.b32.cont [5/16] 0.0, 128
    %1037 = vxpose.xlu0.b32.cont [6/16] 0.0, 128
    %1038 = vxpose.xlu0.b32.cont [7/16] 0.0, 128
    %1039 = vxpose.xlu0.b32.cont [8/16] 0.0, 128
    %1040 = vxpose.xlu0.b32.cont [9/16] 0.0, 128
    %1041 = vxpose.xlu0.b32.cont [10/16] 0.0, 128
    %1042 = vxpose.xlu0.b32.cont [11/16] 0.0, 128
    %1043 = vxpose.xlu0.b32.cont [12/16] 0.0, 128
    %1044 = vxpose.xlu0.b32.cont [13/16] 0.0, 128
    %1045 = vxpose.xlu0.b32.cont [14/16] 0.0, 128
    %1046 = vxpose.xlu0.b32.cont [15/16] 0.0, 128
    %1047 = vxpose.xlu0.b32.end [16/16] 0.0, 128
    %v1048 = vpop.trf.xlu0
    %v1049 = vpop.trf.xlu0
    %v1050 = vpop.trf.xlu0
    %v1051 = vpop.trf.xlu0
    %v1052 = vpop.trf.xlu0
    %v1053 = vpop.trf.xlu0
    %v1054 = vpop.trf.xlu0
    %v1055 = vpop.trf.xlu0
    %v1056 = vpop.trf.xlu0
    %v1057 = vpop.trf.xlu0
    %v1058 = vpop.trf.xlu0
    %v1059 = vpop.trf.xlu0
    %v1060 = vpop.trf.xlu0
    %v1061 = vpop.trf.xlu0
    %v1062 = vpop.trf.xlu0
    %v1063 = vpop.trf.xlu0
    %1065 = vset.pattern.permute.xlu0 34
    %1066 = vperm.xlu0 %1065, %v1025
    %v1067 = vpop.permute.xlu0 %1066
    %v1069 = vlaneseq
    %v1070 = vshrl.u32 %v1069, 7
    %v1071 = vsub.s32 0, %v1070
    %v1072 = vrot.slane %v1048, %v1071
    %v1073 = vadd.f32 %v1067, %v1072
    %vm1074 = vcmp.gt.f32.partialorder %v1073, 0.0
    %v1075 = vmul.f32 %v1073, 0.2
    %v1076 = vsel %vm1074, %v1073, %v1075
    %v1077 = vadd.f32 %v1076, %v80
    %v1078 = vsel %vm226, %v1077, -inf
    %v1079 = vrot.slane %v1078, 4
    %v1080 = vmax.f32 %v1078, %v1079
    %v1081 = vrot.slane %v1080, 2
    %v1082 = vmax.f32 %v1080, %v1081
    %v1083 = vrot.slane %v1082, 1
    %v1084 = vmax.f32 %v1082, %v1083
    %v1085 = vsub.f32 %v1077, %v1084
    %v1086 = vmul.f32 %v1085, 1.442695
    %v1087 = vpow.pop %v1086
    %v1088 = vsel %vm226, %v1087, 0.0
    %v1089 = vrot.slane %v1088, 4
    %v1090 = vadd.f32 %v1088, %v1089
    %v1091 = vrot.slane %v1090, 2
    %v1092 = vadd.f32 %v1090, %v1091
    %v1093 = vrot.slane %v1092, 1
    %v1094 = vadd.f32 %v1092, %v1093
    %v1095 = vrcp.pop %v1094
    %v1096 = vmul.f32 1.0, %v1095
    %v1097 = vmul.f32 %v1087, %v1096
    %1098 = vxpose.xlu0.b32.start [1/16] %v1097, 128
    %1099 = vxpose.xlu0.b32.cont [2/16] 0.0, 128
    %1100 = vxpose.xlu0.b32.cont [3/16] 0.0, 128
    %1101 = vxpose.xlu0.b32.cont [4/16] 0.0, 128
    %1102 = vxpose.xlu0.b32.cont [5/16] 0.0, 128
    %1103 = vxpose.xlu0.b32.cont [6/16] 0.0, 128
    %1104 = vxpose.xlu0.b32.cont [7/16] 0.0, 128
    %1105 = vxpose.xlu0.b32.cont [8/16] 0.0, 128
    %1106 = vxpose.xlu0.b32.cont [9/16] 0.0, 128
    %1107 = vxpose.xlu0.b32.cont [10/16] 0.0, 128
    %1108 = vxpose.xlu0.b32.cont [11/16] 0.0, 128
    %1109 = vxpose.xlu0.b32.cont [12/16] 0.0, 128
    %1110 = vxpose.xlu0.b32.cont [13/16] 0.0, 128
    %1111 = vxpose.xlu0.b32.cont [14/16] 0.0, 128
    %1112 = vxpose.xlu0.b32.cont [15/16] 0.0, 128
    %1113 = vxpose.xlu0.b32.end [16/16] 0.0, 128
    %v1114 = vpop.trf.xlu0
    %v1115 = vpop.trf.xlu0
    %v1116 = vpop.trf.xlu0
    %v1117 = vpop.trf.xlu0
    %v1118 = vpop.trf.xlu0
    %v1119 = vpop.trf.xlu0
    %v1120 = vpop.trf.xlu0
    %v1121 = vpop.trf.xlu0
    %v1122 = vpop.trf.xlu0
    %v1123 = vpop.trf.xlu0
    %v1124 = vpop.trf.xlu0
    %v1125 = vpop.trf.xlu0
    %v1126 = vpop.trf.xlu0
    %v1127 = vpop.trf.xlu0
    %v1128 = vpop.trf.xlu0
    %v1129 = vpop.trf.xlu0
    %v1131 = vsel %vm226, %v1114, 0
    %1133 = vmatprep.subr.mxu0 0.0
    %1134 = vmatpush1.msra.mxu0 %v1025
    %1135 = vmatprep.subr.mxu0 0.0
    %1136 = vmatpush1.msra.mxu0 0.0
    %1137 = vmatprep.subr.mxu0 0.0
    %1138 = vmatpush1.msra.mxu0 0.0
    %1139 = vmatprep.subr.mxu0 0.0
    %1140 = vmatpush1.msra.mxu0 0.0
    %1141 = vmatprep.subr.mxu0 0.0
    %1142 = vmatpush1.msra.mxu0 0.0
    %1143 = vmatprep.subr.mxu0 0.0
    %1144 = vmatpush1.msra.mxu0 0.0
    %1145 = vmatprep.subr.mxu0 0.0
    %1146 = vmatpush1.msra.mxu0 0.0
    %1147 = vmatprep.subr.mxu0 0.0
    %1148 = vmatpush1.msra.mxu0 0.0
    %1149 = vmatprep.subr.mxu0 0.0
    %1150 = vmatpush1.msra.mxu0 0.0
    %1151 = vmatprep.subr.mxu0 0.0
    %1152 = vmatpush1.msra.mxu0 0.0
    %1153 = vmatprep.subr.mxu0 0.0
    %1154 = vmatpush1.msra.mxu0 0.0
    %1155 = vmatprep.subr.mxu0 0.0
    %1156 = vmatpush1.msra.mxu0 0.0
    %1157 = vmatprep.subr.mxu0 0.0
    %1158 = vmatpush1.msra.mxu0 0.0
    %1159 = vmatprep.subr.mxu0 0.0
    %1160 = vmatpush1.msra.mxu0 0.0
    %1161 = vmatprep.subr.mxu0 0.0
    %1162 = vmatpush1.msra.mxu0 0.0
    %1163 = vmatprep.subr.mxu0 0.0
    %1164 = vmatpush1.msra.mxu0 0.0
    %1165 = vmatprep.subr.mxu0 0.0
    %1166 = vmatpush1.msra.mxu0 0.0
    %1167 = vmatprep.subr.mxu0 0.0
    %1168 = vmatpush1.msra.mxu0 0.0
    %1169 = vmatprep.subr.mxu0 0.0
    %1170 = vmatpush1.msra.mxu0 0.0
    %1171 = vmatprep.subr.mxu0 0.0
    %1172 = vmatpush1.msra.mxu0 0.0
    %1173 = vmatprep.subr.mxu0 0.0
    %1174 = vmatpush1.msra.mxu0 0.0
    %1175 = vmatprep.subr.mxu0 0.0
    %1176 = vmatpush1.msra.mxu0 0.0
    %1177 = vmatprep.subr.mxu0 0.0
    %1178 = vmatpush1.msra.mxu0 0.0
    %1179 = vmatprep.subr.mxu0 0.0
    %1180 = vmatpush1.msra.mxu0 0.0
    %1181 = vmatprep.subr.mxu0 0.0
    %1182 = vmatpush1.msra.mxu0 0.0
    %1183 = vmatprep.subr.mxu0 0.0
    %1184 = vmatpush1.msra.mxu0 0.0
    %1185 = vmatprep.subr.mxu0 0.0
    %1186 = vmatpush1.msra.mxu0 0.0
    %1187 = vmatprep.subr.mxu0 0.0
    %1188 = vmatpush1.msra.mxu0 0.0
    %1189 = vmatprep.subr.mxu0 0.0
    %1190 = vmatpush1.msra.mxu0 0.0
    %1191 = vmatprep.subr.mxu0 0.0
    %1192 = vmatpush1.msra.mxu0 0.0
    %1193 = vmatprep.subr.mxu0 0.0
    %1194 = vmatpush1.msra.mxu0 0.0
    %1195 = vmatprep.subr.mxu0 0.0
    %1196 = vmatpush1.msra.mxu0 0.0
    %1197 = vmatprep.mubr.f32.mxu0 0.0
    %1198 = vmatmul.mubr.f32.gmra.mrb[0].mxu0 %v1131
    %v1199 = vpop.f32.mrb[0].mxu0
    %v1200 = vadd.f32 0.0, %v1199
    %v1201 = vpop.f32.mrb[0].mxu0
    %1202 = vdwg.mxu0
    %vm1203 = vcmp.gt.f32.partialorder %v1200, 0.0
    %v1204 = vmul.f32 %v1200, 1.442695
    %v1205 = vpow.pop %v1204
    %v1206 = vsub.f32 %v1205, 1.0
    %v1207 = vsel %vm1203, %v1200, %v1206
    %v1208 = vadd.f32 %v1207, %v82
    %1210 = vrot.lane.b32.xlu0 %v901, 96
    %v1211 = vpop.permute.xlu0 %1210
    %1213 = vxpose.xlu0.b32.start [1/16] %v1211, 128
    %1214 = vxpose.xlu0.b32.cont [2/16] 0.0, 128
    %1215 = vxpose.xlu0.b32.cont [3/16] 0.0, 128
    %1216 = vxpose.xlu0.b32.cont [4/16] 0.0, 128
    %1217 = vxpose.xlu0.b32.cont [5/16] 0.0, 128
    %1218 = vxpose.xlu0.b32.cont [6/16] 0.0, 128
    %1219 = vxpose.xlu0.b32.cont [7/16] 0.0, 128
    %1220 = vxpose.xlu0.b32.cont [8/16] 0.0, 128
    %1221 = vxpose.xlu0.b32.cont [9/16] 0.0, 128
    %1222 = vxpose.xlu0.b32.cont [10/16] 0.0, 128
    %1223 = vxpose.xlu0.b32.cont [11/16] 0.0, 128
    %1224 = vxpose.xlu0.b32.cont [12/16] 0.0, 128
    %1225 = vxpose.xlu0.b32.cont [13/16] 0.0, 128
    %1226 = vxpose.xlu0.b32.cont [14/16] 0.0, 128
    %1227 = vxpose.xlu0.b32.cont [15/16] 0.0, 128
    %1228 = vxpose.xlu0.b32.end [16/16] 0.0, 128
    %v1229 = vpop.trf.xlu0
    %v1230 = vpop.trf.xlu0
    %v1231 = vpop.trf.xlu0
    %v1232 = vpop.trf.xlu0
    %v1233 = vpop.trf.xlu0
    %v1234 = vpop.trf.xlu0
    %v1235 = vpop.trf.xlu0
    %v1236 = vpop.trf.xlu0
    %v1237 = vpop.trf.xlu0
    %v1238 = vpop.trf.xlu0
    %v1239 = vpop.trf.xlu0
    %v1240 = vpop.trf.xlu0
    %v1241 = vpop.trf.xlu0
    %v1242 = vpop.trf.xlu0
    %v1243 = vpop.trf.xlu0
    %v1244 = vpop.trf.xlu0
    %v1245 = vlaneseq
    %v1246 = vshrl.u32 %v1245, 7
    %v1247 = vsub.s32 0, %v1246
    %v1248 = vrot.slane %v1229, %v1247
    %v1249 = vadd.f32 %v1248, %v81
    %v1250 = vsel %vm226, %v1249, -inf
    %1251 = vmax.xlane.f32.xlu0 %v1250
    %v1252 = vpop.xlane.xlu0 %1251
    %v1253 = vsub.f32 %v1249, %v1252
    %v1254 = vmul.f32 %v1253, 1.442695
    %v1255 = vpow.pop %v1254
    %v1256 = vsel %vm226, %v1255, 0.0
    %1257 = vadd.xlane.f32.xlu0 %v1256
    %v1258 = vpop.xlane.xlu0 %1257
    %v1259 = vrcp.pop %v1258
    %v1260 = vmul.f32 1.0, %v1259
    %v1261 = vmul.f32 %v1255, %v1260
    %v1263 = vsel %vm226, %v1261, 0
    %1265 = vmatprep.subr.mxu0 0.0
    %1266 = vmatpush1.msra.mxu0 %v889
    %1267 = vmatprep.subr.mxu0 0.0
    %1268 = vmatpush1.msra.mxu0 0.0
    %1269 = vmatprep.subr.mxu0 0.0
    %1270 = vmatpush1.msra.mxu0 0.0
    %1271 = vmatprep.subr.mxu0 0.0
    %1272 = vmatpush1.msra.mxu0 0.0
    %1273 = vmatprep.subr.mxu0 0.0
    %1274 = vmatpush1.msra.mxu0 0.0
    %1275 = vmatprep.subr.mxu0 0.0
    %1276 = vmatpush1.msra.mxu0 0.0
    %1277 = vmatprep.subr.mxu0 0.0
    %1278 = vmatpush1.msra.mxu0 0.0
    %1279 = vmatprep.subr.mxu0 0.0
    %1280 = vmatpush1.msra.mxu0 0.0
    %1281 = vmatprep.subr.mxu0 0.0
    %1282 = vmatpush1.msra.mxu0 0.0
    %1283 = vmatprep.subr.mxu0 0.0
    %1284 = vmatpush1.msra.mxu0 0.0
    %1285 = vmatprep.subr.mxu0 0.0
    %1286 = vmatpush1.msra.mxu0 0.0
    %1287 = vmatprep.subr.mxu0 0.0
    %1288 = vmatpush1.msra.mxu0 0.0
    %1289 = vmatprep.subr.mxu0 0.0
    %1290 = vmatpush1.msra.mxu0 0.0
    %1291 = vmatprep.subr.mxu0 0.0
    %1292 = vmatpush1.msra.mxu0 0.0
    %1293 = vmatprep.subr.mxu0 0.0
    %1294 = vmatpush1.msra.mxu0 0.0
    %1295 = vmatprep.subr.mxu0 0.0
    %1296 = vmatpush1.msra.mxu0 0.0
    %1297 = vmatprep.subr.mxu0 0.0
    %1298 = vmatpush1.msra.mxu0 0.0
    %1299 = vmatprep.subr.mxu0 0.0
    %1300 = vmatpush1.msra.mxu0 0.0
    %1301 = vmatprep.subr.mxu0 0.0
    %1302 = vmatpush1.msra.mxu0 0.0
    %1303 = vmatprep.subr.mxu0 0.0
    %1304 = vmatpush1.msra.mxu0 0.0
    %1305 = vmatprep.subr.mxu0 0.0
    %1306 = vmatpush1.msra.mxu0 0.0
    %1307 = vmatprep.subr.mxu0 0.0
    %1308 = vmatpush1.msra.mxu0 0.0
    %1309 = vmatprep.subr.mxu0 0.0
    %1310 = vmatpush1.msra.mxu0 0.0
    %1311 = vmatprep.subr.mxu0 0.0
    %1312 = vmatpush1.msra.mxu0 0.0
    %1313 = vmatprep.subr.mxu0 0.0
    %1314 = vmatpush1.msra.mxu0 0.0
    %1315 = vmatprep.subr.mxu0 0.0
    %1316 = vmatpush1.msra.mxu0 0.0
    %1317 = vmatprep.subr.mxu0 0.0
    %1318 = vmatpush1.msra.mxu0 0.0
    %1319 = vmatprep.subr.mxu0 0.0
    %1320 = vmatpush1.msra.mxu0 0.0
    %1321 = vmatprep.subr.mxu0 0.0
    %1322 = vmatpush1.msra.mxu0 0.0
    %1323 = vmatprep.subr.mxu0 0.0
    %1324 = vmatpush1.msra.mxu0 0.0
    %1325 = vmatprep.subr.mxu0 0.0
    %1326 = vmatpush1.msra.mxu0 0.0
    %1327 = vmatprep.subr.mxu0 0.0
    %1328 = vmatpush1.msra.mxu0 0.0
    %1329 = vmatprep.mubr.f32.mxu0 0.0
    %1330 = vmatmul.mubr.f32.gmra.mrb[0].mxu0 %v1263
    %v1331 = vpop.f32.mrb[0].mxu0
    %v1332 = vadd.f32 0.0, %v1331
    %v1333 = vpop.f32.mrb[0].mxu0
    %1334 = vdwg.mxu0
    %1336 = vrot.lane.b32.xlu0 %v889, 95
    %v1337 = vpop.permute.xlu0 %1336
    %1339 = vxpose.xlu0.b32.start [1/16] %v1337, 128
    %1340 = vxpose.xlu0.b32.cont [2/16] 0.0, 128
    %1341 = vxpose.xlu0.b32.cont [3/16] 0.0, 128
    %1342 = vxpose.xlu0.b32.cont [4/16] 0.0, 128
    %1343 = vxpose.xlu0.b32.cont [5/16] 0.0, 128
    %1344 = vxpose.xlu0.b32.cont [6/16] 0.0, 128
    %1345 = vxpose.xlu0.b32.cont [7/16] 0.0, 128
    %1346 = vxpose.xlu0.b32.cont [8/16] 0.0, 128
    %1347 = vxpose.xlu0.b32.cont [9/16] 0.0, 128
    %1348 = vxpose.xlu0.b32.cont [10/16] 0.0, 128
    %1349 = vxpose.xlu0.b32.cont [11/16] 0.0, 128
    %1350 = vxpose.xlu0.b32.cont [12/16] 0.0, 128
    %1351 = vxpose.xlu0.b32.cont [13/16] 0.0, 128
    %1352 = vxpose.xlu0.b32.cont [14/16] 0.0, 128
    %1353 = vxpose.xlu0.b32.cont [15/16] 0.0, 128
    %1354 = vxpose.xlu0.b32.end [16/16] 0.0, 128
    %v1355 = vpop.trf.xlu0
    %v1356 = vpop.trf.xlu0
    %v1357 = vpop.trf.xlu0
    %v1358 = vpop.trf.xlu0
    %v1359 = vpop.trf.xlu0
    %v1360 = vpop.trf.xlu0
    %v1361 = vpop.trf.xlu0
    %v1362 = vpop.trf.xlu0
    %v1363 = vpop.trf.xlu0
    %v1364 = vpop.trf.xlu0
    %v1365 = vpop.trf.xlu0
    %v1366 = vpop.trf.xlu0
    %v1367 = vpop.trf.xlu0
    %v1368 = vpop.trf.xlu0
    %v1369 = vpop.trf.xlu0
    %v1370 = vpop.trf.xlu0
    %1372 = vset.pattern.permute.xlu0 34
    %1373 = vperm.xlu0 %1372, %v1332
    %v1374 = vpop.permute.xlu0 %1373
    %v1376 = vlaneseq
    %v1377 = vshrl.u32 %v1376, 7
    %v1378 = vsub.s32 0, %v1377
    %v1379 = vrot.slane %v1355, %v1378
    %v1380 = vadd.f32 %v1374, %v1379
    %vm1381 = vcmp.gt.f32.partialorder %v1380, 0.0
    %v1382 = vmul.f32 %v1380, 0.2
    %v1383 = vsel %vm1381, %v1380, %v1382
    %v1384 = vadd.f32 %v1383, %v81
    %v1385 = vsel %vm226, %v1384, -inf
    %v1386 = vrot.slane %v1385, 4
    %v1387 = vmax.f32 %v1385, %v1386
    %v1388 = vrot.slane %v1387, 2
    %v1389 = vmax.f32 %v1387, %v1388
    %v1390 = vrot.slane %v1389, 1
    %v1391 = vmax.f32 %v1389, %v1390
    %v1392 = vsub.f32 %v1384, %v1391
    %v1393 = vmul.f32 %v1392, 1.442695
    %v1394 = vpow.pop %v1393
    %v1395 = vsel %vm226, %v1394, 0.0
    %v1396 = vrot.slane %v1395, 4
    %v1397 = vadd.f32 %v1395, %v1396
    %v1398 = vrot.slane %v1397, 2
    %v1399 = vadd.f32 %v1397, %v1398
    %v1400 = vrot.slane %v1399, 1
    %v1401 = vadd.f32 %v1399, %v1400
    %v1402 = vrcp.pop %v1401
    %v1403 = vmul.f32 1.0, %v1402
    %v1404 = vmul.f32 %v1394, %v1403
    %1405 = vxpose.xlu0.b32.start [1/16] %v1404, 128
    %1406 = vxpose.xlu0.b32.cont [2/16] 0.0, 128
    %1407 = vxpose.xlu0.b32.cont [3/16] 0.0, 128
    %1408 = vxpose.xlu0.b32.cont [4/16] 0.0, 128
    %1409 = vxpose.xlu0.b32.cont [5/16] 0.0, 128
    %1410 = vxpose.xlu0.b32.cont [6/16] 0.0, 128
    %1411 = vxpose.xlu0.b32.cont [7/16] 0.0, 128
    %1412 = vxpose.xlu0.b32.cont [8/16] 0.0, 128
    %1413 = vxpose.xlu0.b32.cont [9/16] 0.0, 128
    %1414 = vxpose.xlu0.b32.cont [10/16] 0.0, 128
    %1415 = vxpose.xlu0.b32.cont [11/16] 0.0, 128
    %1416 = vxpose.xlu0.b32.cont [12/16] 0.0, 128
    %1417 = vxpose.xlu0.b32.cont [13/16] 0.0, 128
    %1418 = vxpose.xlu0.b32.cont [14/16] 0.0, 128
    %1419 = vxpose.xlu0.b32.cont [15/16] 0.0, 128
    %1420 = vxpose.xlu0.b32.end [16/16] 0.0, 128
    %v1421 = vpop.trf.xlu0
    %v1422 = vpop.trf.xlu0
    %v1423 = vpop.trf.xlu0
    %v1424 = vpop.trf.xlu0
    %v1425 = vpop.trf.xlu0
    %v1426 = vpop.trf.xlu0
    %v1427 = vpop.trf.xlu0
    %v1428 = vpop.trf.xlu0
    %v1429 = vpop.trf.xlu0
    %v1430 = vpop.trf.xlu0
    %v1431 = vpop.trf.xlu0
    %v1432 = vpop.trf.xlu0
    %v1433 = vpop.trf.xlu0
    %v1434 = vpop.trf.xlu0
    %v1435 = vpop.trf.xlu0
    %v1436 = vpop.trf.xlu0
    %v1438 = vsel %vm226, %v1421, 0
    %1440 = vmatprep.subr.mxu0 0.0
    %1441 = vmatpush1.msra.mxu0 %v1332
    %1442 = vmatprep.subr.mxu0 0.0
    %1443 = vmatpush1.msra.mxu0 0.0
    %1444 = vmatprep.subr.mxu0 0.0
    %1445 = vmatpush1.msra.mxu0 0.0
    %1446 = vmatprep.subr.mxu0 0.0
    %1447 = vmatpush1.msra.mxu0 0.0
    %1448 = vmatprep.subr.mxu0 0.0
    %1449 = vmatpush1.msra.mxu0 0.0
    %1450 = vmatprep.subr.mxu0 0.0
    %1451 = vmatpush1.msra.mxu0 0.0
    %1452 = vmatprep.subr.mxu0 0.0
    %1453 = vmatpush1.msra.mxu0 0.0
    %1454 = vmatprep.subr.mxu0 0.0
    %1455 = vmatpush1.msra.mxu0 0.0
    %1456 = vmatprep.subr.mxu0 0.0
    %1457 = vmatpush1.msra.mxu0 0.0
    %1458 = vmatprep.subr.mxu0 0.0
    %1459 = vmatpush1.msra.mxu0 0.0
    %1460 = vmatprep.subr.mxu0 0.0
    %1461 = vmatpush1.msra.mxu0 0.0
    %1462 = vmatprep.subr.mxu0 0.0
    %1463 = vmatpush1.msra.mxu0 0.0
    %1464 = vmatprep.subr.mxu0 0.0
    %1465 = vmatpush1.msra.mxu0 0.0
    %1466 = vmatprep.subr.mxu0 0.0
    %1467 = vmatpush1.msra.mxu0 0.0
    %1468 = vmatprep.subr.mxu0 0.0
    %1469 = vmatpush1.msra.mxu0 0.0
    %1470 = vmatprep.subr.mxu0 0.0
    %1471 = vmatpush1.msra.mxu0 0.0
    %1472 = vmatprep.subr.mxu0 0.0
    %1473 = vmatpush1.msra.mxu0 0.0
    %1474 = vmatprep.subr.mxu0 0.0
    %1475 = vmatpush1.msra.mxu0 0.0
    %1476 = vmatprep.subr.mxu0 0.0
    %1477 = vmatpush1.msra.mxu0 0.0
    %1478 = vmatprep.subr.mxu0 0.0
    %1479 = vmatpush1.msra.mxu0 0.0
    %1480 = vmatprep.subr.mxu0 0.0
    %1481 = vmatpush1.msra.mxu0 0.0
    %1482 = vmatprep.subr.mxu0 0.0
    %1483 = vmatpush1.msra.mxu0 0.0
    %1484 = vmatprep.subr.mxu0 0.0
    %1485 = vmatpush1.msra.mxu0 0.0
    %1486 = vmatprep.subr.mxu0 0.0
    %1487 = vmatpush1.msra.mxu0 0.0
    %1488 = vmatprep.subr.mxu0 0.0
    %1489 = vmatpush1.msra.mxu0 0.0
    %1490 = vmatprep.subr.mxu0 0.0
    %1491 = vmatpush1.msra.mxu0 0.0
    %1492 = vmatprep.subr.mxu0 0.0
    %1493 = vmatpush1.msra.mxu0 0.0
    %1494 = vmatprep.subr.mxu0 0.0
    %1495 = vmatpush1.msra.mxu0 0.0
    %1496 = vmatprep.subr.mxu0 0.0
    %1497 = vmatpush1.msra.mxu0 0.0
    %1498 = vmatprep.subr.mxu0 0.0
    %1499 = vmatpush1.msra.mxu0 0.0
    %1500 = vmatprep.subr.mxu0 0.0
    %1501 = vmatpush1.msra.mxu0 0.0
    %1502 = vmatprep.subr.mxu0 0.0
    %1503 = vmatpush1.msra.mxu0 0.0
    %1504 = vmatprep.mubr.f32.mxu0 0.0
    %1505 = vmatmul.mubr.f32.gmra.mrb[0].mxu0 %v1438
    %v1506 = vpop.f32.mrb[0].mxu0
    %v1507 = vadd.f32 0.0, %v1506
    %v1508 = vpop.f32.mrb[0].mxu0
    %1509 = vdwg.mxu0
    %vm1510 = vcmp.gt.f32.partialorder %v1507, 0.0
    %v1511 = vmul.f32 %v1507, 1.442695
    %v1512 = vpow.pop %v1511
    %v1513 = vsub.f32 %v1512, 1.0
    %v1514 = vsel %vm1510, %v1507, %v1513
    %v1515 = vadd.f32 %v1514, %v83
    %s1516 = scalar_lea.vmem [#allocation8], 256
    %v1517 = vld [vmem:[%s1516] sm:$0xff]
    %v1518 = vld [vmem:[%s1516 + $0x8] sm:$0xff]
    %v1519 = vld [vmem:[%s1516 + $0x10] sm:$0xff]
    %v1520 = vld [vmem:[%s1516 + $0x18] sm:$0xff]
    %v1521 = vld [vmem:[%s1516 + $0x20] sm:$0xff]
    %v1522 = vld [vmem:[%s1516 + $0x28] sm:$0xff]
    %v1523 = vld [vmem:[%s1516 + $0x30] sm:$0xff]
    %v1524 = vld [vmem:[%s1516 + $0x38] sm:$0xff]
    %v1525 = vld [vmem:[%s1516 + $0x40] sm:$0xff]
    %v1526 = vld [vmem:[%s1516 + $0x48] sm:$0xff]
    %v1527 = vld [vmem:[%s1516 + $0x50] sm:$0xff]
    %v1528 = vld [vmem:[%s1516 + $0x58] sm:$0xff]
    %v1529 = vld [vmem:[%s1516 + $0x60] sm:$0xff]
    %v1530 = vld [vmem:[%s1516 + $0x68] sm:$0xff]
    %v1531 = vld [vmem:[%s1516 + $0x70] sm:$0xff]
    %v1532 = vld [vmem:[%s1516 + $0x78] sm:$0xff]
    %1533 = vmatprep.subr.mxu0 0.0
    %1534 = vmatpush1.msra.mxu0 %v1517
    %1535 = vmatprep.subr.mxu0 0.0
    %1536 = vmatpush1.msra.mxu0 %v1518
    %1537 = vmatprep.subr.mxu0 0.0
    %1538 = vmatpush1.msra.mxu0 %v1519
    %1539 = vmatprep.subr.mxu0 0.0
    %1540 = vmatpush1.msra.mxu0 %v1520
    %1541 = vmatprep.subr.mxu0 0.0
    %1542 = vmatpush1.msra.mxu0 %v1521
    %1543 = vmatprep.subr.mxu0 0.0
    %1544 = vmatpush1.msra.mxu0 %v1522
    %1545 = vmatprep.subr.mxu0 0.0
    %1546 = vmatpush1.msra.mxu0 %v1523
    %1547 = vmatprep.subr.mxu0 0.0
    %1548 = vmatpush1.msra.mxu0 %v1524
    %1549 = vmatprep.subr.mxu0 0.0
    %1550 = vmatpush1.msra.mxu0 %v1525
    %1551 = vmatprep.subr.mxu0 0.0
    %1552 = vmatpush1.msra.mxu0 %v1526
    %1553 = vmatprep.subr.mxu0 0.0
    %1554 = vmatpush1.msra.mxu0 %v1527
    %1555 = vmatprep.subr.mxu0 0.0
    %1556 = vmatpush1.msra.mxu0 %v1528
    %1557 = vmatprep.subr.mxu0 0.0
    %1558 = vmatpush1.msra.mxu0 %v1529
    %1559 = vmatprep.subr.mxu0 0.0
    %1560 = vmatpush1.msra.mxu0 %v1530
    %1561 = vmatprep.subr.mxu0 0.0
    %1562 = vmatpush1.msra.mxu0 %v1531
    %1563 = vmatprep.subr.mxu0 0.0
    %1564 = vmatpush1.msra.mxu0 %v1532
    %1565 = vmatprep.subr.mxu0 0.0
    %1566 = vmatpush1.msra.mxu0 0.0
    %1567 = vmatprep.subr.mxu0 0.0
    %1568 = vmatpush1.msra.mxu0 0.0
    %1569 = vmatprep.subr.mxu0 0.0
    %1570 = vmatpush1.msra.mxu0 0.0
    %1571 = vmatprep.subr.mxu0 0.0
    %1572 = vmatpush1.msra.mxu0 0.0
    %1573 = vmatprep.subr.mxu0 0.0
    %1574 = vmatpush1.msra.mxu0 0.0
    %1575 = vmatprep.subr.mxu0 0.0
    %1576 = vmatpush1.msra.mxu0 0.0
    %1577 = vmatprep.subr.mxu0 0.0
    %1578 = vmatpush1.msra.mxu0 0.0
    %1579 = vmatprep.subr.mxu0 0.0
    %1580 = vmatpush1.msra.mxu0 0.0
    %1581 = vmatprep.subr.mxu0 0.0
    %1582 = vmatpush1.msra.mxu0 0.0
    %1583 = vmatprep.subr.mxu0 0.0
    %1584 = vmatpush1.msra.mxu0 0.0
    %1585 = vmatprep.subr.mxu0 0.0
    %1586 = vmatpush1.msra.mxu0 0.0
    %1587 = vmatprep.subr.mxu0 0.0
    %1588 = vmatpush1.msra.mxu0 0.0
    %1589 = vmatprep.subr.mxu0 0.0
    %1590 = vmatpush1.msra.mxu0 0.0
    %1591 = vmatprep.subr.mxu0 0.0
    %1592 = vmatpush1.msra.mxu0 0.0
    %1593 = vmatprep.subr.mxu0 0.0
    %1594 = vmatpush1.msra.mxu0 0.0
    %1595 = vmatprep.subr.mxu0 0.0
    %1596 = vmatpush1.msra.mxu0 0.0
    %1597 = vmatprep.mubr.f32.mxu0 0.0
    %1598 = vmatmul.mubr.f32.gmra.mrb[0].mxu0 %v1208
    %v1599 = vpop.f32.mrb[0].mxu0
    %v1600 = vadd.f32 0.0, %v1599
    %v1601 = vpop.f32.mrb[0].mxu0
    %1602 = vmatprep.mubr.f32.mxu0 0.0
    %1603 = vmatmul.mubr.f32.gmra.mrb[0].mxu0 %v1515
    %v1604 = vpop.f32.mrb[0].mxu0
    %v1605 = vadd.f32 0.0, %v1604
    %v1606 = vpop.f32.mrb[0].mxu0
    %1607 = vdwg.mxu0
    %s1608 = sld [smem:[#allocation9 + $0x2]]
    %v1609 = vstv %s1608
    %v1610 = vadd.f32 %v1609, %v1600
    %v1611 = vadd.f32 %v1609, %v1605
    %vm1612 = vcmp.gt.f32.partialorder %v1610, 0.0
    %vm1613 = vcmp.gt.f32.partialorder %v1611, 0.0
    %v1614 = vmul.f32 %v1610, 0.2
    %v1615 = vmul.f32 %v1611, 0.2
    %v1616 = vsel %vm1612, %v1610, %v1614
    %v1617 = vsel %vm1613, %v1611, %v1615
    %1619 = vrot.lane.b32.xlu0 %v1616, 96
    %v1620 = vpop.permute.xlu0 %1619
    %1622 = vxpose.xlu0.b32.start [1/16] %v1620, 128
    %1623 = vxpose.xlu0.b32.cont [2/16] 0.0, 128
    %1624 = vxpose.xlu0.b32.cont [3/16] 0.0, 128
    %1625 = vxpose.xlu0.b32.cont [4/16] 0.0, 128
    %1626 = vxpose.xlu0.b32.cont [5/16] 0.0, 128
    %1627 = vxpose.xlu0.b32.cont [6/16] 0.0, 128
    %1628 = vxpose.xlu0.b32.cont [7/16] 0.0, 128
    %1629 = vxpose.xlu0.b32.cont [8/16] 0.0, 128
    %1630 = vxpose.xlu0.b32.cont [9/16] 0.0, 128
    %1631 = vxpose.xlu0.b32.cont [10/16] 0.0, 128
    %1632 = vxpose.xlu0.b32.cont [11/16] 0.0, 128
    %1633 = vxpose.xlu0.b32.cont [12/16] 0.0, 128
    %1634 = vxpose.xlu0.b32.cont [13/16] 0.0, 128
    %1635 = vxpose.xlu0.b32.cont [14/16] 0.0, 128
    %1636 = vxpose.xlu0.b32.cont [15/16] 0.0, 128
    %1637 = vxpose.xlu0.b32.end [16/16] 0.0, 128
    %v1638 = vpop.trf.xlu0
    %v1639 = vpop.trf.xlu0
    %v1640 = vpop.trf.xlu0
    %v1641 = vpop.trf.xlu0
    %v1642 = vpop.trf.xlu0
    %v1643 = vpop.trf.xlu0
    %v1644 = vpop.trf.xlu0
    %v1645 = vpop.trf.xlu0
    %v1646 = vpop.trf.xlu0
    %v1647 = vpop.trf.xlu0
    %v1648 = vpop.trf.xlu0
    %v1649 = vpop.trf.xlu0
    %v1650 = vpop.trf.xlu0
    %v1651 = vpop.trf.xlu0
    %v1652 = vpop.trf.xlu0
    %v1653 = vpop.trf.xlu0
    %v1654 = vlaneseq
    %v1655 = vshrl.u32 %v1654, 7
    %v1656 = vsub.s32 0, %v1655
    %v1657 = vrot.slane %v1638, %v1656
    %v1658 = vadd.f32 %v1657, %v80
    %v1659 = vsel %vm226, %v1658, -inf
    %1660 = vmax.xlane.f32.xlu0 %v1659
    %v1661 = vpop.xlane.xlu0 %1660
    %v1662 = vsub.f32 %v1658, %v1661
    %v1663 = vmul.f32 %v1662, 1.442695
    %v1664 = vpow.pop %v1663
    %v1665 = vsel %vm226, %v1664, 0.0
    %1666 = vadd.xlane.f32.xlu0 %v1665
    %v1667 = vpop.xlane.xlu0 %1666
    %v1668 = vrcp.pop %v1667
    %v1669 = vmul.f32 1.0, %v1668
    %v1670 = vmul.f32 %v1664, %v1669
    %v1672 = vsel %vm226, %v1670, 0
    %1674 = vmatprep.subr.mxu0 0.0
    %1675 = vmatpush1.msra.mxu0 %v1600
    %1676 = vmatprep.subr.mxu0 0.0
    %1677 = vmatpush1.msra.mxu0 0.0
    %1678 = vmatprep.subr.mxu0 0.0
    %1679 = vmatpush1.msra.mxu0 0.0
    %1680 = vmatprep.subr.mxu0 0.0
    %1681 = vmatpush1.msra.mxu0 0.0
    %1682 = vmatprep.subr.mxu0 0.0
    %1683 = vmatpush1.msra.mxu0 0.0
    %1684 = vmatprep.subr.mxu0 0.0
    %1685 = vmatpush1.msra.mxu0 0.0
    %1686 = vmatprep.subr.mxu0 0.0
    %1687 = vmatpush1.msra.mxu0 0.0
    %1688 = vmatprep.subr.mxu0 0.0
    %1689 = vmatpush1.msra.mxu0 0.0
    %1690 = vmatprep.subr.mxu0 0.0
    %1691 = vmatpush1.msra.mxu0 0.0
    %1692 = vmatprep.subr.mxu0 0.0
    %1693 = vmatpush1.msra.mxu0 0.0
    %1694 = vmatprep.subr.mxu0 0.0
    %1695 = vmatpush1.msra.mxu0 0.0
    %1696 = vmatprep.subr.mxu0 0.0
    %1697 = vmatpush1.msra.mxu0 0.0
    %1698 = vmatprep.subr.mxu0 0.0
    %1699 = vmatpush1.msra.mxu0 0.0
    %1700 = vmatprep.subr.mxu0 0.0
    %1701 = vmatpush1.msra.mxu0 0.0
    %1702 = vmatprep.subr.mxu0 0.0
    %1703 = vmatpush1.msra.mxu0 0.0
    %1704 = vmatprep.subr.mxu0 0.0
    %1705 = vmatpush1.msra.mxu0 0.0
    %1706 = vmatprep.subr.mxu0 0.0
    %1707 = vmatpush1.msra.mxu0 0.0
    %1708 = vmatprep.subr.mxu0 0.0
    %1709 = vmatpush1.msra.mxu0 0.0
    %1710 = vmatprep.subr.mxu0 0.0
    %1711 = vmatpush1.msra.mxu0 0.0
    %1712 = vmatprep.subr.mxu0 0.0
    %1713 = vmatpush1.msra.mxu0 0.0
    %1714 = vmatprep.subr.mxu0 0.0
    %1715 = vmatpush1.msra.mxu0 0.0
    %1716 = vmatprep.subr.mxu0 0.0
    %1717 = vmatpush1.msra.mxu0 0.0
    %1718 = vmatprep.subr.mxu0 0.0
    %1719 = vmatpush1.msra.mxu0 0.0
    %1720 = vmatprep.subr.mxu0 0.0
    %1721 = vmatpush1.msra.mxu0 0.0
    %1722 = vmatprep.subr.mxu0 0.0
    %1723 = vmatpush1.msra.mxu0 0.0
    %1724 = vmatprep.subr.mxu0 0.0
    %1725 = vmatpush1.msra.mxu0 0.0
    %1726 = vmatprep.subr.mxu0 0.0
    %1727 = vmatpush1.msra.mxu0 0.0
    %1728 = vmatprep.subr.mxu0 0.0
    %1729 = vmatpush1.msra.mxu0 0.0
    %1730 = vmatprep.subr.mxu0 0.0
    %1731 = vmatpush1.msra.mxu0 0.0
    %1732 = vmatprep.subr.mxu0 0.0
    %1733 = vmatpush1.msra.mxu0 0.0
    %1734 = vmatprep.subr.mxu0 0.0
    %1735 = vmatpush1.msra.mxu0 0.0
    %1736 = vmatprep.subr.mxu0 0.0
    %1737 = vmatpush1.msra.mxu0 0.0
    %1738 = vmatprep.mubr.f32.mxu0 0.0
    %1739 = vmatmul.mubr.f32.gmra.mrb[0].mxu0 %v1672
    %v1740 = vpop.f32.mrb[0].mxu0
    %v1741 = vadd.f32 0.0, %v1740
    %v1742 = vpop.f32.mrb[0].mxu0
    %1743 = vdwg.mxu0
    %1745 = vrot.lane.b32.xlu0 %v1600, 95
    %v1746 = vpop.permute.xlu0 %1745
    %1748 = vxpose.xlu0.b32.start [1/16] %v1746, 128
    %1749 = vxpose.xlu0.b32.cont [2/16] 0.0, 128
    %1750 = vxpose.xlu0.b32.cont [3/16] 0.0, 128
    %1751 = vxpose.xlu0.b32.cont [4/16] 0.0, 128
    %1752 = vxpose.xlu0.b32.cont [5/16] 0.0, 128
    %1753 = vxpose.xlu0.b32.cont [6/16] 0.0, 128
    %1754 = vxpose.xlu0.b32.cont [7/16] 0.0, 128
    %1755 = vxpose.xlu0.b32.cont [8/16] 0.0, 128
    %1756 = vxpose.xlu0.b32.cont [9/16] 0.0, 128
    %1757 = vxpose.xlu0.b32.cont [10/16] 0.0, 128
    %1758 = vxpose.xlu0.b32.cont [11/16] 0.0, 128
    %1759 = vxpose.xlu0.b32.cont [12/16] 0.0, 128
    %1760 = vxpose.xlu0.b32.cont [13/16] 0.0, 128
    %1761 = vxpose.xlu0.b32.cont [14/16] 0.0, 128
    %1762 = vxpose.xlu0.b32.cont [15/16] 0.0, 128
    %1763 = vxpose.xlu0.b32.end [16/16] 0.0, 128
    %v1764 = vpop.trf.xlu0
    %v1765 = vpop.trf.xlu0
    %v1766 = vpop.trf.xlu0
    %v1767 = vpop.trf.xlu0
    %v1768 = vpop.trf.xlu0
    %v1769 = vpop.trf.xlu0
    %v1770 = vpop.trf.xlu0
    %v1771 = vpop.trf.xlu0
    %v1772 = vpop.trf.xlu0
    %v1773 = vpop.trf.xlu0
    %v1774 = vpop.trf.xlu0
    %v1775 = vpop.trf.xlu0
    %v1776 = vpop.trf.xlu0
    %v1777 = vpop.trf.xlu0
    %v1778 = vpop.trf.xlu0
    %v1779 = vpop.trf.xlu0
    %1781 = vset.pattern.permute.xlu0 34
    %1782 = vperm.xlu0 %1781, %v1741
    %v1783 = vpop.permute.xlu0 %1782
    %v1785 = vlaneseq
    %v1786 = vshrl.u32 %v1785, 7
    %v1787 = vsub.s32 0, %v1786
    %v1788 = vrot.slane %v1764, %v1787
    %v1789 = vadd.f32 %v1783, %v1788
    %vm1790 = vcmp.gt.f32.partialorder %v1789, 0.0
    %v1791 = vmul.f32 %v1789, 0.2
    %v1792 = vsel %vm1790, %v1789, %v1791
    %v1793 = vadd.f32 %v1792, %v80
    %v1794 = vsel %vm226, %v1793, -inf
    %v1795 = vrot.slane %v1794, 4
    %v1796 = vmax.f32 %v1794, %v1795
    %v1797 = vrot.slane %v1796, 2
    %v1798 = vmax.f32 %v1796, %v1797
    %v1799 = vrot.slane %v1798, 1
    %v1800 = vmax.f32 %v1798, %v1799
    %v1801 = vsub.f32 %v1793, %v1800
    %v1802 = vmul.f32 %v1801, 1.442695
    %v1803 = vpow.pop %v1802
    %v1804 = vsel %vm226, %v1803, 0.0
    %v1805 = vrot.slane %v1804, 4
    %v1806 = vadd.f32 %v1804, %v1805
    %v1807 = vrot.slane %v1806, 2
    %v1808 = vadd.f32 %v1806, %v1807
    %v1809 = vrot.slane %v1808, 1
    %v1810 = vadd.f32 %v1808, %v1809
    %v1811 = vrcp.pop %v1810
    %v1812 = vmul.f32 1.0, %v1811
    %v1813 = vmul.f32 %v1803, %v1812
    %1814 = vxpose.xlu0.b32.start [1/16] %v1813, 128
    %1815 = vxpose.xlu0.b32.cont [2/16] 0.0, 128
    %1816 = vxpose.xlu0.b32.cont [3/16] 0.0, 128
    %1817 = vxpose.xlu0.b32.cont [4/16] 0.0, 128
    %1818 = vxpose.xlu0.b32.cont [5/16] 0.0, 128
    %1819 = vxpose.xlu0.b32.cont [6/16] 0.0, 128
    %1820 = vxpose.xlu0.b32.cont [7/16] 0.0, 128
    %1821 = vxpose.xlu0.b32.cont [8/16] 0.0, 128
    %1822 = vxpose.xlu0.b32.cont [9/16] 0.0, 128
    %1823 = vxpose.xlu0.b32.cont [10/16] 0.0, 128
    %1824 = vxpose.xlu0.b32.cont [11/16] 0.0, 128
    %1825 = vxpose.xlu0.b32.cont [12/16] 0.0, 128
    %1826 = vxpose.xlu0.b32.cont [13/16] 0.0, 128
    %1827 = vxpose.xlu0.b32.cont [14/16] 0.0, 128
    %1828 = vxpose.xlu0.b32.cont [15/16] 0.0, 128
    %1829 = vxpose.xlu0.b32.end [16/16] 0.0, 128
    %v1830 = vpop.trf.xlu0
    %v1831 = vpop.trf.xlu0
    %v1832 = vpop.trf.xlu0
    %v1833 = vpop.trf.xlu0
    %v1834 = vpop.trf.xlu0
    %v1835 = vpop.trf.xlu0
    %v1836 = vpop.trf.xlu0
    %v1837 = vpop.trf.xlu0
    %v1838 = vpop.trf.xlu0
    %v1839 = vpop.trf.xlu0
    %v1840 = vpop.trf.xlu0
    %v1841 = vpop.trf.xlu0
    %v1842 = vpop.trf.xlu0
    %v1843 = vpop.trf.xlu0
    %v1844 = vpop.trf.xlu0
    %v1845 = vpop.trf.xlu0
    %v1847 = vsel %vm226, %v1830, 0
    %1849 = vmatprep.subr.mxu0 0.0
    %1850 = vmatpush1.msra.mxu0 %v1741
    %1851 = vmatprep.subr.mxu0 0.0
    %1852 = vmatpush1.msra.mxu0 0.0
    %1853 = vmatprep.subr.mxu0 0.0
    %1854 = vmatpush1.msra.mxu0 0.0
    %1855 = vmatprep.subr.mxu0 0.0
    %1856 = vmatpush1.msra.mxu0 0.0
    %1857 = vmatprep.subr.mxu0 0.0
    %1858 = vmatpush1.msra.mxu0 0.0
    %1859 = vmatprep.subr.mxu0 0.0
    %1860 = vmatpush1.msra.mxu0 0.0
    %1861 = vmatprep.subr.mxu0 0.0
    %1862 = vmatpush1.msra.mxu0 0.0
    %1863 = vmatprep.subr.mxu0 0.0
    %1864 = vmatpush1.msra.mxu0 0.0
    %1865 = vmatprep.subr.mxu0 0.0
    %1866 = vmatpush1.msra.mxu0 0.0
    %1867 = vmatprep.subr.mxu0 0.0
    %1868 = vmatpush1.msra.mxu0 0.0
    %1869 = vmatprep.subr.mxu0 0.0
    %1870 = vmatpush1.msra.mxu0 0.0
    %1871 = vmatprep.subr.mxu0 0.0
    %1872 = vmatpush1.msra.mxu0 0.0
    %1873 = vmatprep.subr.mxu0 0.0
    %1874 = vmatpush1.msra.mxu0 0.0
    %1875 = vmatprep.subr.mxu0 0.0
    %1876 = vmatpush1.msra.mxu0 0.0
    %1877 = vmatprep.subr.mxu0 0.0
    %1878 = vmatpush1.msra.mxu0 0.0
    %1879 = vmatprep.subr.mxu0 0.0
    %1880 = vmatpush1.msra.mxu0 0.0
    %1881 = vmatprep.subr.mxu0 0.0
    %1882 = vmatpush1.msra.mxu0 0.0
    %1883 = vmatprep.subr.mxu0 0.0
    %1884 = vmatpush1.msra.mxu0 0.0
    %1885 = vmatprep.subr.mxu0 0.0
    %1886 = vmatpush1.msra.mxu0 0.0
    %1887 = vmatprep.subr.mxu0 0.0
    %1888 = vmatpush1.msra.mxu0 0.0
    %1889 = vmatprep.subr.mxu0 0.0
    %1890 = vmatpush1.msra.mxu0 0.0
    %1891 = vmatprep.subr.mxu0 0.0
    %1892 = vmatpush1.msra.mxu0 0.0
    %1893 = vmatprep.subr.mxu0 0.0
    %1894 = vmatpush1.msra.mxu0 0.0
    %1895 = vmatprep.subr.mxu0 0.0
    %1896 = vmatpush1.msra.mxu0 0.0
    %1897 = vmatprep.subr.mxu0 0.0
    %1898 = vmatpush1.msra.mxu0 0.0
    %1899 = vmatprep.subr.mxu0 0.0
    %1900 = vmatpush1.msra.mxu0 0.0
    %1901 = vmatprep.subr.mxu0 0.0
    %1902 = vmatpush1.msra.mxu0 0.0
    %1903 = vmatprep.subr.mxu0 0.0
    %1904 = vmatpush1.msra.mxu0 0.0
    %1905 = vmatprep.subr.mxu0 0.0
    %1906 = vmatpush1.msra.mxu0 0.0
    %1907 = vmatprep.subr.mxu0 0.0
    %1908 = vmatpush1.msra.mxu0 0.0
    %1909 = vmatprep.subr.mxu0 0.0
    %1910 = vmatpush1.msra.mxu0 0.0
    %1911 = vmatprep.subr.mxu0 0.0
    %1912 = vmatpush1.msra.mxu0 0.0
    %1913 = vmatprep.mubr.f32.mxu0 0.0
    %1914 = vmatmul.mubr.f32.gmra.mrb[0].mxu0 %v1847
    %v1915 = vpop.f32.mrb[0].mxu0
    %v1916 = vadd.f32 0.0, %v1915
    %v1917 = vpop.f32.mrb[0].mxu0
    %1918 = vdwg.mxu0
    %vm1919 = vcmp.gt.f32.partialorder %v1916, 0.0
    %v1920 = vmul.f32 %v1916, 1.442695
    %v1921 = vpow.pop %v1920
    %v1922 = vsub.f32 %v1921, 1.0
    %v1923 = vsel %vm1919, %v1916, %v1922
    %v1924 = vadd.f32 %v1923, %v82
    %1926 = vrot.lane.b32.xlu0 %v1617, 96
    %v1927 = vpop.permute.xlu0 %1926
    %1929 = vxpose.xlu0.b32.start [1/16] %v1927, 128
    %1930 = vxpose.xlu0.b32.cont [2/16] 0.0, 128
    %1931 = vxpose.xlu0.b32.cont [3/16] 0.0, 128
    %1932 = vxpose.xlu0.b32.cont [4/16] 0.0, 128
    %1933 = vxpose.xlu0.b32.cont [5/16] 0.0, 128
    %1934 = vxpose.xlu0.b32.cont [6/16] 0.0, 128
    %1935 = vxpose.xlu0.b32.cont [7/16] 0.0, 128
    %1936 = vxpose.xlu0.b32.cont [8/16] 0.0, 128
    %1937 = vxpose.xlu0.b32.cont [9/16] 0.0, 128
    %1938 = vxpose.xlu0.b32.cont [10/16] 0.0, 128
    %1939 = vxpose.xlu0.b32.cont [11/16] 0.0, 128
    %1940 = vxpose.xlu0.b32.cont [12/16] 0.0, 128
    %1941 = vxpose.xlu0.b32.cont [13/16] 0.0, 128
    %1942 = vxpose.xlu0.b32.cont [14/16] 0.0, 128
    %1943 = vxpose.xlu0.b32.cont [15/16] 0.0, 128
    %1944 = vxpose.xlu0.b32.end [16/16] 0.0, 128
    %v1945 = vpop.trf.xlu0
    %v1946 = vpop.trf.xlu0
    %v1947 = vpop.trf.xlu0
    %v1948 = vpop.trf.xlu0
    %v1949 = vpop.trf.xlu0
    %v1950 = vpop.trf.xlu0
    %v1951 = vpop.trf.xlu0
    %v1952 = vpop.trf.xlu0
    %v1953 = vpop.trf.xlu0
    %v1954 = vpop.trf.xlu0
    %v1955 = vpop.trf.xlu0
    %v1956 = vpop.trf.xlu0
    %v1957 = vpop.trf.xlu0
    %v1958 = vpop.trf.xlu0
    %v1959 = vpop.trf.xlu0
    %v1960 = vpop.trf.xlu0
    %v1961 = vlaneseq
    %v1962 = vshrl.u32 %v1961, 7
    %v1963 = vsub.s32 0, %v1962
    %v1964 = vrot.slane %v1945, %v1963
    %v1965 = vadd.f32 %v1964, %v81
    %v1966 = vsel %vm226, %v1965, -inf
    %1967 = vmax.xlane.f32.xlu0 %v1966
    %v1968 = vpop.xlane.xlu0 %1967
    %v1969 = vsub.f32 %v1965, %v1968
    %v1970 = vmul.f32 %v1969, 1.442695
    %v1971 = vpow.pop %v1970
    %v1972 = vsel %vm226, %v1971, 0.0
    %1973 = vadd.xlane.f32.xlu0 %v1972
    %v1974 = vpop.xlane.xlu0 %1973
    %v1975 = vrcp.pop %v1974
    %v1976 = vmul.f32 1.0, %v1975
    %v1977 = vmul.f32 %v1971, %v1976
    %v1979 = vsel %vm226, %v1977, 0
    %1981 = vmatprep.subr.mxu0 0.0
    %1982 = vmatpush1.msra.mxu0 %v1605
    %1983 = vmatprep.subr.mxu0 0.0
    %1984 = vmatpush1.msra.mxu0 0.0
    %1985 = vmatprep.subr.mxu0 0.0
    %1986 = vmatpush1.msra.mxu0 0.0
    %1987 = vmatprep.subr.mxu0 0.0
    %1988 = vmatpush1.msra.mxu0 0.0
    %1989 = vmatprep.subr.mxu0 0.0
    %1990 = vmatpush1.msra.mxu0 0.0
    %1991 = vmatprep.subr.mxu0 0.0
    %1992 = vmatpush1.msra.mxu0 0.0
    %1993 = vmatprep.subr.mxu0 0.0
    %1994 = vmatpush1.msra.mxu0 0.0
    %1995 = vmatprep.subr.mxu0 0.0
    %1996 = vmatpush1.msra.mxu0 0.0
    %1997 = vmatprep.subr.mxu0 0.0
    %1998 = vmatpush1.msra.mxu0 0.0
    %1999 = vmatprep.subr.mxu0 0.0
    %2000 = vmatpush1.msra.mxu0 0.0
    %2001 = vmatprep.subr.mxu0 0.0
    %2002 = vmatpush1.msra.mxu0 0.0
    %2003 = vmatprep.subr.mxu0 0.0
    %2004 = vmatpush1.msra.mxu0 0.0
    %2005 = vmatprep.subr.mxu0 0.0
    %2006 = vmatpush1.msra.mxu0 0.0
    %2007 = vmatprep.subr.mxu0 0.0
    %2008 = vmatpush1.msra.mxu0 0.0
    %2009 = vmatprep.subr.mxu0 0.0
    %2010 = vmatpush1.msra.mxu0 0.0
    %2011 = vmatprep.subr.mxu0 0.0
    %2012 = vmatpush1.msra.mxu0 0.0
    %2013 = vmatprep.subr.mxu0 0.0
    %2014 = vmatpush1.msra.mxu0 0.0
    %2015 = vmatprep.subr.mxu0 0.0
    %2016 = vmatpush1.msra.mxu0 0.0
    %2017 = vmatprep.subr.mxu0 0.0
    %2018 = vmatpush1.msra.mxu0 0.0
    %2019 = vmatprep.subr.mxu0 0.0
    %2020 = vmatpush1.msra.mxu0 0.0
    %2021 = vmatprep.subr.mxu0 0.0
    %2022 = vmatpush1.msra.mxu0 0.0
    %2023 = vmatprep.subr.mxu0 0.0
    %2024 = vmatpush1.msra.mxu0 0.0
    %2025 = vmatprep.subr.mxu0 0.0
    %2026 = vmatpush1.msra.mxu0 0.0
    %2027 = vmatprep.subr.mxu0 0.0
    %2028 = vmatpush1.msra.mxu0 0.0
    %2029 = vmatprep.subr.mxu0 0.0
    %2030 = vmatpush1.msra.mxu0 0.0
    %2031 = vmatprep.subr.mxu0 0.0
    %2032 = vmatpush1.msra.mxu0 0.0
    %2033 = vmatprep.subr.mxu0 0.0
    %2034 = vmatpush1.msra.mxu0 0.0
    %2035 = vmatprep.subr.mxu0 0.0
    %2036 = vmatpush1.msra.mxu0 0.0
    %2037 = vmatprep.subr.mxu0 0.0
    %2038 = vmatpush1.msra.mxu0 0.0
    %2039 = vmatprep.subr.mxu0 0.0
    %2040 = vmatpush1.msra.mxu0 0.0
    %2041 = vmatprep.subr.mxu0 0.0
    %2042 = vmatpush1.msra.mxu0 0.0
    %2043 = vmatprep.subr.mxu0 0.0
    %2044 = vmatpush1.msra.mxu0 0.0
    %2045 = vmatprep.mubr.f32.mxu0 0.0
    %2046 = vmatmul.mubr.f32.gmra.mrb[0].mxu0 %v1979
    %v2047 = vpop.f32.mrb[0].mxu0
    %v2048 = vadd.f32 0.0, %v2047
    %v2049 = vpop.f32.mrb[0].mxu0
    %2050 = vdwg.mxu0
    %2052 = vrot.lane.b32.xlu0 %v1605, 95
    %v2053 = vpop.permute.xlu0 %2052
    %2055 = vxpose.xlu0.b32.start [1/16] %v2053, 128
    %2056 = vxpose.xlu0.b32.cont [2/16] 0.0, 128
    %2057 = vxpose.xlu0.b32.cont [3/16] 0.0, 128
    %2058 = vxpose.xlu0.b32.cont [4/16] 0.0, 128
    %2059 = vxpose.xlu0.b32.cont [5/16] 0.0, 128
    %2060 = vxpose.xlu0.b32.cont [6/16] 0.0, 128
    %2061 = vxpose.xlu0.b32.cont [7/16] 0.0, 128
    %2062 = vxpose.xlu0.b32.cont [8/16] 0.0, 128
    %2063 = vxpose.xlu0.b32.cont [9/16] 0.0, 128
    %2064 = vxpose.xlu0.b32.cont [10/16] 0.0, 128
    %2065 = vxpose.xlu0.b32.cont [11/16] 0.0, 128
    %2066 = vxpose.xlu0.b32.cont [12/16] 0.0, 128
    %2067 = vxpose.xlu0.b32.cont [13/16] 0.0, 128
    %2068 = vxpose.xlu0.b32.cont [14/16] 0.0, 128
    %2069 = vxpose.xlu0.b32.cont [15/16] 0.0, 128
    %2070 = vxpose.xlu0.b32.end [16/16] 0.0, 128
    %v2071 = vpop.trf.xlu0
    %v2072 = vpop.trf.xlu0
    %v2073 = vpop.trf.xlu0
    %v2074 = vpop.trf.xlu0
    %v2075 = vpop.trf.xlu0
    %v2076 = vpop.trf.xlu0
    %v2077 = vpop.trf.xlu0
    %v2078 = vpop.trf.xlu0
    %v2079 = vpop.trf.xlu0
    %v2080 = vpop.trf.xlu0
    %v2081 = vpop.trf.xlu0
    %v2082 = vpop.trf.xlu0
    %v2083 = vpop.trf.xlu0
    %v2084 = vpop.trf.xlu0
    %v2085 = vpop.trf.xlu0
    %v2086 = vpop.trf.xlu0
    %2088 = vset.pattern.permute.xlu0 34
    %2089 = vperm.xlu0 %2088, %v2048
    %v2090 = vpop.permute.xlu0 %2089
    %v2092 = vlaneseq
    %v2093 = vshrl.u32 %v2092, 7
    %v2094 = vsub.s32 0, %v2093
    %v2095 = vrot.slane %v2071, %v2094
    %v2096 = vadd.f32 %v2090, %v2095
    %vm2097 = vcmp.gt.f32.partialorder %v2096, 0.0
    %v2098 = vmul.f32 %v2096, 0.2
    %v2099 = vsel %vm2097, %v2096, %v2098
    %v2100 = vadd.f32 %v2099, %v81
    %v2101 = vsel %vm226, %v2100, -inf
    %v2102 = vrot.slane %v2101, 4
    %v2103 = vmax.f32 %v2101, %v2102
    %v2104 = vrot.slane %v2103, 2
    %v2105 = vmax.f32 %v2103, %v2104
    %v2106 = vrot.slane %v2105, 1
    %v2107 = vmax.f32 %v2105, %v2106
    %v2108 = vsub.f32 %v2100, %v2107
    %v2109 = vmul.f32 %v2108, 1.442695
    %v2110 = vpow.pop %v2109
    %v2111 = vsel %vm226, %v2110, 0.0
    %v2112 = vrot.slane %v2111, 4
    %v2113 = vadd.f32 %v2111, %v2112
    %v2114 = vrot.slane %v2113, 2
    %v2115 = vadd.f32 %v2113, %v2114
    %v2116 = vrot.slane %v2115, 1
    %v2117 = vadd.f32 %v2115, %v2116
    %v2118 = vrcp.pop %v2117
    %v2119 = vmul.f32 1.0, %v2118
    %v2120 = vmul.f32 %v2110, %v2119
    %2121 = vxpose.xlu0.b32.start [1/16] %v2120, 128
    %2122 = vxpose.xlu0.b32.cont [2/16] 0.0, 128
    %2123 = vxpose.xlu0.b32.cont [3/16] 0.0, 128
    %2124 = vxpose.xlu0.b32.cont [4/16] 0.0, 128
    %2125 = vxpose.xlu0.b32.cont [5/16] 0.0, 128
    %2126 = vxpose.xlu0.b32.cont [6/16] 0.0, 128
    %2127 = vxpose.xlu0.b32.cont [7/16] 0.0, 128
    %2128 = vxpose.xlu0.b32.cont [8/16] 0.0, 128
    %2129 = vxpose.xlu0.b32.cont [9/16] 0.0, 128
    %2130 = vxpose.xlu0.b32.cont [10/16] 0.0, 128
    %2131 = vxpose.xlu0.b32.cont [11/16] 0.0, 128
    %2132 = vxpose.xlu0.b32.cont [12/16] 0.0, 128
    %2133 = vxpose.xlu0.b32.cont [13/16] 0.0, 128
    %2134 = vxpose.xlu0.b32.cont [14/16] 0.0, 128
    %2135 = vxpose.xlu0.b32.cont [15/16] 0.0, 128
    %2136 = vxpose.xlu0.b32.end [16/16] 0.0, 128
    %v2137 = vpop.trf.xlu0
    %v2138 = vpop.trf.xlu0
    %v2139 = vpop.trf.xlu0
    %v2140 = vpop.trf.xlu0
    %v2141 = vpop.trf.xlu0
    %v2142 = vpop.trf.xlu0
    %v2143 = vpop.trf.xlu0
    %v2144 = vpop.trf.xlu0
    %v2145 = vpop.trf.xlu0
    %v2146 = vpop.trf.xlu0
    %v2147 = vpop.trf.xlu0
    %v2148 = vpop.trf.xlu0
    %v2149 = vpop.trf.xlu0
    %v2150 = vpop.trf.xlu0
    %v2151 = vpop.trf.xlu0
    %v2152 = vpop.trf.xlu0
    %v2154 = vsel %vm226, %v2137, 0
    %2156 = vmatprep.subr.mxu0 0.0
    %2157 = vmatpush1.msra.mxu0 %v2048
    %2158 = vmatprep.subr.mxu0 0.0
    %2159 = vmatpush1.msra.mxu0 0.0
    %2160 = vmatprep.subr.mxu0 0.0
    %2161 = vmatpush1.msra.mxu0 0.0
    %2162 = vmatprep.subr.mxu0 0.0
    %2163 = vmatpush1.msra.mxu0 0.0
    %2164 = vmatprep.subr.mxu0 0.0
    %2165 = vmatpush1.msra.mxu0 0.0
    %2166 = vmatprep.subr.mxu0 0.0
    %2167 = vmatpush1.msra.mxu0 0.0
    %2168 = vmatprep.subr.mxu0 0.0
    %2169 = vmatpush1.msra.mxu0 0.0
    %2170 = vmatprep.subr.mxu0 0.0
    %2171 = vmatpush1.msra.mxu0 0.0
    %2172 = vmatprep.subr.mxu0 0.0
    %2173 = vmatpush1.msra.mxu0 0.0
    %2174 = vmatprep.subr.mxu0 0.0
    %2175 = vmatpush1.msra.mxu0 0.0
    %2176 = vmatprep.subr.mxu0 0.0
    %2177 = vmatpush1.msra.mxu0 0.0
    %2178 = vmatprep.subr.mxu0 0.0
    %2179 = vmatpush1.msra.mxu0 0.0
    %2180 = vmatprep.subr.mxu0 0.0
    %2181 = vmatpush1.msra.mxu0 0.0
    %2182 = vmatprep.subr.mxu0 0.0
    %2183 = vmatpush1.msra.mxu0 0.0
    %2184 = vmatprep.subr.mxu0 0.0
    %2185 = vmatpush1.msra.mxu0 0.0
    %2186 = vmatprep.subr.mxu0 0.0
    %2187 = vmatpush1.msra.mxu0 0.0
    %2188 = vmatprep.subr.mxu0 0.0
    %2189 = vmatpush1.msra.mxu0 0.0
    %2190 = vmatprep.subr.mxu0 0.0
    %2191 = vmatpush1.msra.mxu0 0.0
    %2192 = vmatprep.subr.mxu0 0.0
    %2193 = vmatpush1.msra.mxu0 0.0
    %2194 = vmatprep.subr.mxu0 0.0
    %2195 = vmatpush1.msra.mxu0 0.0
    %2196 = vmatprep.subr.mxu0 0.0
    %2197 = vmatpush1.msra.mxu0 0.0
    %2198 = vmatprep.subr.mxu0 0.0
    %2199 = vmatpush1.msra.mxu0 0.0
    %2200 = vmatprep.subr.mxu0 0.0
    %2201 = vmatpush1.msra.mxu0 0.0
    %2202 = vmatprep.subr.mxu0 0.0
    %2203 = vmatpush1.msra.mxu0 0.0
    %2204 = vmatprep.subr.mxu0 0.0
    %2205 = vmatpush1.msra.mxu0 0.0
    %2206 = vmatprep.subr.mxu0 0.0
    %2207 = vmatpush1.msra.mxu0 0.0
    %2208 = vmatprep.subr.mxu0 0.0
    %2209 = vmatpush1.msra.mxu0 0.0
    %2210 = vmatprep.subr.mxu0 0.0
    %2211 = vmatpush1.msra.mxu0 0.0
    %2212 = vmatprep.subr.mxu0 0.0
    %2213 = vmatpush1.msra.mxu0 0.0
    %2214 = vmatprep.subr.mxu0 0.0
    %2215 = vmatpush1.msra.mxu0 0.0
    %2216 = vmatprep.subr.mxu0 0.0
    %2217 = vmatpush1.msra.mxu0 0.0
    %2218 = vmatprep.subr.mxu0 0.0
    %2219 = vmatpush1.msra.mxu0 0.0
    %2220 = vmatprep.mubr.f32.mxu0 0.0
    %2221 = vmatmul.mubr.f32.gmra.mrb[0].mxu0 %v2154
    %v2222 = vpop.f32.mrb[0].mxu0
    %v2223 = vadd.f32 0.0, %v2222
    %v2224 = vpop.f32.mrb[0].mxu0
    %2225 = vdwg.mxu0
    %vm2226 = vcmp.gt.f32.partialorder %v2223, 0.0
    %v2227 = vmul.f32 %v2223, 1.442695
    %v2228 = vpow.pop %v2227
    %v2229 = vsub.f32 %v2228, 1.0
    %v2230 = vsel %vm2226, %v2223, %v2229
    %v2231 = vadd.f32 %v2230, %v83
    %2232 = vst [vmem:[#allocation10] sm:$0xff] %v1924
    %2233 = vst [vmem:[#allocation10 + $0x8] sm:$0xff] %v2231
    // Predicated region
    $region34: #{tpu_custom_call.1} parent=1 // pred_check
      _
    $region35: #{tpu_custom_call.1} parent=1 // pred_check_branch
      %2235 = sbr.rel (0) target = $region37
    $region36: #{tpu_custom_call.1} parent=1 // pred_region
      %s2237 = ssub.s32 256, 256
      %2238 = vsyncadd [#allocation4], %s2237
      %s2239 = sshll.u32 [#allocation10], 4
      %s2240 = int_to_ptr.vmem [resolvable:$true] %s2239
      %2245 = dma.vmem_to_hbm [thread:$0]  %s2240, 256, %s4, [#allocation4], 128, 128, 8
    $region37: #{tpu_custom_call.1} parent=1 // pred_fallthru
      _
    // Predicated region
    $region38: #{tpu_custom_call.1} parent=1 // pred_check
      _
    $region39: #{tpu_custom_call.1} parent=1 // pred_check_branch
      %2247 = sbr.rel (0) target = $region41
    $region40: #{tpu_custom_call.1} parent=1 // pred_region
      %2248 = dma.done [#allocation4], 256
    $region41: #{tpu_custom_call.1} parent=1 // pred_fallthru
      _
    %2249 = vsyncpa [#allocation3], 1
    %2250 = vsyncpa [#allocation7], 1
    %2251 = vsyncpa [#allocation4], 1
    %2252 = vsyncpa [#allocation5], 1

// kernel: tpu_custom_call.1
$region0: #{tpu_custom_call.1}
  #allocation0 [shape = 'u32[]', space=smem, size = 0x4, offset = 0x4, fixed_abs, tag = 'smem constant byte address 0x4 - core index']
  #allocation1 [shape = 'u32[144,128]{1,0:T(1,128)}', space=vmem, size = 0x12000, scoped, tag = 'internal scratch']
  %s0 = inlined_call_operand.hbm [shape: f32[16,128], index: 0, kind: input, shape index: {}]
  %s1 = inlined_call_operand.hbm [shape: s8[2,8,8], index: 1, kind: input, shape index: {}]
  %s2 = inlined_call_operand.hbm [shape: f32[3,128,128], index: 2, kind: input, shape index: {}]
  %s3 = inlined_call_operand.vmem [shape: f32[3], index: 3, kind: input, shape index: {}]
  %s4 = inlined_call_operand.hbm [shape: f32[16,128], index: 4, kind: output, shape index: {}]
  %s5 = sld [smem:[#allocation0]]
  $region42: #{tpu_custom_call.1} parent=0
    _
  %s7 = ssub.s32 1, %s5
  %s8 = scalar_select 0, %s7, %s5
  $region1: #{tpu_custom_call.1} parent=0
    #allocation2 [shape = 'u8[8192]{0}', space=vmem, size = 0x2000, scoped, tag = 'input window, operand 0, single buffered']
    #allocation3 [shape = 's32[1]{0}', space=sflag, size = 0x4, scoped, tag = 'scoped memory for tpu_custom_call.1']
    #allocation4 [shape = 's32[1]{0}', space=sflag, size = 0x4, scoped, tag = 'scoped memory for tpu_custom_call.1']
    #allocation5 [shape = 's32[1]{0}', space=sflag, size = 0x4, scoped, tag = 'scoped memory for tpu_custom_call.1']
    #allocation6 [shape = 'u8[2048]{0}', space=vmem, size = 0x800, scoped, tag = 'input window, operand 1, single buffered']
    #allocation7 [shape = 's32[1]{0}', space=sflag, size = 0x4, scoped, tag = 'scoped memory for tpu_custom_call.1']
    #allocation8 [shape = 'u8[196608]{0}', space=vmem, size = 0x30000, scoped, tag = 'input window, operand 2, single buffered']
    #allocation9 [shape = 'u8[512]{0}', space=smem, size = 0x200, scoped, tag = 'input window, operand 3, single buffered']
    #allocation10 [shape = 'u8[8192]{0}', space=vmem, size = 0x2000, scoped, tag = 'output window, operand 0, single buffered']
    %9 = vsyncpa [#allocation3], 0
    %10 = vsyncpa [#allocation7], 0
    %11 = vsyncpa [#allocation5], 0
    %12 = vsyncpa [#allocation4], 0
    // Predicated region
    $region2: #{tpu_custom_call.1} parent=1 // pred_check
      _
    $region3: #{tpu_custom_call.1} parent=1 // pred_check_branch
      %14 = sbr.rel (0) target = $region5
    $region4: #{tpu_custom_call.1} parent=1 // pred_region
      %s16 = ssub.s32 256, 256
      %17 = vsyncadd [#allocation3], %s16
      %s18 = sshll.u32 [#allocation2], 4
      %s19 = int_to_ptr.vmem [resolvable:$true] %s18
      %24 = dma.hbm_to_vmem [thread:$0]  %s0, 256, %s19, [#allocation3], 128, 128, 8
    $region5: #{tpu_custom_call.1} parent=1 // pred_fallthru
      _
    // Predicated region
    $region6: #{tpu_custom_call.1} parent=1 // pred_check
      _
    $region7: #{tpu_custom_call.1} parent=1 // pred_check_branch
      %26 = sbr.rel (0) target = $region9
    $region8: #{tpu_custom_call.1} parent=1 // pred_region
      %s28 = ssub.s32 64, 64
      %29 = vsyncadd [#allocation7], %s28
      %s30 = sshll.u32 [#allocation6], 4
      %s31 = int_to_ptr.vmem [resolvable:$true] %s30
      %36 = dma.hbm_to_vmem [thread:$0]  %s1, 64, %s31, [#allocation7], 32, 32, 2
    $region9: #{tpu_custom_call.1} parent=1 // pred_fallthru
      _
    // Predicated region
    $region10: #{tpu_custom_call.1} parent=1 // pred_check
      _
    $region11: #{tpu_custom_call.1} parent=1 // pred_check_branch
      %38 = sbr.rel (0) target = $region13
    $region12: #{tpu_custom_call.1} parent=1 // pred_region
      %s40 = ssub.s32 6144, 6144
      %41 = vsyncadd [#allocation7], %s40
      %s42 = sshll.u32 [#allocation8], 4
      %s43 = int_to_ptr.vmem [resolvable:$true] %s42
      %48 = dma.hbm_to_vmem [thread:$0]  %s2, 6144, %s43, [#allocation7], 128, 128, 8
    $region13: #{tpu_custom_call.1} parent=1 // pred_fallthru
      _
    // Predicated region
    $region14: #{tpu_custom_call.1} parent=1 // pred_check
      _
    $region15: #{tpu_custom_call.1} parent=1 // pred_check_branch
      %50 = sbr.rel (0) target = $region17
    $region16: #{tpu_custom_call.1} parent=1 // pred_region
      %s52 = ssub.s32 16, 16
      %53 = vsyncadd [#allocation5], %s52
      %s55 = sshll.u32 %s3, 4
      %s56 = int_to_ptr.vmem [resolvable:$true] %s55
      %58 = dma.vmem_to_smem %s56, 16, [#allocation9], [#allocation5]
    $region17: #{tpu_custom_call.1} parent=1 // pred_fallthru
      _
    // Predicated region
    $region18: #{tpu_custom_call.1} parent=1 // pred_check
      _
    $region19: #{tpu_custom_call.1} parent=1 // pred_check_branch
      %60 = sbr.rel (0) target = $region21
    $region20: #{tpu_custom_call.1} parent=1 // pred_region
      %61 = dma.done [#allocation3], 256
    $region21: #{tpu_custom_call.1} parent=1 // pred_fallthru
      _
    // Predicated region
    $region22: #{tpu_custom_call.1} parent=1 // pred_check
      _
    $region23: #{tpu_custom_call.1} parent=1 // pred_check_branch
      %63 = sbr.rel (0) target = $region25
    $region24: #{tpu_custom_call.1} parent=1 // pred_region
      %64 = dma.done [#allocation7], 64
    $region25: #{tpu_custom_call.1} parent=1 // pred_fallthru
      _
    // Predicated region
    $region26: #{tpu_custom_call.1} parent=1 // pred_check
      _
    $region27: #{tpu_custom_call.1} parent=1 // pred_check_branch
      %66 = sbr.rel (0) target = $region29
    $region28: #{tpu_custom_call.1} parent=1 // pred_region
      %67 = dma.done [#allocation7], 6144
    $region29: #{tpu_custom_call.1} parent=1 // pred_fallthru
      _
    // Predicated region
    $region30: #{tpu_custom_call.1} parent=1 // pred_check
      _
    $region31: #{tpu_custom_call.1} parent=1 // pred_check_branch
      %69 = sbr.rel (0) target = $region33
    $region32: #{tpu_custom_call.1} parent=1 // pred_region
      %70 = dma.done [#allocation5], 16
    $region33: #{tpu_custom_call.1} parent=1 // pred_fallthru
      _
    %71 = sfence
    %v72 = vld [vmem:[#allocation6] sm:$0x3]
    %v73 = vld [vmem:[#allocation6 + $0x2] sm:$0x3]
    %v74 = vunpack.c.0.s8 %v72
    %v75 = vunpack.c.0.s8 %v73
    %v76 = vcvt.s32.f32 %v74
    %v77 = vcvt.s32.f32 %v75
    %vm78 = vcmp.gt.f32.partialorder %v76, 0.0
    %vm79 = vcmp.gt.f32.partialorder %v77, 0.0
    %v80 = vsel %vm78, 0.0, -9e+15
    %v81 = vsel %vm79, 0.0, -9e+15
    %v82 = vld [vmem:[#allocation2] sm:$0xff]
    %v83 = vld [vmem:[#allocation2 + $0x8] sm:$0xff]
    %v84 = vld [vmem:[#allocation8] sm:$0xff]
    %v85 = vld [vmem:[#allocation8 + $0x8] sm:$0xff]
    %v86 = vld [vmem:[#allocation8 + $0x10] sm:$0xff]
    %v87 = vld [vmem:[#allocation8 + $0x18] sm:$0xff]
    %v88 = vld [vmem:[#allocation8 + $0x20] sm:$0xff]
    %v89 = vld [vmem:[#allocation8 + $0x28] sm:$0xff]
    %v90 = vld [vmem:[#allocation8 + $0x30] sm:$0xff]
    %v91 = vld [vmem:[#allocation8 + $0x38] sm:$0xff]
    %v92 = vld [vmem:[#allocation8 + $0x40] sm:$0xff]
    %v93 = vld [vmem:[#allocation8 + $0x48] sm:$0xff]
    %v94 = vld [vmem:[#allocation8 + $0x50] sm:$0xff]
    %v95 = vld [vmem:[#allocation8 + $0x58] sm:$0xff]
    %v96 = vld [vmem:[#allocation8 + $0x60] sm:$0xff]
    %v97 = vld [vmem:[#allocation8 + $0x68] sm:$0xff]
    %v98 = vld [vmem:[#allocation8 + $0x70] sm:$0xff]
    %v99 = vld [vmem:[#allocation8 + $0x78] sm:$0xff]
    %100 = vmatprep.subr.mxu0 0.0
    %101 = vmatpush1.msra.mxu0 %v84
    %102 = vmatprep.subr.mxu0 0.0
    %103 = vmatpush1.msra.mxu0 %v85
    %104 = vmatprep.subr.mxu0 0.0
    %105 = vmatpush1.msra.mxu0 %v86
    %106 = vmatprep.subr.mxu0 0.0
    %107 = vmatpush1.msra.mxu0 %v87
    %108 = vmatprep.subr.mxu0 0.0
    %109 = vmatpush1.msra.mxu0 %v88
    %110 = vmatprep.subr.mxu0 0.0
    %111 = vmatpush1.msra.mxu0 %v89
    %112 = vmatprep.subr.mxu0 0.0
    %113 = vmatpush1.msra.mxu0 %v90
    %114 = vmatprep.subr.mxu0 0.0
    %115 = vmatpush1.msra.mxu0 %v91
    %116 = vmatprep.subr.mxu0 0.0
    %117 = vmatpush1.msra.mxu0 %v92
    %118 = vmatprep.subr.mxu0 0.0
    %119 = vmatpush1.msra.mxu0 %v93
    %120 = vmatprep.subr.mxu0 0.0
    %121 = vmatpush1.msra.mxu0 %v94
    %122 = vmatprep.subr.mxu0 0.0
    %123 = vmatpush1.msra.mxu0 %v95
    %124 = vmatprep.subr.mxu0 0.0
    %125 = vmatpush1.msra.mxu0 %v96
    %126 = vmatprep.subr.mxu0 0.0
    %127 = vmatpush1.msra.mxu0 %v97
    %128 = vmatprep.subr.mxu0 0.0
    %129 = vmatpush1.msra.mxu0 %v98
    %130 = vmatprep.subr.mxu0 0.0
    %131 = vmatpush1.msra.mxu0 %v99
    %132 = vmatprep.subr.mxu0 0.0
    %133 = vmatpush1.msra.mxu0 0.0
    %134 = vmatprep.subr.mxu0 0.0
    %135 = vmatpush1.msra.mxu0 0.0
    %136 = vmatprep.subr.mxu0 0.0
    %137 = vmatpush1.msra.mxu0 0.0
    %138 = vmatprep.subr.mxu0 0.0
    %139 = vmatpush1.msra.mxu0 0.0
    %140 = vmatprep.subr.mxu0 0.0
    %141 = vmatpush1.msra.mxu0 0.0
    %142 = vmatprep.subr.mxu0 0.0
    %143 = vmatpush1.msra.mxu0 0.0
    %144 = vmatprep.subr.mxu0 0.0
    %145 = vmatpush1.msra.mxu0 0.0
    %146 = vmatprep.subr.mxu0 0.0
    %147 = vmatpush1.msra.mxu0 0.0
    %148 = vmatprep.subr.mxu0 0.0
    %149 = vmatpush1.msra.mxu0 0.0
    %150 = vmatprep.subr.mxu0 0.0
    %151 = vmatpush1.msra.mxu0 0.0
    %152 = vmatprep.subr.mxu0 0.0
    %153 = vmatpush1.msra.mxu0 0.0
    %154 = vmatprep.subr.mxu0 0.0
    %155 = vmatpush1.msra.mxu0 0.0
    %156 = vmatprep.subr.mxu0 0.0
    %157 = vmatpush1.msra.mxu0 0.0
    %158 = vmatprep.subr.mxu0 0.0
    %159 = vmatpush1.msra.mxu0 0.0
    %160 = vmatprep.subr.mxu0 0.0
    %161 = vmatpush1.msra.mxu0 0.0
    %162 = vmatprep.subr.mxu0 0.0
    %163 = vmatpush1.msra.mxu0 0.0
    %164 = vmatprep.mubr.f32.mxu0 0.0
    %165 = vmatmul.mubr.f32.gmra.mrb[0].mxu0 %v82
    %v166 = vpop.f32.mrb[0].mxu0
    %v167 = vadd.f32 0.0, %v166
    %v168 = vpop.f32.mrb[0].mxu0
    %169 = vmatprep.mubr.f32.mxu0 0.0
    %170 = vmatmul.mubr.f32.gmra.mrb[0].mxu0 %v83
    %v171 = vpop.f32.mrb[0].mxu0
    %v172 = vadd.f32 0.0, %v171
    %v173 = vpop.f32.mrb[0].mxu0
    %174 = vdwg.mxu0
    %s175 = sld [smem:[#allocation9]]
    %v176 = vstv %s175
    %v177 = vadd.f32 %v176, %v167
    %v178 = vadd.f32 %v176, %v172
    %vm179 = vcmp.gt.f32.partialorder %v177, 0.0
    %vm180 = vcmp.gt.f32.partialorder %v178, 0.0
    %v181 = vmul.f32 %v177, 0.2
    %v182 = vmul.f32 %v178, 0.2
    %v183 = vsel %vm179, %v177, %v181
    %v184 = vsel %vm180, %v178, %v182
    %186 = vrot.lane.b32.xlu0 %v183, 96
    %v187 = vpop.permute.xlu0 %186
    %189 = vxpose.xlu0.b32.start [1/16] %v187, 128
    %190 = vxpose.xlu0.b32.cont [2/16] 0.0, 128
    %191 = vxpose.xlu0.b32.cont [3/16] 0.0, 128
    %192 = vxpose.xlu0.b32.cont [4/16] 0.0, 128
    %193 = vxpose.xlu0.b32.cont [5/16] 0.0, 128
    %194 = vxpose.xlu0.b32.cont [6/16] 0.0, 128
    %195 = vxpose.xlu0.b32.cont [7/16] 0.0, 128
    %196 = vxpose.xlu0.b32.cont [8/16] 0.0, 128
    %197 = vxpose.xlu0.b32.cont [9/16] 0.0, 128
    %198 = vxpose.xlu0.b32.cont [10/16] 0.0, 128
    %199 = vxpose.xlu0.b32.cont [11/16] 0.0, 128
    %200 = vxpose.xlu0.b32.cont [12/16] 0.0, 128
    %201 = vxpose.xlu0.b32.cont [13/16] 0.0, 128
    %202 = vxpose.xlu0.b32.cont [14/16] 0.0, 128
    %203 = vxpose.xlu0.b32.cont [15/16] 0.0, 128
    %204 = vxpose.xlu0.b32.end [16/16] 0.0, 128
    %v205 = vpop.trf.xlu0
    %v206 = vpop.trf.xlu0
    %v207 = vpop.trf.xlu0
    %v208 = vpop.trf.xlu0
    %v209 = vpop.trf.xlu0
    %v210 = vpop.trf.xlu0
    %v211 = vpop.trf.xlu0
    %v212 = vpop.trf.xlu0
    %v213 = vpop.trf.xlu0
    %v214 = vpop.trf.xlu0
    %v215 = vpop.trf.xlu0
    %v216 = vpop.trf.xlu0
    %v217 = vpop.trf.xlu0
    %v218 = vpop.trf.xlu0
    %v219 = vpop.trf.xlu0
    %v220 = vpop.trf.xlu0
    %v221 = vlaneseq
    %v222 = vshrl.u32 %v221, 7
    %v223 = vsub.s32 0, %v222
    %v224 = vrot.slane %v205, %v223
    %v225 = vadd.f32 %v224, %v80
    %vm226 = vcmask 64512
    %v227 = vsel %vm226, %v225, -inf
    %228 = vmax.xlane.f32.xlu0 %v227
    %v229 = vpop.xlane.xlu0 %228
    %v230 = vsub.f32 %v225, %v229
    %v231 = vmul.f32 %v230, 1.442695
    %v232 = vpow.pop %v231
    %v233 = vsel %vm226, %v232, 0.0
    %234 = vadd.xlane.f32.xlu0 %v233
    %v235 = vpop.xlane.xlu0 %234
    %v236 = vrcp.pop %v235
    %v237 = vmul.f32 1.0, %v236
    %v238 = vmul.f32 %v232, %v237
    %v240 = vsel %vm226, %v238, 0
    %242 = vmatprep.subr.mxu0 0.0
    %243 = vmatpush1.msra.mxu0 %v167
    %244 = vmatprep.subr.mxu0 0.0
    %245 = vmatpush1.msra.mxu0 0.0
    %246 = vmatprep.subr.mxu0 0.0
    %247 = vmatpush1.msra.mxu0 0.0
    %248 = vmatprep.subr.mxu0 0.0
    %249 = vmatpush1.msra.mxu0 0.0
    %250 = vmatprep.subr.mxu0 0.0
    %251 = vmatpush1.msra.mxu0 0.0
    %252 = vmatprep.subr.mxu0 0.0
    %253 = vmatpush1.msra.mxu0 0.0
    %254 = vmatprep.subr.mxu0 0.0
    %255 = vmatpush1.msra.mxu0 0.0
    %256 = vmatprep.subr.mxu0 0.0
    %257 = vmatpush1.msra.mxu0 0.0
    %258 = vmatprep.subr.mxu0 0.0
    %259 = vmatpush1.msra.mxu0 0.0
    %260 = vmatprep.subr.mxu0 0.0
    %261 = vmatpush1.msra.mxu0 0.0
    %262 = vmatprep.subr.mxu0 0.0
    %263 = vmatpush1.msra.mxu0 0.0
    %264 = vmatprep.subr.mxu0 0.0
    %265 = vmatpush1.msra.mxu0 0.0
    %266 = vmatprep.subr.mxu0 0.0
    %267 = vmatpush1.msra.mxu0 0.0
    %268 = vmatprep.subr.mxu0 0.0
    %269 = vmatpush1.msra.mxu0 0.0
    %270 = vmatprep.subr.mxu0 0.0
    %271 = vmatpush1.msra.mxu0 0.0
    %272 = vmatprep.subr.mxu0 0.0
    %273 = vmatpush1.msra.mxu0 0.0
    %274 = vmatprep.subr.mxu0 0.0
    %275 = vmatpush1.msra.mxu0 0.0
    %276 = vmatprep.subr.mxu0 0.0
    %277 = vmatpush1.msra.mxu0 0.0
    %278 = vmatprep.subr.mxu0 0.0
    %279 = vmatpush1.msra.mxu0 0.0
    %280 = vmatprep.subr.mxu0 0.0
    %281 = vmatpush1.msra.mxu0 0.0
    %282 = vmatprep.subr.mxu0 0.0
    %283 = vmatpush1.msra.mxu0 0.0
    %284 = vmatprep.subr.mxu0 0.0
    %285 = vmatpush1.msra.mxu0 0.0
    %286 = vmatprep.subr.mxu0 0.0
    %287 = vmatpush1.msra.mxu0 0.0
    %288 = vmatprep.subr.mxu0 0.0
    %289 = vmatpush1.msra.mxu0 0.0
    %290 = vmatprep.subr.mxu0 0.0
    %291 = vmatpush1.msra.mxu0 0.0
    %292 = vmatprep.subr.mxu0 0.0
    %293 = vmatpush1.msra.mxu0 0.0
    %294 = vmatprep.subr.mxu0 0.0
    %295 = vmatpush1.msra.mxu0 0.0
    %296 = vmatprep.subr.mxu0 0.0
    %297 = vmatpush1.msra.mxu0 0.0
    %298 = vmatprep.subr.mxu0 0.0
    %299 = vmatpush1.msra.mxu0 0.0
    %300 = vmatprep.subr.mxu0 0.0
    %301 = vmatpush1.msra.mxu0 0.0
    %302 = vmatprep.subr.mxu0 0.0
    %303 = vmatpush1.msra.mxu0 0.0
    %304 = vmatprep.subr.mxu0 0.0
    %305 = vmatpush1.msra.mxu0 0.0
    %306 = vmatprep.mubr.f32.mxu0 0.0
    %307 = vmatmul.mubr.f32.gmra.mrb[0].mxu0 %v240
    %v308 = vpop.f32.mrb[0].mxu0
    %v309 = vadd.f32 0.0, %v308
    %v310 = vpop.f32.mrb[0].mxu0
    %311 = vdwg.mxu0
    %313 = vrot.lane.b32.xlu0 %v167, 95
    %v314 = vpop.permute.xlu0 %313
    %316 = vxpose.xlu0.b32.start [1/16] %v314, 128
    %317 = vxpose.xlu0.b32.cont [2/16] 0.0, 128
    %318 = vxpose.xlu0.b32.cont [3/16] 0.0, 128
    %319 = vxpose.xlu0.b32.cont [4/16] 0.0, 128
    %320 = vxpose.xlu0.b32.cont [5/16] 0.0, 128
    %321 = vxpose.xlu0.b32.cont [6/16] 0.0, 128
    %322 = vxpose.xlu0.b32.cont [7/16] 0.0, 128
    %323 = vxpose.xlu0.b32.cont [8/16] 0.0, 128
    %324 = vxpose.xlu0.b32.cont [9/16] 0.0, 128
    %325 = vxpose.xlu0.b32.cont [10/16] 0.0, 128
    %326 = vxpose.xlu0.b32.cont [11/16] 0.0, 128
    %327 = vxpose.xlu0.b32.cont [12/16] 0.0, 128
    %328 = vxpose.xlu0.b32.cont [13/16] 0.0, 128
    %329 = vxpose.xlu0.b32.cont [14/16] 0.0, 128
    %330 = vxpose.xlu0.b32.cont [15/16] 0.0, 128
    %331 = vxpose.xlu0.b32.end [16/16] 0.0, 128
    %v332 = vpop.trf.xlu0
    %v333 = vpop.trf.xlu0
    %v334 = vpop.trf.xlu0
    %v335 = vpop.trf.xlu0
    %v336 = vpop.trf.xlu0
    %v337 = vpop.trf.xlu0
    %v338 = vpop.trf.xlu0
    %v339 = vpop.trf.xlu0
    %v340 = vpop.trf.xlu0
    %v341 = vpop.trf.xlu0
    %v342 = vpop.trf.xlu0
    %v343 = vpop.trf.xlu0
    %v344 = vpop.trf.xlu0
    %v345 = vpop.trf.xlu0
    %v346 = vpop.trf.xlu0
    %v347 = vpop.trf.xlu0
    %349 = vset.pattern.permute.xlu0 34
    %350 = vperm.xlu0 %349, %v309
    %v351 = vpop.permute.xlu0 %350
    %v353 = vlaneseq
    %v354 = vshrl.u32 %v353, 7
    %v355 = vsub.s32 0, %v354
    %v356 = vrot.slane %v332, %v355
    %v357 = vadd.f32 %v351, %v356
    %vm358 = vcmp.gt.f32.partialorder %v357, 0.0
    %v359 = vmul.f32 %v357, 0.2
    %v360 = vsel %vm358, %v357, %v359
    %v361 = vadd.f32 %v360, %v80
    %v362 = vsel %vm226, %v361, -inf
    %v363 = vrot.slane %v362, 4
    %v364 = vmax.f32 %v362, %v363
    %v365 = vrot.slane %v364, 2
    %v366 = vmax.f32 %v364, %v365
    %v367 = vrot.slane %v366, 1
    %v368 = vmax.f32 %v366, %v367
    %v369 = vsub.f32 %v361, %v368
    %v370 = vmul.f32 %v369, 1.442695
    %v371 = vpow.pop %v370
    %v372 = vsel %vm226, %v371, 0.0
    %v373 = vrot.slane %v372, 4
    %v374 = vadd.f32 %v372, %v373
    %v375 = vrot.slane %v374, 2
    %v376 = vadd.f32 %v374, %v375
    %v377 = vrot.slane %v376, 1
    %v378 = vadd.f32 %v376, %v377
    %v379 = vrcp.pop %v378
    %v380 = vmul.f32 1.0, %v379
    %v381 = vmul.f32 %v371, %v380
    %382 = vxpose.xlu0.b32.start [1/16] %v381, 128
    %383 = vxpose.xlu0.b32.cont [2/16] 0.0, 128
    %384 = vxpose.xlu0.b32.cont [3/16] 0.0, 128
    %385 = vxpose.xlu0.b32.cont [4/16] 0.0, 128
    %386 = vxpose.xlu0.b32.cont [5/16] 0.0, 128
    %387 = vxpose.xlu0.b32.cont [6/16] 0.0, 128
    %388 = vxpose.xlu0.b32.cont [7/16] 0.0, 128
    %389 = vxpose.xlu0.b32.cont [8/16] 0.0, 128
    %390 = vxpose.xlu0.b32.cont [9/16] 0.0, 128
    %391 = vxpose.xlu0.b32.cont [10/16] 0.0, 128
    %392 = vxpose.xlu0.b32.cont [11/16] 0.0, 128
    %393 = vxpose.xlu0.b32.cont [12/16] 0.0, 128
    %394 = vxpose.xlu0.b32.cont [13/16] 0.0, 128
    %395 = vxpose.xlu0.b32.cont [14/16] 0.0, 128
    %396 = vxpose.xlu0.b32.cont [15/16] 0.0, 128
    %397 = vxpose.xlu0.b32.end [16/16] 0.0, 128
    %v398 = vpop.trf.xlu0
    %v399 = vpop.trf.xlu0
    %v400 = vpop.trf.xlu0
    %v401 = vpop.trf.xlu0
    %v402 = vpop.trf.xlu0
    %v403 = vpop.trf.xlu0
    %v404 = vpop.trf.xlu0
    %v405 = vpop.trf.xlu0
    %v406 = vpop.trf.xlu0
    %v407 = vpop.trf.xlu0
    %v408 = vpop.trf.xlu0
    %v409 = vpop.trf.xlu0
    %v410 = vpop.trf.xlu0
    %v411 = vpop.trf.xlu0
    %v412 = vpop.trf.xlu0
    %v413 = vpop.trf.xlu0
    %v415 = vsel %vm226, %v398, 0
    %417 = vmatprep.subr.mxu0 0.0
    %418 = vmatpush1.msra.mxu0 %v309
    %419 = vmatprep.subr.mxu0 0.0
    %420 = vmatpush1.msra.mxu0 0.0
    %421 = vmatprep.subr.mxu0 0.0
    %422 = vmatpush1.msra.mxu0 0.0
    %423 = vmatprep.subr.mxu0 0.0
    %424 = vmatpush1.msra.mxu0 0.0
    %425 = vmatprep.subr.mxu0 0.0
    %426 = vmatpush1.msra.mxu0 0.0
    %427 = vmatprep.subr.mxu0 0.0
    %428 = vmatpush1.msra.mxu0 0.0
    %429 = vmatprep.subr.mxu0 0.0
    %430 = vmatpush1.msra.mxu0 0.0
    %431 = vmatprep.subr.mxu0 0.0
    %432 = vmatpush1.msra.mxu0 0.0
    %433 = vmatprep.subr.mxu0 0.0
    %434 = vmatpush1.msra.mxu0 0.0
    %435 = vmatprep.subr.mxu0 0.0
    %436 = vmatpush1.msra.mxu0 0.0
    %437 = vmatprep.subr.mxu0 0.0
    %438 = vmatpush1.msra.mxu0 0.0
    %439 = vmatprep.subr.mxu0 0.0
    %440 = vmatpush1.msra.mxu0 0.0
    %441 = vmatprep.subr.mxu0 0.0
    %442 = vmatpush1.msra.mxu0 0.0
    %443 = vmatprep.subr.mxu0 0.0
    %444 = vmatpush1.msra.mxu0 0.0
    %445 = vmatprep.subr.mxu0 0.0
    %446 = vmatpush1.msra.mxu0 0.0
    %447 = vmatprep.subr.mxu0 0.0
    %448 = vmatpush1.msra.mxu0 0.0
    %449 = vmatprep.subr.mxu0 0.0
    %450 = vmatpush1.msra.mxu0 0.0
    %451 = vmatprep.subr.mxu0 0.0
    %452 = vmatpush1.msra.mxu0 0.0
    %453 = vmatprep.subr.mxu0 0.0
    %454 = vmatpush1.msra.mxu0 0.0
    %455 = vmatprep.subr.mxu0 0.0
    %456 = vmatpush1.msra.mxu0 0.0
    %457 = vmatprep.subr.mxu0 0.0
    %458 = vmatpush1.msra.mxu0 0.0
    %459 = vmatprep.subr.mxu0 0.0
    %460 = vmatpush1.msra.mxu0 0.0
    %461 = vmatprep.subr.mxu0 0.0
    %462 = vmatpush1.msra.mxu0 0.0
    %463 = vmatprep.subr.mxu0 0.0
    %464 = vmatpush1.msra.mxu0 0.0
    %465 = vmatprep.subr.mxu0 0.0
    %466 = vmatpush1.msra.mxu0 0.0
    %467 = vmatprep.subr.mxu0 0.0
    %468 = vmatpush1.msra.mxu0 0.0
    %469 = vmatprep.subr.mxu0 0.0
    %470 = vmatpush1.msra.mxu0 0.0
    %471 = vmatprep.subr.mxu0 0.0
    %472 = vmatpush1.msra.mxu0 0.0
    %473 = vmatprep.subr.mxu0 0.0
    %474 = vmatpush1.msra.mxu0 0.0
    %475 = vmatprep.subr.mxu0 0.0
    %476 = vmatpush1.msra.mxu0 0.0
    %477 = vmatprep.subr.mxu0 0.0
    %478 = vmatpush1.msra.mxu0 0.0
    %479 = vmatprep.subr.mxu0 0.0
    %480 = vmatpush1.msra.mxu0 0.0
    %481 = vmatprep.mubr.f32.mxu0 0.0
    %482 = vmatmul.mubr.f32.gmra.mrb[0].mxu0 %v415
    %v483 = vpop.f32.mrb[0].mxu0
    %v484 = vadd.f32 0.0, %v483
    %v485 = vpop.f32.mrb[0].mxu0
    %486 = vdwg.mxu0
    %vm487 = vcmp.gt.f32.partialorder %v484, 0.0
    %v488 = vmul.f32 %v484, 1.442695
    %v489 = vpow.pop %v488
    %v490 = vsub.f32 %v489, 1.0
    %v491 = vsel %vm487, %v484, %v490
    %v492 = vadd.f32 %v491, %v82
    %494 = vrot.lane.b32.xlu0 %v184, 96
    %v495 = vpop.permute.xlu0 %494
    %497 = vxpose.xlu0.b32.start [1/16] %v495, 128
    %498 = vxpose.xlu0.b32.cont [2/16] 0.0, 128
    %499 = vxpose.xlu0.b32.cont [3/16] 0.0, 128
    %500 = vxpose.xlu0.b32.cont [4/16] 0.0, 128
    %501 = vxpose.xlu0.b32.cont [5/16] 0.0, 128
    %502 = vxpose.xlu0.b32.cont [6/16] 0.0, 128
    %503 = vxpose.xlu0.b32.cont [7/16] 0.0, 128
    %504 = vxpose.xlu0.b32.cont [8/16] 0.0, 128
    %505 = vxpose.xlu0.b32.cont [9/16] 0.0, 128
    %506 = vxpose.xlu0.b32.cont [10/16] 0.0, 128
    %507 = vxpose.xlu0.b32.cont [11/16] 0.0, 128
    %508 = vxpose.xlu0.b32.cont [12/16] 0.0, 128
    %509 = vxpose.xlu0.b32.cont [13/16] 0.0, 128
    %510 = vxpose.xlu0.b32.cont [14/16] 0.0, 128
    %511 = vxpose.xlu0.b32.cont [15/16] 0.0, 128
    %512 = vxpose.xlu0.b32.end [16/16] 0.0, 128
    %v513 = vpop.trf.xlu0
    %v514 = vpop.trf.xlu0
    %v515 = vpop.trf.xlu0
    %v516 = vpop.trf.xlu0
    %v517 = vpop.trf.xlu0
    %v518 = vpop.trf.xlu0
    %v519 = vpop.trf.xlu0
    %v520 = vpop.trf.xlu0
    %v521 = vpop.trf.xlu0
    %v522 = vpop.trf.xlu0
    %v523 = vpop.trf.xlu0
    %v524 = vpop.trf.xlu0
    %v525 = vpop.trf.xlu0
    %v526 = vpop.trf.xlu0
    %v527 = vpop.trf.xlu0
    %v528 = vpop.trf.xlu0
    %v529 = vlaneseq
    %v530 = vshrl.u32 %v529, 7
    %v531 = vsub.s32 0, %v530
    %v532 = vrot.slane %v513, %v531
    %v533 = vadd.f32 %v532, %v81
    %v534 = vsel %vm226, %v533, -inf
    %535 = vmax.xlane.f32.xlu0 %v534
    %v536 = vpop.xlane.xlu0 %535
    %v537 = vsub.f32 %v533, %v536
    %v538 = vmul.f32 %v537, 1.442695
    %v539 = vpow.pop %v538
    %v540 = vsel %vm226, %v539, 0.0
    %541 = vadd.xlane.f32.xlu0 %v540
    %v542 = vpop.xlane.xlu0 %541
    %v543 = vrcp.pop %v542
    %v544 = vmul.f32 1.0, %v543
    %v545 = vmul.f32 %v539, %v544
    %v547 = vsel %vm226, %v545, 0
    %549 = vmatprep.subr.mxu0 0.0
    %550 = vmatpush1.msra.mxu0 %v172
    %551 = vmatprep.subr.mxu0 0.0
    %552 = vmatpush1.msra.mxu0 0.0
    %553 = vmatprep.subr.mxu0 0.0
    %554 = vmatpush1.msra.mxu0 0.0
    %555 = vmatprep.subr.mxu0 0.0
    %556 = vmatpush1.msra.mxu0 0.0
    %557 = vmatprep.subr.mxu0 0.0
    %558 = vmatpush1.msra.mxu0 0.0
    %559 = vmatprep.subr.mxu0 0.0
    %560 = vmatpush1.msra.mxu0 0.0
    %561 = vmatprep.subr.mxu0 0.0
    %562 = vmatpush1.msra.mxu0 0.0
    %563 = vmatprep.subr.mxu0 0.0
    %564 = vmatpush1.msra.mxu0 0.0
    %565 = vmatprep.subr.mxu0 0.0
    %566 = vmatpush1.msra.mxu0 0.0
    %567 = vmatprep.subr.mxu0 0.0
    %568 = vmatpush1.msra.mxu0 0.0
    %569 = vmatprep.subr.mxu0 0.0
    %570 = vmatpush1.msra.mxu0 0.0
    %571 = vmatprep.subr.mxu0 0.0
    %572 = vmatpush1.msra.mxu0 0.0
    %573 = vmatprep.subr.mxu0 0.0
    %574 = vmatpush1.msra.mxu0 0.0
    %575 = vmatprep.subr.mxu0 0.0
    %576 = vmatpush1.msra.mxu0 0.0
    %577 = vmatprep.subr.mxu0 0.0
    %578 = vmatpush1.msra.mxu0 0.0
    %579 = vmatprep.subr.mxu0 0.0
    %580 = vmatpush1.msra.mxu0 0.0
    %581 = vmatprep.subr.mxu0 0.0
    %582 = vmatpush1.msra.mxu0 0.0
    %583 = vmatprep.subr.mxu0 0.0
    %584 = vmatpush1.msra.mxu0 0.0
    %585 = vmatprep.subr.mxu0 0.0
    %586 = vmatpush1.msra.mxu0 0.0
    %587 = vmatprep.subr.mxu0 0.0
    %588 = vmatpush1.msra.mxu0 0.0
    %589 = vmatprep.subr.mxu0 0.0
    %590 = vmatpush1.msra.mxu0 0.0
    %591 = vmatprep.subr.mxu0 0.0
    %592 = vmatpush1.msra.mxu0 0.0
    %593 = vmatprep.subr.mxu0 0.0
    %594 = vmatpush1.msra.mxu0 0.0
    %595 = vmatprep.subr.mxu0 0.0
    %596 = vmatpush1.msra.mxu0 0.0
    %597 = vmatprep.subr.mxu0 0.0
    %598 = vmatpush1.msra.mxu0 0.0
    %599 = vmatprep.subr.mxu0 0.0
    %600 = vmatpush1.msra.mxu0 0.0
    %601 = vmatprep.subr.mxu0 0.0
    %602 = vmatpush1.msra.mxu0 0.0
    %603 = vmatprep.subr.mxu0 0.0
    %604 = vmatpush1.msra.mxu0 0.0
    %605 = vmatprep.subr.mxu0 0.0
    %606 = vmatpush1.msra.mxu0 0.0
    %607 = vmatprep.subr.mxu0 0.0
    %608 = vmatpush1.msra.mxu0 0.0
    %609 = vmatprep.subr.mxu0 0.0
    %610 = vmatpush1.msra.mxu0 0.0
    %611 = vmatprep.subr.mxu0 0.0
    %612 = vmatpush1.msra.mxu0 0.0
    %613 = vmatprep.mubr.f32.mxu0 0.0
    %614 = vmatmul.mubr.f32.gmra.mrb[0].mxu0 %v547
    %v615 = vpop.f32.mrb[0].mxu0
    %v616 = vadd.f32 0.0, %v615
    %v617 = vpop.f32.mrb[0].mxu0
    %618 = vdwg.mxu0
    %620 = vrot.lane.b32.xlu0 %v172, 95
    %v621 = vpop.permute.xlu0 %620
    %623 = vxpose.xlu0.b32.start [1/16] %v621, 128
    %624 = vxpose.xlu0.b32.cont [2/16] 0.0, 128
    %625 = vxpose.xlu0.b32.cont [3/16] 0.0, 128
    %626 = vxpose.xlu0.b32.cont [4/16] 0.0, 128
    %627 = vxpose.xlu0.b32.cont [5/16] 0.0, 128
    %628 = vxpose.xlu0.b32.cont [6/16] 0.0, 128
    %629 = vxpose.xlu0.b32.cont [7/16] 0.0, 128
    %630 = vxpose.xlu0.b32.cont [8/16] 0.0, 128
    %631 = vxpose.xlu0.b32.cont [9/16] 0.0, 128
    %632 = vxpose.xlu0.b32.cont [10/16] 0.0, 128
    %633 = vxpose.xlu0.b32.cont [11/16] 0.0, 128
    %634 = vxpose.xlu0.b32.cont [12/16] 0.0, 128
    %635 = vxpose.xlu0.b32.cont [13/16] 0.0, 128
    %636 = vxpose.xlu0.b32.cont [14/16] 0.0, 128
    %637 = vxpose.xlu0.b32.cont [15/16] 0.0, 128
    %638 = vxpose.xlu0.b32.end [16/16] 0.0, 128
    %v639 = vpop.trf.xlu0
    %v640 = vpop.trf.xlu0
    %v641 = vpop.trf.xlu0
    %v642 = vpop.trf.xlu0
    %v643 = vpop.trf.xlu0
    %v644 = vpop.trf.xlu0
    %v645 = vpop.trf.xlu0
    %v646 = vpop.trf.xlu0
    %v647 = vpop.trf.xlu0
    %v648 = vpop.trf.xlu0
    %v649 = vpop.trf.xlu0
    %v650 = vpop.trf.xlu0
    %v651 = vpop.trf.xlu0
    %v652 = vpop.trf.xlu0
    %v653 = vpop.trf.xlu0
    %v654 = vpop.trf.xlu0
    %656 = vset.pattern.permute.xlu0 34
    %657 = vperm.xlu0 %656, %v616
    %v658 = vpop.permute.xlu0 %657
    %v660 = vlaneseq
    %v661 = vshrl.u32 %v660, 7
    %v662 = vsub.s32 0, %v661
    %v663 = vrot.slane %v639, %v662
    %v664 = vadd.f32 %v658, %v663
    %vm665 = vcmp.gt.f32.partialorder %v664, 0.0
    %v666 = vmul.f32 %v664, 0.2
    %v667 = vsel %vm665, %v664, %v666
    %v668 = vadd.f32 %v667, %v81
    %v669 = vsel %vm226, %v668, -inf
    %v670 = vrot.slane %v669, 4
    %v671 = vmax.f32 %v669, %v670
    %v672 = vrot.slane %v671, 2
    %v673 = vmax.f32 %v671, %v672
    %v674 = vrot.slane %v673, 1
    %v675 = vmax.f32 %v673, %v674
    %v676 = vsub.f32 %v668, %v675
    %v677 = vmul.f32 %v676, 1.442695
    %v678 = vpow.pop %v677
    %v679 = vsel %vm226, %v678, 0.0
    %v680 = vrot.slane %v679, 4
    %v681 = vadd.f32 %v679, %v680
    %v682 = vrot.slane %v681, 2
    %v683 = vadd.f32 %v681, %v682
    %v684 = vrot.slane %v683, 1
    %v685 = vadd.f32 %v683, %v684
    %v686 = vrcp.pop %v685
    %v687 = vmul.f32 1.0, %v686
    %v688 = vmul.f32 %v678, %v687
    %689 = vxpose.xlu0.b32.start [1/16] %v688, 128
    %690 = vxpose.xlu0.b32.cont [2/16] 0.0, 128
    %691 = vxpose.xlu0.b32.cont [3/16] 0.0, 128
    %692 = vxpose.xlu0.b32.cont [4/16] 0.0, 128
    %693 = vxpose.xlu0.b32.cont [5/16] 0.0, 128
    %694 = vxpose.xlu0.b32.cont [6/16] 0.0, 128
    %695 = vxpose.xlu0.b32.cont [7/16] 0.0, 128
    %696 = vxpose.xlu0.b32.cont [8/16] 0.0, 128
    %697 = vxpose.xlu0.b32.cont [9/16] 0.0, 128
    %698 = vxpose.xlu0.b32.cont [10/16] 0.0, 128
    %699 = vxpose.xlu0.b32.cont [11/16] 0.0, 128
    %700 = vxpose.xlu0.b32.cont [12/16] 0.0, 128
    %701 = vxpose.xlu0.b32.cont [13/16] 0.0, 128
    %702 = vxpose.xlu0.b32.cont [14/16] 0.0, 128
    %703 = vxpose.xlu0.b32.cont [15/16] 0.0, 128
    %704 = vxpose.xlu0.b32.end [16/16] 0.0, 128
    %v705 = vpop.trf.xlu0
    %v706 = vpop.trf.xlu0
    %v707 = vpop.trf.xlu0
    %v708 = vpop.trf.xlu0
    %v709 = vpop.trf.xlu0
    %v710 = vpop.trf.xlu0
    %v711 = vpop.trf.xlu0
    %v712 = vpop.trf.xlu0
    %v713 = vpop.trf.xlu0
    %v714 = vpop.trf.xlu0
    %v715 = vpop.trf.xlu0
    %v716 = vpop.trf.xlu0
    %v717 = vpop.trf.xlu0
    %v718 = vpop.trf.xlu0
    %v719 = vpop.trf.xlu0
    %v720 = vpop.trf.xlu0
    %v722 = vsel %vm226, %v705, 0
    %724 = vmatprep.subr.mxu0 0.0
    %725 = vmatpush1.msra.mxu0 %v616
    %726 = vmatprep.subr.mxu0 0.0
    %727 = vmatpush1.msra.mxu0 0.0
    %728 = vmatprep.subr.mxu0 0.0
    %729 = vmatpush1.msra.mxu0 0.0
    %730 = vmatprep.subr.mxu0 0.0
    %731 = vmatpush1.msra.mxu0 0.0
    %732 = vmatprep.subr.mxu0 0.0
    %733 = vmatpush1.msra.mxu0 0.0
    %734 = vmatprep.subr.mxu0 0.0
    %735 = vmatpush1.msra.mxu0 0.0
    %736 = vmatprep.subr.mxu0 0.0
    %737 = vmatpush1.msra.mxu0 0.0
    %738 = vmatprep.subr.mxu0 0.0
    %739 = vmatpush1.msra.mxu0 0.0
    %740 = vmatprep.subr.mxu0 0.0
    %741 = vmatpush1.msra.mxu0 0.0
    %742 = vmatprep.subr.mxu0 0.0
    %743 = vmatpush1.msra.mxu0 0.0
    %744 = vmatprep.subr.mxu0 0.0
    %745 = vmatpush1.msra.mxu0 0.0
    %746 = vmatprep.subr.mxu0 0.0
    %747 = vmatpush1.msra.mxu0 0.0
    %748 = vmatprep.subr.mxu0 0.0
    %749 = vmatpush1.msra.mxu0 0.0
    %750 = vmatprep.subr.mxu0 0.0
    %751 = vmatpush1.msra.mxu0 0.0
    %752 = vmatprep.subr.mxu0 0.0
    %753 = vmatpush1.msra.mxu0 0.0
    %754 = vmatprep.subr.mxu0 0.0
    %755 = vmatpush1.msra.mxu0 0.0
    %756 = vmatprep.subr.mxu0 0.0
    %757 = vmatpush1.msra.mxu0 0.0
    %758 = vmatprep.subr.mxu0 0.0
    %759 = vmatpush1.msra.mxu0 0.0
    %760 = vmatprep.subr.mxu0 0.0
    %761 = vmatpush1.msra.mxu0 0.0
    %762 = vmatprep.subr.mxu0 0.0
    %763 = vmatpush1.msra.mxu0 0.0
    %764 = vmatprep.subr.mxu0 0.0
    %765 = vmatpush1.msra.mxu0 0.0
    %766 = vmatprep.subr.mxu0 0.0
    %767 = vmatpush1.msra.mxu0 0.0
    %768 = vmatprep.subr.mxu0 0.0
    %769 = vmatpush1.msra.mxu0 0.0
    %770 = vmatprep.subr.mxu0 0.0
    %771 = vmatpush1.msra.mxu0 0.0
    %772 = vmatprep.subr.mxu0 0.0
    %773 = vmatpush1.msra.mxu0 0.0
    %774 = vmatprep.subr.mxu0 0.0
    %775 = vmatpush1.msra.mxu0 0.0
    %776 = vmatprep.subr.mxu0 0.0
    %777 = vmatpush1.msra.mxu0 0.0
    %778 = vmatprep.subr.mxu0 0.0
    %779 = vmatpush1.msra.mxu0 0.0
    %780 = vmatprep.subr.mxu0 0.0
    %781 = vmatpush1.msra.mxu0 0.0
    %782 = vmatprep.subr.mxu0 0.0
    %783 = vmatpush1.msra.mxu0 0.0
    %784 = vmatprep.subr.mxu0 0.0
    %785 = vmatpush1.msra.mxu0 0.0
    %786 = vmatprep.subr.mxu0 0.0
    %787 = vmatpush1.msra.mxu0 0.0
    %788 = vmatprep.mubr.f32.mxu0 0.0
    %789 = vmatmul.mubr.f32.gmra.mrb[0].mxu0 %v722
    %v790 = vpop.f32.mrb[0].mxu0
    %v791 = vadd.f32 0.0, %v790
    %v792 = vpop.f32.mrb[0].mxu0
    %793 = vdwg.mxu0
    %vm794 = vcmp.gt.f32.partialorder %v791, 0.0
    %v795 = vmul.f32 %v791, 1.442695
    %v796 = vpow.pop %v795
    %v797 = vsub.f32 %v796, 1.0
    %v798 = vsel %vm794, %v791, %v797
    %v799 = vadd.f32 %v798, %v83
    %s800 = scalar_lea.vmem [#allocation8], 128
    %v801 = vld [vmem:[%s800] sm:$0xff]
    %v802 = vld [vmem:[%s800 + $0x8] sm:$0xff]
    %v803 = vld [vmem:[%s800 + $0x10] sm:$0xff]
    %v804 = vld [vmem:[%s800 + $0x18] sm:$0xff]
    %v805 = vld [vmem:[%s800 + $0x20] sm:$0xff]
    %v806 = vld [vmem:[%s800 + $0x28] sm:$0xff]
    %v807 = vld [vmem:[%s800 + $0x30] sm:$0xff]
    %v808 = vld [vmem:[%s800 + $0x38] sm:$0xff]
    %v809 = vld [vmem:[%s800 + $0x40] sm:$0xff]
    %v810 = vld [vmem:[%s800 + $0x48] sm:$0xff]
    %v811 = vld [vmem:[%s800 + $0x50] sm:$0xff]
    %v812 = vld [vmem:[%s800 + $0x58] sm:$0xff]
    %v813 = vld [vmem:[%s800 + $0x60] sm:$0xff]
    %v814 = vld [vmem:[%s800 + $0x68] sm:$0xff]
    %v815 = vld [vmem:[%s800 + $0x70] sm:$0xff]
    %v816 = vld [vmem:[%s800 + $0x78] sm:$0xff]
    %817 = vmatprep.subr.mxu0 0.0
    %818 = vmatpush1.msra.mxu0 %v801
    %819 = vmatprep.subr.mxu0 0.0
    %820 = vmatpush1.msra.mxu0 %v802
    %821 = vmatprep.subr.mxu0 0.0
    %822 = vmatpush1.msra.mxu0 %v803
    %823 = vmatprep.subr.mxu0 0.0
    %824 = vmatpush1.msra.mxu0 %v804
    %825 = vmatprep.subr.mxu0 0.0
    %826 = vmatpush1.msra.mxu0 %v805
    %827 = vmatprep.subr.mxu0 0.0
    %828 = vmatpush1.msra.mxu0 %v806
    %829 = vmatprep.subr.mxu0 0.0
    %830 = vmatpush1.msra.mxu0 %v807
    %831 = vmatprep.subr.mxu0 0.0
    %832 = vmatpush1.msra.mxu0 %v808
    %833 = vmatprep.subr.mxu0 0.0
    %834 = vmatpush1.msra.mxu0 %v809
    %835 = vmatprep.subr.mxu0 0.0
    %836 = vmatpush1.msra.mxu0 %v810
    %837 = vmatprep.subr.mxu0 0.0
    %838 = vmatpush1.msra.mxu0 %v811
    %839 = vmatprep.subr.mxu0 0.0
    %840 = vmatpush1.msra.mxu0 %v812
    %841 = vmatprep.subr.mxu0 0.0
    %842 = vmatpush1.msra.mxu0 %v813
    %843 = vmatprep.subr.mxu0 0.0
    %844 = vmatpush1.msra.mxu0 %v814
    %845 = vmatprep.subr.mxu0 0.0
    %846 = vmatpush1.msra.mxu0 %v815
    %847 = vmatprep.subr.mxu0 0.0
    %848 = vmatpush1.msra.mxu0 %v816
    %849 = vmatprep.subr.mxu0 0.0
    %850 = vmatpush1.msra.mxu0 0.0
    %851 = vmatprep.subr.mxu0 0.0
    %852 = vmatpush1.msra.mxu0 0.0
    %853 = vmatprep.subr.mxu0 0.0
    %854 = vmatpush1.msra.mxu0 0.0
    %855 = vmatprep.subr.mxu0 0.0
    %856 = vmatpush1.msra.mxu0 0.0
    %857 = vmatprep.subr.mxu0 0.0
    %858 = vmatpush1.msra.mxu0 0.0
    %859 = vmatprep.subr.mxu0 0.0
    %860 = vmatpush1.msra.mxu0 0.0
    %861 = vmatprep.subr.mxu0 0.0
    %862 = vmatpush1.msra.mxu0 0.0
    %863 = vmatprep.subr.mxu0 0.0
    %864 = vmatpush1.msra.mxu0 0.0
    %865 = vmatprep.subr.mxu0 0.0
    %866 = vmatpush1.msra.mxu0 0.0
    %867 = vmatprep.subr.mxu0 0.0
    %868 = vmatpush1.msra.mxu0 0.0
    %869 = vmatprep.subr.mxu0 0.0
    %870 = vmatpush1.msra.mxu0 0.0
    %871 = vmatprep.subr.mxu0 0.0
    %872 = vmatpush1.msra.mxu0 0.0
    %873 = vmatprep.subr.mxu0 0.0
    %874 = vmatpush1.msra.mxu0 0.0
    %875 = vmatprep.subr.mxu0 0.0
    %876 = vmatpush1.msra.mxu0 0.0
    %877 = vmatprep.subr.mxu0 0.0
    %878 = vmatpush1.msra.mxu0 0.0
    %879 = vmatprep.subr.mxu0 0.0
    %880 = vmatpush1.msra.mxu0 0.0
    %881 = vmatprep.mubr.f32.mxu0 0.0
    %882 = vmatmul.mubr.f32.gmra.mrb[0].mxu0 %v492
    %v883 = vpop.f32.mrb[0].mxu0
    %v884 = vadd.f32 0.0, %v883
    %v885 = vpop.f32.mrb[0].mxu0
    %886 = vmatprep.mubr.f32.mxu0 0.0
    %887 = vmatmul.mubr.f32.gmra.mrb[0].mxu0 %v799
    %v888 = vpop.f32.mrb[0].mxu0
    %v889 = vadd.f32 0.0, %v888
    %v890 = vpop.f32.mrb[0].mxu0
    %891 = vdwg.mxu0
    %s892 = sld [smem:[#allocation9 + $0x1]]
    %v893 = vstv %s892
    %v894 = vadd.f32 %v893, %v884
    %v895 = vadd.f32 %v893, %v889
    %vm896 = vcmp.gt.f32.partialorder %v894, 0.0
    %vm897 = vcmp.gt.f32.partialorder %v895, 0.0
    %v898 = vmul.f32 %v894, 0.2
    %v899 = vmul.f32 %v895, 0.2
    %v900 = vsel %vm896, %v894, %v898
    %v901 = vsel %vm897, %v895, %v899
    %903 = vrot.lane.b32.xlu0 %v900, 96
    %v904 = vpop.permute.xlu0 %903
    %906 = vxpose.xlu0.b32.start [1/16] %v904, 128
    %907 = vxpose.xlu0.b32.cont [2/16] 0.0, 128
    %908 = vxpose.xlu0.b32.cont [3/16] 0.0, 128
    %909 = vxpose.xlu0.b32.cont [4/16] 0.0, 128
    %910 = vxpose.xlu0.b32.cont [5/16] 0.0, 128
    %911 = vxpose.xlu0.b32.cont [6/16] 0.0, 128
    %912 = vxpose.xlu0.b32.cont [7/16] 0.0, 128
    %913 = vxpose.xlu0.b32.cont [8/16] 0.0, 128
    %914 = vxpose.xlu0.b32.cont [9/16] 0.0, 128
    %915 = vxpose.xlu0.b32.cont [10/16] 0.0, 128
    %916 = vxpose.xlu0.b32.cont [11/16] 0.0, 128
    %917 = vxpose.xlu0.b32.cont [12/16] 0.0, 128
    %918 = vxpose.xlu0.b32.cont [13/16] 0.0, 128
    %919 = vxpose.xlu0.b32.cont [14/16] 0.0, 128
    %920 = vxpose.xlu0.b32.cont [15/16] 0.0, 128
    %921 = vxpose.xlu0.b32.end [16/16] 0.0, 128
    %v922 = vpop.trf.xlu0
    %v923 = vpop.trf.xlu0
    %v924 = vpop.trf.xlu0
    %v925 = vpop.trf.xlu0
    %v926 = vpop.trf.xlu0
    %v927 = vpop.trf.xlu0
    %v928 = vpop.trf.xlu0
    %v929 = vpop.trf.xlu0
    %v930 = vpop.trf.xlu0
    %v931 = vpop.trf.xlu0
    %v932 = vpop.trf.xlu0
    %v933 = vpop.trf.xlu0
    %v934 = vpop.trf.xlu0
    %v935 = vpop.trf.xlu0
    %v936 = vpop.trf.xlu0
    %v937 = vpop.trf.xlu0
    %v938 = vlaneseq
    %v939 = vshrl.u32 %v938, 7
    %v940 = vsub.s32 0, %v939
    %v941 = vrot.slane %v922, %v940
    %v942 = vadd.f32 %v941, %v80
    %v943 = vsel %vm226, %v942, -inf
    %944 = vmax.xlane.f32.xlu0 %v943
    %v945 = vpop.xlane.xlu0 %944
    %v946 = vsub.f32 %v942, %v945
    %v947 = vmul.f32 %v946, 1.442695
    %v948 = vpow.pop %v947
    %v949 = vsel %vm226, %v948, 0.0
    %950 = vadd.xlane.f32.xlu0 %v949
    %v951 = vpop.xlane.xlu0 %950
    %v952 = vrcp.pop %v951
    %v953 = vmul.f32 1.0, %v952
    %v954 = vmul.f32 %v948, %v953
    %v956 = vsel %vm226, %v954, 0
    %958 = vmatprep.subr.mxu0 0.0
    %959 = vmatpush1.msra.mxu0 %v884
    %960 = vmatprep.subr.mxu0 0.0
    %961 = vmatpush1.msra.mxu0 0.0
    %962 = vmatprep.subr.mxu0 0.0
    %963 = vmatpush1.msra.mxu0 0.0
    %964 = vmatprep.subr.mxu0 0.0
    %965 = vmatpush1.msra.mxu0 0.0
    %966 = vmatprep.subr.mxu0 0.0
    %967 = vmatpush1.msra.mxu0 0.0
    %968 = vmatprep.subr.mxu0 0.0
    %969 = vmatpush1.msra.mxu0 0.0
    %970 = vmatprep.subr.mxu0 0.0
    %971 = vmatpush1.msra.mxu0 0.0
    %972 = vmatprep.subr.mxu0 0.0
    %973 = vmatpush1.msra.mxu0 0.0
    %974 = vmatprep.subr.mxu0 0.0
    %975 = vmatpush1.msra.mxu0 0.0
    %976 = vmatprep.subr.mxu0 0.0
    %977 = vmatpush1.msra.mxu0 0.0
    %978 = vmatprep.subr.mxu0 0.0
    %979 = vmatpush1.msra.mxu0 0.0
    %980 = vmatprep.subr.mxu0 0.0
    %981 = vmatpush1.msra.mxu0 0.0
    %982 = vmatprep.subr.mxu0 0.0
    %983 = vmatpush1.msra.mxu0 0.0
    %984 = vmatprep.subr.mxu0 0.0
    %985 = vmatpush1.msra.mxu0 0.0
    %986 = vmatprep.subr.mxu0 0.0
    %987 = vmatpush1.msra.mxu0 0.0
    %988 = vmatprep.subr.mxu0 0.0
    %989 = vmatpush1.msra.mxu0 0.0
    %990 = vmatprep.subr.mxu0 0.0
    %991 = vmatpush1.msra.mxu0 0.0
    %992 = vmatprep.subr.mxu0 0.0
    %993 = vmatpush1.msra.mxu0 0.0
    %994 = vmatprep.subr.mxu0 0.0
    %995 = vmatpush1.msra.mxu0 0.0
    %996 = vmatprep.subr.mxu0 0.0
    %997 = vmatpush1.msra.mxu0 0.0
    %998 = vmatprep.subr.mxu0 0.0
    %999 = vmatpush1.msra.mxu0 0.0
    %1000 = vmatprep.subr.mxu0 0.0
    %1001 = vmatpush1.msra.mxu0 0.0
    %1002 = vmatprep.subr.mxu0 0.0
    %1003 = vmatpush1.msra.mxu0 0.0
    %1004 = vmatprep.subr.mxu0 0.0
    %1005 = vmatpush1.msra.mxu0 0.0
    %1006 = vmatprep.subr.mxu0 0.0
    %1007 = vmatpush1.msra.mxu0 0.0
    %1008 = vmatprep.subr.mxu0 0.0
    %1009 = vmatpush1.msra.mxu0 0.0
    %1010 = vmatprep.subr.mxu0 0.0
    %1011 = vmatpush1.msra.mxu0 0.0
    %1012 = vmatprep.subr.mxu0 0.0
    %1013 = vmatpush1.msra.mxu0 0.0
    %1014 = vmatprep.subr.mxu0 0.0
    %1015 = vmatpush1.msra.mxu0 0.0
    %1016 = vmatprep.subr.mxu0 0.0
    %1017 = vmatpush1.msra.mxu0 0.0
    %1018 = vmatprep.subr.mxu0 0.0
    %1019 = vmatpush1.msra.mxu0 0.0
    %1020 = vmatprep.subr.mxu0 0.0
    %1021 = vmatpush1.msra.mxu0 0.0
    %1022 = vmatprep.mubr.f32.mxu0 0.0
    %1023 = vmatmul.mubr.f32.gmra.mrb[0].mxu0 %v956
    %v1024 = vpop.f32.mrb[0].mxu0
    %v1025 = vadd.f32 0.0, %v1024
    %v1026 = vpop.f32.mrb[0].mxu0
    %1027 = vdwg.mxu0
    %1029 = vrot.lane.b32.xlu0 %v884, 95
    %v1030 = vpop.permute.xlu0 %1029
    %1032 = vxpose.xlu0.b32.start [1/16] %v1030, 128
    %1033 = vxpose.xlu0.b32.cont [2/16] 0.0, 128
    %1034 = vxpose.xlu0.b32.cont [3/16] 0.0, 128
    %1035 = vxpose.xlu0.b32.cont [4/16] 0.0, 128
    %1036 = vxpose.xlu0.b32.cont [5/16] 0.0, 128
    %1037 = vxpose.xlu0.b32.cont [6/16] 0.0, 128
    %1038 = vxpose.xlu0.b32.cont [7/16] 0.0, 128
    %1039 = vxpose.xlu0.b32.cont [8/16] 0.0, 128
    %1040 = vxpose.xlu0.b32.cont [9/16] 0.0, 128
    %1041 = vxpose.xlu0.b32.cont [10/16] 0.0, 128
    %1042 = vxpose.xlu0.b32.cont [11/16] 0.0, 128
    %1043 = vxpose.xlu0.b32.cont [12/16] 0.0, 128
    %1044 = vxpose.xlu0.b32.cont [13/16] 0.0, 128
    %1045 = vxpose.xlu0.b32.cont [14/16] 0.0, 128
    %1046 = vxpose.xlu0.b32.cont [15/16] 0.0, 128
    %1047 = vxpose.xlu0.b32.end [16/16] 0.0, 128
    %v1048 = vpop.trf.xlu0
    %v1049 = vpop.trf.xlu0
    %v1050 = vpop.trf.xlu0
    %v1051 = vpop.trf.xlu0
    %v1052 = vpop.trf.xlu0
    %v1053 = vpop.trf.xlu0
    %v1054 = vpop.trf.xlu0
    %v1055 = vpop.trf.xlu0
    %v1056 = vpop.trf.xlu0
    %v1057 = vpop.trf.xlu0
    %v1058 = vpop.trf.xlu0
    %v1059 = vpop.trf.xlu0
    %v1060 = vpop.trf.xlu0
    %v1061 = vpop.trf.xlu0
    %v1062 = vpop.trf.xlu0
    %v1063 = vpop.trf.xlu0
    %1065 = vset.pattern.permute.xlu0 34
    %1066 = vperm.xlu0 %1065, %v1025
    %v1067 = vpop.permute.xlu0 %1066
    %v1069 = vlaneseq
    %v1070 = vshrl.u32 %v1069, 7
    %v1071 = vsub.s32 0, %v1070
    %v1072 = vrot.slane %v1048, %v1071
    %v1073 = vadd.f32 %v1067, %v1072
    %vm1074 = vcmp.gt.f32.partialorder %v1073, 0.0
    %v1075 = vmul.f32 %v1073, 0.2
    %v1076 = vsel %vm1074, %v1073, %v1075
    %v1077 = vadd.f32 %v1076, %v80
    %v1078 = vsel %vm226, %v1077, -inf
    %v1079 = vrot.slane %v1078, 4
    %v1080 = vmax.f32 %v1078, %v1079
    %v1081 = vrot.slane %v1080, 2
    %v1082 = vmax.f32 %v1080, %v1081
    %v1083 = vrot.slane %v1082, 1
    %v1084 = vmax.f32 %v1082, %v1083
    %v1085 = vsub.f32 %v1077, %v1084
    %v1086 = vmul.f32 %v1085, 1.442695
    %v1087 = vpow.pop %v1086
    %v1088 = vsel %vm226, %v1087, 0.0
    %v1089 = vrot.slane %v1088, 4
    %v1090 = vadd.f32 %v1088, %v1089
    %v1091 = vrot.slane %v1090, 2
    %v1092 = vadd.f32 %v1090, %v1091
    %v1093 = vrot.slane %v1092, 1
    %v1094 = vadd.f32 %v1092, %v1093
    %v1095 = vrcp.pop %v1094
    %v1096 = vmul.f32 1.0, %v1095
    %v1097 = vmul.f32 %v1087, %v1096
    %1098 = vxpose.xlu0.b32.start [1/16] %v1097, 128
    %1099 = vxpose.xlu0.b32.cont [2/16] 0.0, 128
    %1100 = vxpose.xlu0.b32.cont [3/16] 0.0, 128
    %1101 = vxpose.xlu0.b32.cont [4/16] 0.0, 128
    %1102 = vxpose.xlu0.b32.cont [5/16] 0.0, 128
    %1103 = vxpose.xlu0.b32.cont [6/16] 0.0, 128
    %1104 = vxpose.xlu0.b32.cont [7/16] 0.0, 128
    %1105 = vxpose.xlu0.b32.cont [8/16] 0.0, 128
    %1106 = vxpose.xlu0.b32.cont [9/16] 0.0, 128
    %1107 = vxpose.xlu0.b32.cont [10/16] 0.0, 128
    %1108 = vxpose.xlu0.b32.cont [11/16] 0.0, 128
    %1109 = vxpose.xlu0.b32.cont [12/16] 0.0, 128
    %1110 = vxpose.xlu0.b32.cont [13/16] 0.0, 128
    %1111 = vxpose.xlu0.b32.cont [14/16] 0.0, 128
    %1112 = vxpose.xlu0.b32.cont [15/16] 0.0, 128
    %1113 = vxpose.xlu0.b32.end [16/16] 0.0, 128
    %v1114 = vpop.trf.xlu0
    %v1115 = vpop.trf.xlu0
    %v1116 = vpop.trf.xlu0
    %v1117 = vpop.trf.xlu0
    %v1118 = vpop.trf.xlu0
    %v1119 = vpop.trf.xlu0
    %v1120 = vpop.trf.xlu0
    %v1121 = vpop.trf.xlu0
    %v1122 = vpop.trf.xlu0
    %v1123 = vpop.trf.xlu0
    %v1124 = vpop.trf.xlu0
    %v1125 = vpop.trf.xlu0
    %v1126 = vpop.trf.xlu0
    %v1127 = vpop.trf.xlu0
    %v1128 = vpop.trf.xlu0
    %v1129 = vpop.trf.xlu0
    %v1131 = vsel %vm226, %v1114, 0
    %1133 = vmatprep.subr.mxu0 0.0
    %1134 = vmatpush1.msra.mxu0 %v1025
    %1135 = vmatprep.subr.mxu0 0.0
    %1136 = vmatpush1.msra.mxu0 0.0
    %1137 = vmatprep.subr.mxu0 0.0
    %1138 = vmatpush1.msra.mxu0 0.0
    %1139 = vmatprep.subr.mxu0 0.0
    %1140 = vmatpush1.msra.mxu0 0.0
    %1141 = vmatprep.subr.mxu0 0.0
    %1142 = vmatpush1.msra.mxu0 0.0
    %1143 = vmatprep.subr.mxu0 0.0
    %1144 = vmatpush1.msra.mxu0 0.0
    %1145 = vmatprep.subr.mxu0 0.0
    %1146 = vmatpush1.msra.mxu0 0.0
    %1147 = vmatprep.subr.mxu0 0.0
    %1148 = vmatpush1.msra.mxu0 0.0
    %1149 = vmatprep.subr.mxu0 0.0
    %1150 = vmatpush1.msra.mxu0 0.0
    %1151 = vmatprep.subr.mxu0 0.0
    %1152 = vmatpush1.msra.mxu0 0.0
    %1153 = vmatprep.subr.mxu0 0.0
    %1154 = vmatpush1.msra.mxu0 0.0
    %1155 = vmatprep.subr.mxu0 0.0
    %1156 = vmatpush1.msra.mxu0 0.0
    %1157 = vmatprep.subr.mxu0 0.0
    %1158 = vmatpush1.msra.mxu0 0.0
    %1159 = vmatprep.subr.mxu0 0.0
    %1160 = vmatpush1.msra.mxu0 0.0
    %1161 = vmatprep.subr.mxu0 0.0
    %1162 = vmatpush1.msra.mxu0 0.0
    %1163 = vmatprep.subr.mxu0 0.0
    %1164 = vmatpush1.msra.mxu0 0.0
    %1165 = vmatprep.subr.mxu0 0.0
    %1166 = vmatpush1.msra.mxu0 0.0
    %1167 = vmatprep.subr.mxu0 0.0
    %1168 = vmatpush1.msra.mxu0 0.0
    %1169 = vmatprep.subr.mxu0 0.0
    %1170 = vmatpush1.msra.mxu0 0.0
    %1171 = vmatprep.subr.mxu0 0.0
    %1172 = vmatpush1.msra.mxu0 0.0
    %1173 = vmatprep.subr.mxu0 0.0
    %1174 = vmatpush1.msra.mxu0 0.0
    %1175 = vmatprep.subr.mxu0 0.0
    %1176 = vmatpush1.msra.mxu0 0.0
    %1177 = vmatprep.subr.mxu0 0.0
    %1178 = vmatpush1.msra.mxu0 0.0
    %1179 = vmatprep.subr.mxu0 0.0
    %1180 = vmatpush1.msra.mxu0 0.0
    %1181 = vmatprep.subr.mxu0 0.0
    %1182 = vmatpush1.msra.mxu0 0.0
    %1183 = vmatprep.subr.mxu0 0.0
    %1184 = vmatpush1.msra.mxu0 0.0
    %1185 = vmatprep.subr.mxu0 0.0
    %1186 = vmatpush1.msra.mxu0 0.0
    %1187 = vmatprep.subr.mxu0 0.0
    %1188 = vmatpush1.msra.mxu0 0.0
    %1189 = vmatprep.subr.mxu0 0.0
    %1190 = vmatpush1.msra.mxu0 0.0
    %1191 = vmatprep.subr.mxu0 0.0
    %1192 = vmatpush1.msra.mxu0 0.0
    %1193 = vmatprep.subr.mxu0 0.0
    %1194 = vmatpush1.msra.mxu0 0.0
    %1195 = vmatprep.subr.mxu0 0.0
    %1196 = vmatpush1.msra.mxu0 0.0
    %1197 = vmatprep.mubr.f32.mxu0 0.0
    %1198 = vmatmul.mubr.f32.gmra.mrb[0].mxu0 %v1131
    %v1199 = vpop.f32.mrb[0].mxu0
    %v1200 = vadd.f32 0.0, %v1199
    %v1201 = vpop.f32.mrb[0].mxu0
    %1202 = vdwg.mxu0
    %vm1203 = vcmp.gt.f32.partialorder %v1200, 0.0
    %v1204 = vmul.f32 %v1200, 1.442695
    %v1205 = vpow.pop %v1204
    %v1206 = vsub.f32 %v1205, 1.0
    %v1207 = vsel %vm1203, %v1200, %v1206
    %v1208 = vadd.f32 %v1207, %v82
    %1210 = vrot.lane.b32.xlu0 %v901, 96
    %v1211 = vpop.permute.xlu0 %1210
    %1213 = vxpose.xlu0.b32.start [1/16] %v1211, 128
    %1214 = vxpose.xlu0.b32.cont [2/16] 0.0, 128
    %1215 = vxpose.xlu0.b32.cont [3/16] 0.0, 128
    %1216 = vxpose.xlu0.b32.cont [4/16] 0.0, 128
    %1217 = vxpose.xlu0.b32.cont [5/16] 0.0, 128
    %1218 = vxpose.xlu0.b32.cont [6/16] 0.0, 128
    %1219 = vxpose.xlu0.b32.cont [7/16] 0.0, 128
    %1220 = vxpose.xlu0.b32.cont [8/16] 0.0, 128
    %1221 = vxpose.xlu0.b32.cont [9/16] 0.0, 128
    %1222 = vxpose.xlu0.b32.cont [10/16] 0.0, 128
    %1223 = vxpose.xlu0.b32.cont [11/16] 0.0, 128
    %1224 = vxpose.xlu0.b32.cont [12/16] 0.0, 128
    %1225 = vxpose.xlu0.b32.cont [13/16] 0.0, 128
    %1226 = vxpose.xlu0.b32.cont [14/16] 0.0, 128
    %1227 = vxpose.xlu0.b32.cont [15/16] 0.0, 128
    %1228 = vxpose.xlu0.b32.end [16/16] 0.0, 128
    %v1229 = vpop.trf.xlu0
    %v1230 = vpop.trf.xlu0
    %v1231 = vpop.trf.xlu0
    %v1232 = vpop.trf.xlu0
    %v1233 = vpop.trf.xlu0
    %v1234 = vpop.trf.xlu0
    %v1235 = vpop.trf.xlu0
    %v1236 = vpop.trf.xlu0
    %v1237 = vpop.trf.xlu0
    %v1238 = vpop.trf.xlu0
    %v1239 = vpop.trf.xlu0
    %v1240 = vpop.trf.xlu0
    %v1241 = vpop.trf.xlu0
    %v1242 = vpop.trf.xlu0
    %v1243 = vpop.trf.xlu0
    %v1244 = vpop.trf.xlu0
    %v1245 = vlaneseq
    %v1246 = vshrl.u32 %v1245, 7
    %v1247 = vsub.s32 0, %v1246
    %v1248 = vrot.slane %v1229, %v1247
    %v1249 = vadd.f32 %v1248, %v81
    %v1250 = vsel %vm226, %v1249, -inf
    %1251 = vmax.xlane.f32.xlu0 %v1250
    %v1252 = vpop.xlane.xlu0 %1251
    %v1253 = vsub.f32 %v1249, %v1252
    %v1254 = vmul.f32 %v1253, 1.442695
    %v1255 = vpow.pop %v1254
    %v1256 = vsel %vm226, %v1255, 0.0
    %1257 = vadd.xlane.f32.xlu0 %v1256
    %v1258 = vpop.xlane.xlu0 %1257
    %v1259 = vrcp.pop %v1258
    %v1260 = vmul.f32 1.0, %v1259
    %v1261 = vmul.f32 %v1255, %v1260
    %v1263 = vsel %vm226, %v1261, 0
    %1265 = vmatprep.subr.mxu0 0.0
    %1266 = vmatpush1.msra.mxu0 %v889
    %1267 = vmatprep.subr.mxu0 0.0
    %1268 = vmatpush1.msra.mxu0 0.0
    %1269 = vmatprep.subr.mxu0 0.0
    %1270 = vmatpush1.msra.mxu0 0.0
    %1271 = vmatprep.subr.mxu0 0.0
    %1272 = vmatpush1.msra.mxu0 0.0
    %1273 = vmatprep.subr.mxu0 0.0
    %1274 = vmatpush1.msra.mxu0 0.0
    %1275 = vmatprep.subr.mxu0 0.0
    %1276 = vmatpush1.msra.mxu0 0.0
    %1277 = vmatprep.subr.mxu0 0.0
    %1278 = vmatpush1.msra.mxu0 0.0
    %1279 = vmatprep.subr.mxu0 0.0
    %1280 = vmatpush1.msra.mxu0 0.0
    %1281 = vmatprep.subr.mxu0 0.0
    %1282 = vmatpush1.msra.mxu0 0.0
    %1283 = vmatprep.subr.mxu0 0.0
    %1284 = vmatpush1.msra.mxu0 0.0
    %1285 = vmatprep.subr.mxu0 0.0
    %1286 = vmatpush1.msra.mxu0 0.0
    %1287 = vmatprep.subr.mxu0 0.0
    %1288 = vmatpush1.msra.mxu0 0.0
    %1289 = vmatprep.subr.mxu0 0.0
    %1290 = vmatpush1.msra.mxu0 0.0
    %1291 = vmatprep.subr.mxu0 0.0
    %1292 = vmatpush1.msra.mxu0 0.0
    %1293 = vmatprep.subr.mxu0 0.0
    %1294 = vmatpush1.msra.mxu0 0.0
    %1295 = vmatprep.subr.mxu0 0.0
    %1296 = vmatpush1.msra.mxu0 0.0
    %1297 = vmatprep.subr.mxu0 0.0
    %1298 = vmatpush1.msra.mxu0 0.0
    %1299 = vmatprep.subr.mxu0 0.0
    %1300 = vmatpush1.msra.mxu0 0.0
    %1301 = vmatprep.subr.mxu0 0.0
    %1302 = vmatpush1.msra.mxu0 0.0
    %1303 = vmatprep.subr.mxu0 0.0
    %1304 = vmatpush1.msra.mxu0 0.0
    %1305 = vmatprep.subr.mxu0 0.0
    %1306 = vmatpush1.msra.mxu0 0.0
    %1307 = vmatprep.subr.mxu0 0.0
    %1308 = vmatpush1.msra.mxu0 0.0
    %1309 = vmatprep.subr.mxu0 0.0
    %1310 = vmatpush1.msra.mxu0 0.0
    %1311 = vmatprep.subr.mxu0 0.0
    %1312 = vmatpush1.msra.mxu0 0.0
    %1313 = vmatprep.subr.mxu0 0.0
    %1314 = vmatpush1.msra.mxu0 0.0
    %1315 = vmatprep.subr.mxu0 0.0
    %1316 = vmatpush1.msra.mxu0 0.0
    %1317 = vmatprep.subr.mxu0 0.0
    %1318 = vmatpush1.msra.mxu0 0.0
    %1319 = vmatprep.subr.mxu0 0.0
    %1320 = vmatpush1.msra.mxu0 0.0
    %1321 = vmatprep.subr.mxu0 0.0
    %1322 = vmatpush1.msra.mxu0 0.0
    %1323 = vmatprep.subr.mxu0 0.0
    %1324 = vmatpush1.msra.mxu0 0.0
    %1325 = vmatprep.subr.mxu0 0.0
    %1326 = vmatpush1.msra.mxu0 0.0
    %1327 = vmatprep.subr.mxu0 0.0
    %1328 = vmatpush1.msra.mxu0 0.0
    %1329 = vmatprep.mubr.f32.mxu0 0.0
    %1330 = vmatmul.mubr.f32.gmra.mrb[0].mxu0 %v1263
    %v1331 = vpop.f32.mrb[0].mxu0
    %v1332 = vadd.f32 0.0, %v1331
    %v1333 = vpop.f32.mrb[0].mxu0
    %1334 = vdwg.mxu0
    %1336 = vrot.lane.b32.xlu0 %v889, 95
    %v1337 = vpop.permute.xlu0 %1336
    %1339 = vxpose.xlu0.b32.start [1/16] %v1337, 128
    %1340 = vxpose.xlu0.b32.cont [2/16] 0.0, 128
    %1341 = vxpose.xlu0.b32.cont [3/16] 0.0, 128
    %1342 = vxpose.xlu0.b32.cont [4/16] 0.0, 128
    %1343 = vxpose.xlu0.b32.cont [5/16] 0.0, 128
    %1344 = vxpose.xlu0.b32.cont [6/16] 0.0, 128
    %1345 = vxpose.xlu0.b32.cont [7/16] 0.0, 128
    %1346 = vxpose.xlu0.b32.cont [8/16] 0.0, 128
    %1347 = vxpose.xlu0.b32.cont [9/16] 0.0, 128
    %1348 = vxpose.xlu0.b32.cont [10/16] 0.0, 128
    %1349 = vxpose.xlu0.b32.cont [11/16] 0.0, 128
    %1350 = vxpose.xlu0.b32.cont [12/16] 0.0, 128
    %1351 = vxpose.xlu0.b32.cont [13/16] 0.0, 128
    %1352 = vxpose.xlu0.b32.cont [14/16] 0.0, 128
    %1353 = vxpose.xlu0.b32.cont [15/16] 0.0, 128
    %1354 = vxpose.xlu0.b32.end [16/16] 0.0, 128
    %v1355 = vpop.trf.xlu0
    %v1356 = vpop.trf.xlu0
    %v1357 = vpop.trf.xlu0
    %v1358 = vpop.trf.xlu0
    %v1359 = vpop.trf.xlu0
    %v1360 = vpop.trf.xlu0
    %v1361 = vpop.trf.xlu0
    %v1362 = vpop.trf.xlu0
    %v1363 = vpop.trf.xlu0
    %v1364 = vpop.trf.xlu0
    %v1365 = vpop.trf.xlu0
    %v1366 = vpop.trf.xlu0
    %v1367 = vpop.trf.xlu0
    %v1368 = vpop.trf.xlu0
    %v1369 = vpop.trf.xlu0
    %v1370 = vpop.trf.xlu0
    %1372 = vset.pattern.permute.xlu0 34
    %1373 = vperm.xlu0 %1372, %v1332
    %v1374 = vpop.permute.xlu0 %1373
    %v1376 = vlaneseq
    %v1377 = vshrl.u32 %v1376, 7
    %v1378 = vsub.s32 0, %v1377
    %v1379 = vrot.slane %v1355, %v1378
    %v1380 = vadd.f32 %v1374, %v1379
    %vm1381 = vcmp.gt.f32.partialorder %v1380, 0.0
    %v1382 = vmul.f32 %v1380, 0.2
    %v1383 = vsel %vm1381, %v1380, %v1382
    %v1384 = vadd.f32 %v1383, %v81
    %v1385 = vsel %vm226, %v1384, -inf
    %v1386 = vrot.slane %v1385, 4
    %v1387 = vmax.f32 %v1385, %v1386
    %v1388 = vrot.slane %v1387, 2
    %v1389 = vmax.f32 %v1387, %v1388
    %v1390 = vrot.slane %v1389, 1
    %v1391 = vmax.f32 %v1389, %v1390
    %v1392 = vsub.f32 %v1384, %v1391
    %v1393 = vmul.f32 %v1392, 1.442695
    %v1394 = vpow.pop %v1393
    %v1395 = vsel %vm226, %v1394, 0.0
    %v1396 = vrot.slane %v1395, 4
    %v1397 = vadd.f32 %v1395, %v1396
    %v1398 = vrot.slane %v1397, 2
    %v1399 = vadd.f32 %v1397, %v1398
    %v1400 = vrot.slane %v1399, 1
    %v1401 = vadd.f32 %v1399, %v1400
    %v1402 = vrcp.pop %v1401
    %v1403 = vmul.f32 1.0, %v1402
    %v1404 = vmul.f32 %v1394, %v1403
    %1405 = vxpose.xlu0.b32.start [1/16] %v1404, 128
    %1406 = vxpose.xlu0.b32.cont [2/16] 0.0, 128
    %1407 = vxpose.xlu0.b32.cont [3/16] 0.0, 128
    %1408 = vxpose.xlu0.b32.cont [4/16] 0.0, 128
    %1409 = vxpose.xlu0.b32.cont [5/16] 0.0, 128
    %1410 = vxpose.xlu0.b32.cont [6/16] 0.0, 128
    %1411 = vxpose.xlu0.b32.cont [7/16] 0.0, 128
    %1412 = vxpose.xlu0.b32.cont [8/16] 0.0, 128
    %1413 = vxpose.xlu0.b32.cont [9/16] 0.0, 128
    %1414 = vxpose.xlu0.b32.cont [10/16] 0.0, 128
    %1415 = vxpose.xlu0.b32.cont [11/16] 0.0, 128
    %1416 = vxpose.xlu0.b32.cont [12/16] 0.0, 128
    %1417 = vxpose.xlu0.b32.cont [13/16] 0.0, 128
    %1418 = vxpose.xlu0.b32.cont [14/16] 0.0, 128
    %1419 = vxpose.xlu0.b32.cont [15/16] 0.0, 128
    %1420 = vxpose.xlu0.b32.end [16/16] 0.0, 128
    %v1421 = vpop.trf.xlu0
    %v1422 = vpop.trf.xlu0
    %v1423 = vpop.trf.xlu0
    %v1424 = vpop.trf.xlu0
    %v1425 = vpop.trf.xlu0
    %v1426 = vpop.trf.xlu0
    %v1427 = vpop.trf.xlu0
    %v1428 = vpop.trf.xlu0
    %v1429 = vpop.trf.xlu0
    %v1430 = vpop.trf.xlu0
    %v1431 = vpop.trf.xlu0
    %v1432 = vpop.trf.xlu0
    %v1433 = vpop.trf.xlu0
    %v1434 = vpop.trf.xlu0
    %v1435 = vpop.trf.xlu0
    %v1436 = vpop.trf.xlu0
    %v1438 = vsel %vm226, %v1421, 0
    %1440 = vmatprep.subr.mxu0 0.0
    %1441 = vmatpush1.msra.mxu0 %v1332
    %1442 = vmatprep.subr.mxu0 0.0
    %1443 = vmatpush1.msra.mxu0 0.0
    %1444 = vmatprep.subr.mxu0 0.0
    %1445 = vmatpush1.msra.mxu0 0.0
    %1446 = vmatprep.subr.mxu0 0.0
    %1447 = vmatpush1.msra.mxu0 0.0
    %1448 = vmatprep.subr.mxu0 0.0
    %1449 = vmatpush1.msra.mxu0 0.0
    %1450 = vmatprep.subr.mxu0 0.0
    %1451 = vmatpush1.msra.mxu0 0.0
    %1452 = vmatprep.subr.mxu0 0.0
    %1453 = vmatpush1.msra.mxu0 0.0
    %1454 = vmatprep.subr.mxu0 0.0
    %1455 = vmatpush1.msra.mxu0 0.0
    %1456 = vmatprep.subr.mxu0 0.0
    %1457 = vmatpush1.msra.mxu0 0.0
    %1458 = vmatprep.subr.mxu0 0.0
    %1459 = vmatpush1.msra.mxu0 0.0
    %1460 = vmatprep.subr.mxu0 0.0
    %1461 = vmatpush1.msra.mxu0 0.0
    %1462 = vmatprep.subr.mxu0 0.0
    %1463 = vmatpush1.msra.mxu0 0.0
    %1464 = vmatprep.subr.mxu0 0.0
    %1465 = vmatpush1.msra.mxu0 0.0
    %1466 = vmatprep.subr.mxu0 0.0
    %1467 = vmatpush1.msra.mxu0 0.0
    %1468 = vmatprep.subr.mxu0 0.0
    %1469 = vmatpush1.msra.mxu0 0.0
    %1470 = vmatprep.subr.mxu0 0.0
    %1471 = vmatpush1.msra.mxu0 0.0
    %1472 = vmatprep.subr.mxu0 0.0
    %1473 = vmatpush1.msra.mxu0 0.0
    %1474 = vmatprep.subr.mxu0 0.0
    %1475 = vmatpush1.msra.mxu0 0.0
    %1476 = vmatprep.subr.mxu0 0.0
    %1477 = vmatpush1.msra.mxu0 0.0
    %1478 = vmatprep.subr.mxu0 0.0
    %1479 = vmatpush1.msra.mxu0 0.0
    %1480 = vmatprep.subr.mxu0 0.0
    %1481 = vmatpush1.msra.mxu0 0.0
    %1482 = vmatprep.subr.mxu0 0.0
    %1483 = vmatpush1.msra.mxu0 0.0
    %1484 = vmatprep.subr.mxu0 0.0
    %1485 = vmatpush1.msra.mxu0 0.0
    %1486 = vmatprep.subr.mxu0 0.0
    %1487 = vmatpush1.msra.mxu0 0.0
    %1488 = vmatprep.subr.mxu0 0.0
    %1489 = vmatpush1.msra.mxu0 0.0
    %1490 = vmatprep.subr.mxu0 0.0
    %1491 = vmatpush1.msra.mxu0 0.0
    %1492 = vmatprep.subr.mxu0 0.0
    %1493 = vmatpush1.msra.mxu0 0.0
    %1494 = vmatprep.subr.mxu0 0.0
    %1495 = vmatpush1.msra.mxu0 0.0
    %1496 = vmatprep.subr.mxu0 0.0
    %1497 = vmatpush1.msra.mxu0 0.0
    %1498 = vmatprep.subr.mxu0 0.0
    %1499 = vmatpush1.msra.mxu0 0.0
    %1500 = vmatprep.subr.mxu0 0.0
    %1501 = vmatpush1.msra.mxu0 0.0
    %1502 = vmatprep.subr.mxu0 0.0
    %1503 = vmatpush1.msra.mxu0 0.0
    %1504 = vmatprep.mubr.f32.mxu0 0.0
    %1505 = vmatmul.mubr.f32.gmra.mrb[0].mxu0 %v1438
    %v1506 = vpop.f32.mrb[0].mxu0
    %v1507 = vadd.f32 0.0, %v1506
    %v1508 = vpop.f32.mrb[0].mxu0
    %1509 = vdwg.mxu0
    %vm1510 = vcmp.gt.f32.partialorder %v1507, 0.0
    %v1511 = vmul.f32 %v1507, 1.442695
    %v1512 = vpow.pop %v1511
    %v1513 = vsub.f32 %v1512, 1.0
    %v1514 = vsel %vm1510, %v1507, %v1513
    %v1515 = vadd.f32 %v1514, %v83
    %s1516 = scalar_lea.vmem [#allocation8], 256
    %v1517 = vld [vmem:[%s1516] sm:$0xff]
    %v1518 = vld [vmem:[%s1516 + $0x8] sm:$0xff]
    %v1519 = vld [vmem:[%s1516 + $0x10] sm:$0xff]
    %v1520 = vld [vmem:[%s1516 + $0x18] sm:$0xff]
    %v1521 = vld [vmem:[%s1516 + $0x20] sm:$0xff]
    %v1522 = vld [vmem:[%s1516 + $0x28] sm:$0xff]
    %v1523 = vld [vmem:[%s1516 + $0x30] sm:$0xff]
    %v1524 = vld [vmem:[%s1516 + $0x38] sm:$0xff]
    %v1525 = vld [vmem:[%s1516 + $0x40] sm:$0xff]
    %v1526 = vld [vmem:[%s1516 + $0x48] sm:$0xff]
    %v1527 = vld [vmem:[%s1516 + $0x50] sm:$0xff]
    %v1528 = vld [vmem:[%s1516 + $0x58] sm:$0xff]
    %v1529 = vld [vmem:[%s1516 + $0x60] sm:$0xff]
    %v1530 = vld [vmem:[%s1516 + $0x68] sm:$0xff]
    %v1531 = vld [vmem:[%s1516 + $0x70] sm:$0xff]
    %v1532 = vld [vmem:[%s1516 + $0x78] sm:$0xff]
    %1533 = vmatprep.subr.mxu0 0.0
    %1534 = vmatpush1.msra.mxu0 %v1517
    %1535 = vmatprep.subr.mxu0 0.0
    %1536 = vmatpush1.msra.mxu0 %v1518
    %1537 = vmatprep.subr.mxu0 0.0
    %1538 = vmatpush1.msra.mxu0 %v1519
    %1539 = vmatprep.subr.mxu0 0.0
    %1540 = vmatpush1.msra.mxu0 %v1520
    %1541 = vmatprep.subr.mxu0 0.0
    %1542 = vmatpush1.msra.mxu0 %v1521
    %1543 = vmatprep.subr.mxu0 0.0
    %1544 = vmatpush1.msra.mxu0 %v1522
    %1545 = vmatprep.subr.mxu0 0.0
    %1546 = vmatpush1.msra.mxu0 %v1523
    %1547 = vmatprep.subr.mxu0 0.0
    %1548 = vmatpush1.msra.mxu0 %v1524
    %1549 = vmatprep.subr.mxu0 0.0
    %1550 = vmatpush1.msra.mxu0 %v1525
    %1551 = vmatprep.subr.mxu0 0.0
    %1552 = vmatpush1.msra.mxu0 %v1526
    %1553 = vmatprep.subr.mxu0 0.0
    %1554 = vmatpush1.msra.mxu0 %v1527
    %1555 = vmatprep.subr.mxu0 0.0
    %1556 = vmatpush1.msra.mxu0 %v1528
    %1557 = vmatprep.subr.mxu0 0.0
    %1558 = vmatpush1.msra.mxu0 %v1529
    %1559 = vmatprep.subr.mxu0 0.0
    %1560 = vmatpush1.msra.mxu0 %v1530
    %1561 = vmatprep.subr.mxu0 0.0
    %1562 = vmatpush1.msra.mxu0 %v1531
    %1563 = vmatprep.subr.mxu0 0.0
    %1564 = vmatpush1.msra.mxu0 %v1532
    %1565 = vmatprep.subr.mxu0 0.0
    %1566 = vmatpush1.msra.mxu0 0.0
    %1567 = vmatprep.subr.mxu0 0.0
    %1568 = vmatpush1.msra.mxu0 0.0
    %1569 = vmatprep.subr.mxu0 0.0
    %1570 = vmatpush1.msra.mxu0 0.0
    %1571 = vmatprep.subr.mxu0 0.0
    %1572 = vmatpush1.msra.mxu0 0.0
    %1573 = vmatprep.subr.mxu0 0.0
    %1574 = vmatpush1.msra.mxu0 0.0
    %1575 = vmatprep.subr.mxu0 0.0
    %1576 = vmatpush1.msra.mxu0 0.0
    %1577 = vmatprep.subr.mxu0 0.0
    %1578 = vmatpush1.msra.mxu0 0.0
    %1579 = vmatprep.subr.mxu0 0.0
    %1580 = vmatpush1.msra.mxu0 0.0
    %1581 = vmatprep.subr.mxu0 0.0
    %1582 = vmatpush1.msra.mxu0 0.0
    %1583 = vmatprep.subr.mxu0 0.0
    %1584 = vmatpush1.msra.mxu0 0.0
    %1585 = vmatprep.subr.mxu0 0.0
    %1586 = vmatpush1.msra.mxu0 0.0
    %1587 = vmatprep.subr.mxu0 0.0
    %1588 = vmatpush1.msra.mxu0 0.0
    %1589 = vmatprep.subr.mxu0 0.0
    %1590 = vmatpush1.msra.mxu0 0.0
    %1591 = vmatprep.subr.mxu0 0.0
    %1592 = vmatpush1.msra.mxu0 0.0
    %1593 = vmatprep.subr.mxu0 0.0
    %1594 = vmatpush1.msra.mxu0 0.0
    %1595 = vmatprep.subr.mxu0 0.0
    %1596 = vmatpush1.msra.mxu0 0.0
    %1597 = vmatprep.mubr.f32.mxu0 0.0
    %1598 = vmatmul.mubr.f32.gmra.mrb[0].mxu0 %v1208
    %v1599 = vpop.f32.mrb[0].mxu0
    %v1600 = vadd.f32 0.0, %v1599
    %v1601 = vpop.f32.mrb[0].mxu0
    %1602 = vmatprep.mubr.f32.mxu0 0.0
    %1603 = vmatmul.mubr.f32.gmra.mrb[0].mxu0 %v1515
    %v1604 = vpop.f32.mrb[0].mxu0
    %v1605 = vadd.f32 0.0, %v1604
    %v1606 = vpop.f32.mrb[0].mxu0
    %1607 = vdwg.mxu0
    %s1608 = sld [smem:[#allocation9 + $0x2]]
    %v1609 = vstv %s1608
    %v1610 = vadd.f32 %v1609, %v1600
    %v1611 = vadd.f32 %v1609, %v1605
    %vm1612 = vcmp.gt.f32.partialorder %v1610, 0.0
    %vm1613 = vcmp.gt.f32.partialorder %v1611, 0.0
    %v1614 = vmul.f32 %v1610, 0.2
    %v1615 = vmul.f32 %v1611, 0.2
    %v1616 = vsel %vm1612, %v1610, %v1614
    %v1617 = vsel %vm1613, %v1611, %v1615
    %1619 = vrot.lane.b32.xlu0 %v1616, 96
    %v1620 = vpop.permute.xlu0 %1619
    %1622 = vxpose.xlu0.b32.start [1/16] %v1620, 128
    %1623 = vxpose.xlu0.b32.cont [2/16] 0.0, 128
    %1624 = vxpose.xlu0.b32.cont [3/16] 0.0, 128
    %1625 = vxpose.xlu0.b32.cont [4/16] 0.0, 128
    %1626 = vxpose.xlu0.b32.cont [5/16] 0.0, 128
    %1627 = vxpose.xlu0.b32.cont [6/16] 0.0, 128
    %1628 = vxpose.xlu0.b32.cont [7/16] 0.0, 128
    %1629 = vxpose.xlu0.b32.cont [8/16] 0.0, 128
    %1630 = vxpose.xlu0.b32.cont [9/16] 0.0, 128
    %1631 = vxpose.xlu0.b32.cont [10/16] 0.0, 128
    %1632 = vxpose.xlu0.b32.cont [11/16] 0.0, 128
    %1633 = vxpose.xlu0.b32.cont [12/16] 0.0, 128
    %1634 = vxpose.xlu0.b32.cont [13/16] 0.0, 128
    %1635 = vxpose.xlu0.b32.cont [14/16] 0.0, 128
    %1636 = vxpose.xlu0.b32.cont [15/16] 0.0, 128
    %1637 = vxpose.xlu0.b32.end [16/16] 0.0, 128
    %v1638 = vpop.trf.xlu0
    %v1639 = vpop.trf.xlu0
    %v1640 = vpop.trf.xlu0
    %v1641 = vpop.trf.xlu0
    %v1642 = vpop.trf.xlu0
    %v1643 = vpop.trf.xlu0
    %v1644 = vpop.trf.xlu0
    %v1645 = vpop.trf.xlu0
    %v1646 = vpop.trf.xlu0
    %v1647 = vpop.trf.xlu0
    %v1648 = vpop.trf.xlu0
    %v1649 = vpop.trf.xlu0
    %v1650 = vpop.trf.xlu0
    %v1651 = vpop.trf.xlu0
    %v1652 = vpop.trf.xlu0
    %v1653 = vpop.trf.xlu0
    %v1654 = vlaneseq
    %v1655 = vshrl.u32 %v1654, 7
    %v1656 = vsub.s32 0, %v1655
    %v1657 = vrot.slane %v1638, %v1656
    %v1658 = vadd.f32 %v1657, %v80
    %v1659 = vsel %vm226, %v1658, -inf
    %1660 = vmax.xlane.f32.xlu0 %v1659
    %v1661 = vpop.xlane.xlu0 %1660
    %v1662 = vsub.f32 %v1658, %v1661
    %v1663 = vmul.f32 %v1662, 1.442695
    %v1664 = vpow.pop %v1663
    %v1665 = vsel %vm226, %v1664, 0.0
    %1666 = vadd.xlane.f32.xlu0 %v1665
    %v1667 = vpop.xlane.xlu0 %1666
    %v1668 = vrcp.pop %v1667
    %v1669 = vmul.f32 1.0, %v1668
    %v1670 = vmul.f32 %v1664, %v1669
    %v1672 = vsel %vm226, %v1670, 0
    %1674 = vmatprep.subr.mxu0 0.0
    %1675 = vmatpush1.msra.mxu0 %v1600
    %1676 = vmatprep.subr.mxu0 0.0
    %1677 = vmatpush1.msra.mxu0 0.0
    %1678 = vmatprep.subr.mxu0 0.0
    %1679 = vmatpush1.msra.mxu0 0.0
    %1680 = vmatprep.subr.mxu0 0.0
    %1681 = vmatpush1.msra.mxu0 0.0
    %1682 = vmatprep.subr.mxu0 0.0
    %1683 = vmatpush1.msra.mxu0 0.0
    %1684 = vmatprep.subr.mxu0 0.0
    %1685 = vmatpush1.msra.mxu0 0.0
    %1686 = vmatprep.subr.mxu0 0.0
    %1687 = vmatpush1.msra.mxu0 0.0
    %1688 = vmatprep.subr.mxu0 0.0
    %1689 = vmatpush1.msra.mxu0 0.0
    %1690 = vmatprep.subr.mxu0 0.0
    %1691 = vmatpush1.msra.mxu0 0.0
    %1692 = vmatprep.subr.mxu0 0.0
    %1693 = vmatpush1.msra.mxu0 0.0
    %1694 = vmatprep.subr.mxu0 0.0
    %1695 = vmatpush1.msra.mxu0 0.0
    %1696 = vmatprep.subr.mxu0 0.0
    %1697 = vmatpush1.msra.mxu0 0.0
    %1698 = vmatprep.subr.mxu0 0.0
    %1699 = vmatpush1.msra.mxu0 0.0
    %1700 = vmatprep.subr.mxu0 0.0
    %1701 = vmatpush1.msra.mxu0 0.0
    %1702 = vmatprep.subr.mxu0 0.0
    %1703 = vmatpush1.msra.mxu0 0.0
    %1704 = vmatprep.subr.mxu0 0.0
    %1705 = vmatpush1.msra.mxu0 0.0
    %1706 = vmatprep.subr.mxu0 0.0
    %1707 = vmatpush1.msra.mxu0 0.0
    %1708 = vmatprep.subr.mxu0 0.0
    %1709 = vmatpush1.msra.mxu0 0.0
    %1710 = vmatprep.subr.mxu0 0.0
    %1711 = vmatpush1.msra.mxu0 0.0
    %1712 = vmatprep.subr.mxu0 0.0
    %1713 = vmatpush1.msra.mxu0 0.0
    %1714 = vmatprep.subr.mxu0 0.0
    %1715 = vmatpush1.msra.mxu0 0.0
    %1716 = vmatprep.subr.mxu0 0.0
    %1717 = vmatpush1.msra.mxu0 0.0
    %1718 = vmatprep.subr.mxu0 0.0
    %1719 = vmatpush1.msra.mxu0 0.0
    %1720 = vmatprep.subr.mxu0 0.0
    %1721 = vmatpush1.msra.mxu0 0.0
    %1722 = vmatprep.subr.mxu0 0.0
    %1723 = vmatpush1.msra.mxu0 0.0
    %1724 = vmatprep.subr.mxu0 0.0
    %1725 = vmatpush1.msra.mxu0 0.0
    %1726 = vmatprep.subr.mxu0 0.0
    %1727 = vmatpush1.msra.mxu0 0.0
    %1728 = vmatprep.subr.mxu0 0.0
    %1729 = vmatpush1.msra.mxu0 0.0
    %1730 = vmatprep.subr.mxu0 0.0
    %1731 = vmatpush1.msra.mxu0 0.0
    %1732 = vmatprep.subr.mxu0 0.0
    %1733 = vmatpush1.msra.mxu0 0.0
    %1734 = vmatprep.subr.mxu0 0.0
    %1735 = vmatpush1.msra.mxu0 0.0
    %1736 = vmatprep.subr.mxu0 0.0
    %1737 = vmatpush1.msra.mxu0 0.0
    %1738 = vmatprep.mubr.f32.mxu0 0.0
    %1739 = vmatmul.mubr.f32.gmra.mrb[0].mxu0 %v1672
    %v1740 = vpop.f32.mrb[0].mxu0
    %v1741 = vadd.f32 0.0, %v1740
    %v1742 = vpop.f32.mrb[0].mxu0
    %1743 = vdwg.mxu0
    %1745 = vrot.lane.b32.xlu0 %v1600, 95
    %v1746 = vpop.permute.xlu0 %1745
    %1748 = vxpose.xlu0.b32.start [1/16] %v1746, 128
    %1749 = vxpose.xlu0.b32.cont [2/16] 0.0, 128
    %1750 = vxpose.xlu0.b32.cont [3/16] 0.0, 128
    %1751 = vxpose.xlu0.b32.cont [4/16] 0.0, 128
    %1752 = vxpose.xlu0.b32.cont [5/16] 0.0, 128
    %1753 = vxpose.xlu0.b32.cont [6/16] 0.0, 128
    %1754 = vxpose.xlu0.b32.cont [7/16] 0.0, 128
    %1755 = vxpose.xlu0.b32.cont [8/16] 0.0, 128
    %1756 = vxpose.xlu0.b32.cont [9/16] 0.0, 128
    %1757 = vxpose.xlu0.b32.cont [10/16] 0.0, 128
    %1758 = vxpose.xlu0.b32.cont [11/16] 0.0, 128
    %1759 = vxpose.xlu0.b32.cont [12/16] 0.0, 128
    %1760 = vxpose.xlu0.b32.cont [13/16] 0.0, 128
    %1761 = vxpose.xlu0.b32.cont [14/16] 0.0, 128
    %1762 = vxpose.xlu0.b32.cont [15/16] 0.0, 128
    %1763 = vxpose.xlu0.b32.end [16/16] 0.0, 128
    %v1764 = vpop.trf.xlu0
    %v1765 = vpop.trf.xlu0
    %v1766 = vpop.trf.xlu0
    %v1767 = vpop.trf.xlu0
    %v1768 = vpop.trf.xlu0
    %v1769 = vpop.trf.xlu0
    %v1770 = vpop.trf.xlu0
    %v1771 = vpop.trf.xlu0
    %v1772 = vpop.trf.xlu0
    %v1773 = vpop.trf.xlu0
    %v1774 = vpop.trf.xlu0
    %v1775 = vpop.trf.xlu0
    %v1776 = vpop.trf.xlu0
    %v1777 = vpop.trf.xlu0
    %v1778 = vpop.trf.xlu0
    %v1779 = vpop.trf.xlu0
    %1781 = vset.pattern.permute.xlu0 34
    %1782 = vperm.xlu0 %1781, %v1741
    %v1783 = vpop.permute.xlu0 %1782
    %v1785 = vlaneseq
    %v1786 = vshrl.u32 %v1785, 7
    %v1787 = vsub.s32 0, %v1786
    %v1788 = vrot.slane %v1764, %v1787
    %v1789 = vadd.f32 %v1783, %v1788
    %vm1790 = vcmp.gt.f32.partialorder %v1789, 0.0
    %v1791 = vmul.f32 %v1789, 0.2
    %v1792 = vsel %vm1790, %v1789, %v1791
    %v1793 = vadd.f32 %v1792, %v80
    %v1794 = vsel %vm226, %v1793, -inf
    %v1795 = vrot.slane %v1794, 4
    %v1796 = vmax.f32 %v1794, %v1795
    %v1797 = vrot.slane %v1796, 2
    %v1798 = vmax.f32 %v1796, %v1797
    %v1799 = vrot.slane %v1798, 1
    %v1800 = vmax.f32 %v1798, %v1799
    %v1801 = vsub.f32 %v1793, %v1800
    %v1802 = vmul.f32 %v1801, 1.442695
    %v1803 = vpow.pop %v1802
    %v1804 = vsel %vm226, %v1803, 0.0
    %v1805 = vrot.slane %v1804, 4
    %v1806 = vadd.f32 %v1804, %v1805
    %v1807 = vrot.slane %v1806, 2
    %v1808 = vadd.f32 %v1806, %v1807
    %v1809 = vrot.slane %v1808, 1
    %v1810 = vadd.f32 %v1808, %v1809
    %v1811 = vrcp.pop %v1810
    %v1812 = vmul.f32 1.0, %v1811
    %v1813 = vmul.f32 %v1803, %v1812
    %1814 = vxpose.xlu0.b32.start [1/16] %v1813, 128
    %1815 = vxpose.xlu0.b32.cont [2/16] 0.0, 128
    %1816 = vxpose.xlu0.b32.cont [3/16] 0.0, 128
    %1817 = vxpose.xlu0.b32.cont [4/16] 0.0, 128
    %1818 = vxpose.xlu0.b32.cont [5/16] 0.0, 128
    %1819 = vxpose.xlu0.b32.cont [6/16] 0.0, 128
    %1820 = vxpose.xlu0.b32.cont [7/16] 0.0, 128
    %1821 = vxpose.xlu0.b32.cont [8/16] 0.0, 128
    %1822 = vxpose.xlu0.b32.cont [9/16] 0.0, 128
    %1823 = vxpose.xlu0.b32.cont [10/16] 0.0, 128
    %1824 = vxpose.xlu0.b32.cont [11/16] 0.0, 128
    %1825 = vxpose.xlu0.b32.cont [12/16] 0.0, 128
    %1826 = vxpose.xlu0.b32.cont [13/16] 0.0, 128
    %1827 = vxpose.xlu0.b32.cont [14/16] 0.0, 128
    %1828 = vxpose.xlu0.b32.cont [15/16] 0.0, 128
    %1829 = vxpose.xlu0.b32.end [16/16] 0.0, 128
    %v1830 = vpop.trf.xlu0
    %v1831 = vpop.trf.xlu0
    %v1832 = vpop.trf.xlu0
    %v1833 = vpop.trf.xlu0
    %v1834 = vpop.trf.xlu0
    %v1835 = vpop.trf.xlu0
    %v1836 = vpop.trf.xlu0
    %v1837 = vpop.trf.xlu0
    %v1838 = vpop.trf.xlu0
    %v1839 = vpop.trf.xlu0
    %v1840 = vpop.trf.xlu0
    %v1841 = vpop.trf.xlu0
    %v1842 = vpop.trf.xlu0
    %v1843 = vpop.trf.xlu0
    %v1844 = vpop.trf.xlu0
    %v1845 = vpop.trf.xlu0
    %v1847 = vsel %vm226, %v1830, 0
    %1849 = vmatprep.subr.mxu0 0.0
    %1850 = vmatpush1.msra.mxu0 %v1741
    %1851 = vmatprep.subr.mxu0 0.0
    %1852 = vmatpush1.msra.mxu0 0.0
    %1853 = vmatprep.subr.mxu0 0.0
    %1854 = vmatpush1.msra.mxu0 0.0
    %1855 = vmatprep.subr.mxu0 0.0
    %1856 = vmatpush1.msra.mxu0 0.0
    %1857 = vmatprep.subr.mxu0 0.0
    %1858 = vmatpush1.msra.mxu0 0.0
    %1859 = vmatprep.subr.mxu0 0.0
    %1860 = vmatpush1.msra.mxu0 0.0
    %1861 = vmatprep.subr.mxu0 0.0
    %1862 = vmatpush1.msra.mxu0 0.0
    %1863 = vmatprep.subr.mxu0 0.0
    %1864 = vmatpush1.msra.mxu0 0.0
    %1865 = vmatprep.subr.mxu0 0.0
    %1866 = vmatpush1.msra.mxu0 0.0
    %1867 = vmatprep.subr.mxu0 0.0
    %1868 = vmatpush1.msra.mxu0 0.0
    %1869 = vmatprep.subr.mxu0 0.0
    %1870 = vmatpush1.msra.mxu0 0.0
    %1871 = vmatprep.subr.mxu0 0.0
    %1872 = vmatpush1.msra.mxu0 0.0
    %1873 = vmatprep.subr.mxu0 0.0
    %1874 = vmatpush1.msra.mxu0 0.0
    %1875 = vmatprep.subr.mxu0 0.0
    %1876 = vmatpush1.msra.mxu0 0.0
    %1877 = vmatprep.subr.mxu0 0.0
    %1878 = vmatpush1.msra.mxu0 0.0
    %1879 = vmatprep.subr.mxu0 0.0
    %1880 = vmatpush1.msra.mxu0 0.0
    %1881 = vmatprep.subr.mxu0 0.0
    %1882 = vmatpush1.msra.mxu0 0.0
    %1883 = vmatprep.subr.mxu0 0.0
    %1884 = vmatpush1.msra.mxu0 0.0
    %1885 = vmatprep.subr.mxu0 0.0
    %1886 = vmatpush1.msra.mxu0 0.0
    %1887 = vmatprep.subr.mxu0 0.0
    %1888 = vmatpush1.msra.mxu0 0.0
    %1889 = vmatprep.subr.mxu0 0.0
    %1890 = vmatpush1.msra.mxu0 0.0
    %1891 = vmatprep.subr.mxu0 0.0
    %1892 = vmatpush1.msra.mxu0 0.0
    %1893 = vmatprep.subr.mxu0 0.0
    %1894 = vmatpush1.msra.mxu0 0.0
    %1895 = vmatprep.subr.mxu0 0.0
    %1896 = vmatpush1.msra.mxu0 0.0
    %1897 = vmatprep.subr.mxu0 0.0
    %1898 = vmatpush1.msra.mxu0 0.0
    %1899 = vmatprep.subr.mxu0 0.0
    %1900 = vmatpush1.msra.mxu0 0.0
    %1901 = vmatprep.subr.mxu0 0.0
    %1902 = vmatpush1.msra.mxu0 0.0
    %1903 = vmatprep.subr.mxu0 0.0
    %1904 = vmatpush1.msra.mxu0 0.0
    %1905 = vmatprep.subr.mxu0 0.0
    %1906 = vmatpush1.msra.mxu0 0.0
    %1907 = vmatprep.subr.mxu0 0.0
    %1908 = vmatpush1.msra.mxu0 0.0
    %1909 = vmatprep.subr.mxu0 0.0
    %1910 = vmatpush1.msra.mxu0 0.0
    %1911 = vmatprep.subr.mxu0 0.0
    %1912 = vmatpush1.msra.mxu0 0.0
    %1913 = vmatprep.mubr.f32.mxu0 0.0
    %1914 = vmatmul.mubr.f32.gmra.mrb[0].mxu0 %v1847
    %v1915 = vpop.f32.mrb[0].mxu0
    %v1916 = vadd.f32 0.0, %v1915
    %v1917 = vpop.f32.mrb[0].mxu0
    %1918 = vdwg.mxu0
    %vm1919 = vcmp.gt.f32.partialorder %v1916, 0.0
    %v1920 = vmul.f32 %v1916, 1.442695
    %v1921 = vpow.pop %v1920
    %v1922 = vsub.f32 %v1921, 1.0
    %v1923 = vsel %vm1919, %v1916, %v1922
    %v1924 = vadd.f32 %v1923, %v82
    %1926 = vrot.lane.b32.xlu0 %v1617, 96
    %v1927 = vpop.permute.xlu0 %1926
    %1929 = vxpose.xlu0.b32.start [1/16] %v1927, 128
    %1930 = vxpose.xlu0.b32.cont [2/16] 0.0, 128
    %1931 = vxpose.xlu0.b32.cont [3/16] 0.0, 128
    %1932 = vxpose.xlu0.b32.cont [4/16] 0.0, 128
    %1933 = vxpose.xlu0.b32.cont [5/16] 0.0, 128
    %1934 = vxpose.xlu0.b32.cont [6/16] 0.0, 128
    %1935 = vxpose.xlu0.b32.cont [7/16] 0.0, 128
    %1936 = vxpose.xlu0.b32.cont [8/16] 0.0, 128
    %1937 = vxpose.xlu0.b32.cont [9/16] 0.0, 128
    %1938 = vxpose.xlu0.b32.cont [10/16] 0.0, 128
    %1939 = vxpose.xlu0.b32.cont [11/16] 0.0, 128
    %1940 = vxpose.xlu0.b32.cont [12/16] 0.0, 128
    %1941 = vxpose.xlu0.b32.cont [13/16] 0.0, 128
    %1942 = vxpose.xlu0.b32.cont [14/16] 0.0, 128
    %1943 = vxpose.xlu0.b32.cont [15/16] 0.0, 128
    %1944 = vxpose.xlu0.b32.end [16/16] 0.0, 128
    %v1945 = vpop.trf.xlu0
    %v1946 = vpop.trf.xlu0
    %v1947 = vpop.trf.xlu0
    %v1948 = vpop.trf.xlu0
    %v1949 = vpop.trf.xlu0
    %v1950 = vpop.trf.xlu0
    %v1951 = vpop.trf.xlu0
    %v1952 = vpop.trf.xlu0
    %v1953 = vpop.trf.xlu0
    %v1954 = vpop.trf.xlu0
    %v1955 = vpop.trf.xlu0
    %v1956 = vpop.trf.xlu0
    %v1957 = vpop.trf.xlu0
    %v1958 = vpop.trf.xlu0
    %v1959 = vpop.trf.xlu0
    %v1960 = vpop.trf.xlu0
    %v1961 = vlaneseq
    %v1962 = vshrl.u32 %v1961, 7
    %v1963 = vsub.s32 0, %v1962
    %v1964 = vrot.slane %v1945, %v1963
    %v1965 = vadd.f32 %v1964, %v81
    %v1966 = vsel %vm226, %v1965, -inf
    %1967 = vmax.xlane.f32.xlu0 %v1966
    %v1968 = vpop.xlane.xlu0 %1967
    %v1969 = vsub.f32 %v1965, %v1968
    %v1970 = vmul.f32 %v1969, 1.442695
    %v1971 = vpow.pop %v1970
    %v1972 = vsel %vm226, %v1971, 0.0
    %1973 = vadd.xlane.f32.xlu0 %v1972
    %v1974 = vpop.xlane.xlu0 %1973
    %v1975 = vrcp.pop %v1974
    %v1976 = vmul.f32 1.0, %v1975
    %v1977 = vmul.f32 %v1971, %v1976
    %v1979 = vsel %vm226, %v1977, 0
    %1981 = vmatprep.subr.mxu0 0.0
    %1982 = vmatpush1.msra.mxu0 %v1605
    %1983 = vmatprep.subr.mxu0 0.0
    %1984 = vmatpush1.msra.mxu0 0.0
    %1985 = vmatprep.subr.mxu0 0.0
    %1986 = vmatpush1.msra.mxu0 0.0
    %1987 = vmatprep.subr.mxu0 0.0
    %1988 = vmatpush1.msra.mxu0 0.0
    %1989 = vmatprep.subr.mxu0 0.0
    %1990 = vmatpush1.msra.mxu0 0.0
    %1991 = vmatprep.subr.mxu0 0.0
    %1992 = vmatpush1.msra.mxu0 0.0
    %1993 = vmatprep.subr.mxu0 0.0
    %1994 = vmatpush1.msra.mxu0 0.0
    %1995 = vmatprep.subr.mxu0 0.0
    %1996 = vmatpush1.msra.mxu0 0.0
    %1997 = vmatprep.subr.mxu0 0.0
    %1998 = vmatpush1.msra.mxu0 0.0
    %1999 = vmatprep.subr.mxu0 0.0
    %2000 = vmatpush1.msra.mxu0 0.0
    %2001 = vmatprep.subr.mxu0 0.0
    %2002 = vmatpush1.msra.mxu0 0.0
    %2003 = vmatprep.subr.mxu0 0.0
    %2004 = vmatpush1.msra.mxu0 0.0
    %2005 = vmatprep.subr.mxu0 0.0
    %2006 = vmatpush1.msra.mxu0 0.0
    %2007 = vmatprep.subr.mxu0 0.0
    %2008 = vmatpush1.msra.mxu0 0.0
    %2009 = vmatprep.subr.mxu0 0.0
    %2010 = vmatpush1.msra.mxu0 0.0
    %2011 = vmatprep.subr.mxu0 0.0
    %2012 = vmatpush1.msra.mxu0 0.0
    %2013 = vmatprep.subr.mxu0 0.0
    %2014 = vmatpush1.msra.mxu0 0.0
    %2015 = vmatprep.subr.mxu0 0.0
    %2016 = vmatpush1.msra.mxu0 0.0
    %2017 = vmatprep.subr.mxu0 0.0
    %2018 = vmatpush1.msra.mxu0 0.0
    %2019 = vmatprep.subr.mxu0 0.0
    %2020 = vmatpush1.msra.mxu0 0.0
    %2021 = vmatprep.subr.mxu0 0.0
    %2022 = vmatpush1.msra.mxu0 0.0
    %2023 = vmatprep.subr.mxu0 0.0
    %2024 = vmatpush1.msra.mxu0 0.0
    %2025 = vmatprep.subr.mxu0 0.0
    %2026 = vmatpush1.msra.mxu0 0.0
    %2027 = vmatprep.subr.mxu0 0.0
    %2028 = vmatpush1.msra.mxu0 0.0
    %2029 = vmatprep.subr.mxu0 0.0
    %2030 = vmatpush1.msra.mxu0 0.0
    %2031 = vmatprep.subr.mxu0 0.0
    %2032 = vmatpush1.msra.mxu0 0.0
    %2033 = vmatprep.subr.mxu0 0.0
    %2034 = vmatpush1.msra.mxu0 0.0
    %2035 = vmatprep.subr.mxu0 0.0
    %2036 = vmatpush1.msra.mxu0 0.0
    %2037 = vmatprep.subr.mxu0 0.0
    %2038 = vmatpush1.msra.mxu0 0.0
    %2039 = vmatprep.subr.mxu0 0.0
    %2040 = vmatpush1.msra.mxu0 0.0
    %2041 = vmatprep.subr.mxu0 0.0
    %2042 = vmatpush1.msra.mxu0 0.0
    %2043 = vmatprep.subr.mxu0 0.0
    %2044 = vmatpush1.msra.mxu0 0.0
    %2045 = vmatprep.mubr.f32.mxu0 0.0
    %2046 = vmatmul.mubr.f32.gmra.mrb[0].mxu0 %v1979
    %v2047 = vpop.f32.mrb[0].mxu0
    %v2048 = vadd.f32 0.0, %v2047
    %v2049 = vpop.f32.mrb[0].mxu0
    %2050 = vdwg.mxu0
    %2052 = vrot.lane.b32.xlu0 %v1605, 95
    %v2053 = vpop.permute.xlu0 %2052
    %2055 = vxpose.xlu0.b32.start [1/16] %v2053, 128
    %2056 = vxpose.xlu0.b32.cont [2/16] 0.0, 128
    %2057 = vxpose.xlu0.b32.cont [3/16] 0.0, 128
    %2058 = vxpose.xlu0.b32.cont [4/16] 0.0, 128
    %2059 = vxpose.xlu0.b32.cont [5/16] 0.0, 128
    %2060 = vxpose.xlu0.b32.cont [6/16] 0.0, 128
    %2061 = vxpose.xlu0.b32.cont [7/16] 0.0, 128
    %2062 = vxpose.xlu0.b32.cont [8/16] 0.0, 128
    %2063 = vxpose.xlu0.b32.cont [9/16] 0.0, 128
    %2064 = vxpose.xlu0.b32.cont [10/16] 0.0, 128
    %2065 = vxpose.xlu0.b32.cont [11/16] 0.0, 128
    %2066 = vxpose.xlu0.b32.cont [12/16] 0.0, 128
    %2067 = vxpose.xlu0.b32.cont [13/16] 0.0, 128
    %2068 = vxpose.xlu0.b32.cont [14/16] 0.0, 128
    %2069 = vxpose.xlu0.b32.cont [15/16] 0.0, 128
    %2070 = vxpose.xlu0.b32.end [16/16] 0.0, 128
    %v2071 = vpop.trf.xlu0
    %v2072 = vpop.trf.xlu0
    %v2073 = vpop.trf.xlu0
    %v2074 = vpop.trf.xlu0
    %v2075 = vpop.trf.xlu0
    %v2076 = vpop.trf.xlu0
    %v2077 = vpop.trf.xlu0
    %v2078 = vpop.trf.xlu0
    %v2079 = vpop.trf.xlu0
    %v2080 = vpop.trf.xlu0
    %v2081 = vpop.trf.xlu0
    %v2082 = vpop.trf.xlu0
    %v2083 = vpop.trf.xlu0
    %v2084 = vpop.trf.xlu0
    %v2085 = vpop.trf.xlu0
    %v2086 = vpop.trf.xlu0
    %2088 = vset.pattern.permute.xlu0 34
    %2089 = vperm.xlu0 %2088, %v2048
    %v2090 = vpop.permute.xlu0 %2089
    %v2092 = vlaneseq
    %v2093 = vshrl.u32 %v2092, 7
    %v2094 = vsub.s32 0, %v2093
    %v2095 = vrot.slane %v2071, %v2094
    %v2096 = vadd.f32 %v2090, %v2095
    %vm2097 = vcmp.gt.f32.partialorder %v2096, 0.0
    %v2098 = vmul.f32 %v2096, 0.2
    %v2099 = vsel %vm2097, %v2096, %v2098
    %v2100 = vadd.f32 %v2099, %v81
    %v2101 = vsel %vm226, %v2100, -inf
    %v2102 = vrot.slane %v2101, 4
    %v2103 = vmax.f32 %v2101, %v2102
    %v2104 = vrot.slane %v2103, 2
    %v2105 = vmax.f32 %v2103, %v2104
    %v2106 = vrot.slane %v2105, 1
    %v2107 = vmax.f32 %v2105, %v2106
    %v2108 = vsub.f32 %v2100, %v2107
    %v2109 = vmul.f32 %v2108, 1.442695
    %v2110 = vpow.pop %v2109
    %v2111 = vsel %vm226, %v2110, 0.0
    %v2112 = vrot.slane %v2111, 4
    %v2113 = vadd.f32 %v2111, %v2112
    %v2114 = vrot.slane %v2113, 2
    %v2115 = vadd.f32 %v2113, %v2114
    %v2116 = vrot.slane %v2115, 1
    %v2117 = vadd.f32 %v2115, %v2116
    %v2118 = vrcp.pop %v2117
    %v2119 = vmul.f32 1.0, %v2118
    %v2120 = vmul.f32 %v2110, %v2119
    %2121 = vxpose.xlu0.b32.start [1/16] %v2120, 128
    %2122 = vxpose.xlu0.b32.cont [2/16] 0.0, 128
    %2123 = vxpose.xlu0.b32.cont [3/16] 0.0, 128
    %2124 = vxpose.xlu0.b32.cont [4/16] 0.0, 128
    %2125 = vxpose.xlu0.b32.cont [5/16] 0.0, 128
    %2126 = vxpose.xlu0.b32.cont [6/16] 0.0, 128
    %2127 = vxpose.xlu0.b32.cont [7/16] 0.0, 128
    %2128 = vxpose.xlu0.b32.cont [8/16] 0.0, 128
    %2129 = vxpose.xlu0.b32.cont [9/16] 0.0, 128
    %2130 = vxpose.xlu0.b32.cont [10/16] 0.0, 128
    %2131 = vxpose.xlu0.b32.cont [11/16] 0.0, 128
    %2132 = vxpose.xlu0.b32.cont [12/16] 0.0, 128
    %2133 = vxpose.xlu0.b32.cont [13/16] 0.0, 128
    %2134 = vxpose.xlu0.b32.cont [14/16] 0.0, 128
    %2135 = vxpose.xlu0.b32.cont [15/16] 0.0, 128
    %2136 = vxpose.xlu0.b32.end [16/16] 0.0, 128
    %v2137 = vpop.trf.xlu0
    %v2138 = vpop.trf.xlu0
    %v2139 = vpop.trf.xlu0
    %v2140 = vpop.trf.xlu0
    %v2141 = vpop.trf.xlu0
    %v2142 = vpop.trf.xlu0
    %v2143 = vpop.trf.xlu0
    %v2144 = vpop.trf.xlu0
    %v2145 = vpop.trf.xlu0
    %v2146 = vpop.trf.xlu0
    %v2147 = vpop.trf.xlu0
    %v2148 = vpop.trf.xlu0
    %v2149 = vpop.trf.xlu0
    %v2150 = vpop.trf.xlu0
    %v2151 = vpop.trf.xlu0
    %v2152 = vpop.trf.xlu0
    %v2154 = vsel %vm226, %v2137, 0
    %2156 = vmatprep.subr.mxu0 0.0
    %2157 = vmatpush1.msra.mxu0 %v2048
    %2158 = vmatprep.subr.mxu0 0.0
    %2159 = vmatpush1.msra.mxu0 0.0
    %2160 = vmatprep.subr.mxu0 0.0
    %2161 = vmatpush1.msra.mxu0 0.0
    %2162 = vmatprep.subr.mxu0 0.0
    %2163 = vmatpush1.msra.mxu0 0.0
    %2164 = vmatprep.subr.mxu0 0.0
    %2165 = vmatpush1.msra.mxu0 0.0
    %2166 = vmatprep.subr.mxu0 0.0
    %2167 = vmatpush1.msra.mxu0 0.0
    %2168 = vmatprep.subr.mxu0 0.0
    %2169 = vmatpush1.msra.mxu0 0.0
    %2170 = vmatprep.subr.mxu0 0.0
    %2171 = vmatpush1.msra.mxu0 0.0
    %2172 = vmatprep.subr.mxu0 0.0
    %2173 = vmatpush1.msra.mxu0 0.0
    %2174 = vmatprep.subr.mxu0 0.0
    %2175 = vmatpush1.msra.mxu0 0.0
    %2176 = vmatprep.subr.mxu0 0.0
    %2177 = vmatpush1.msra.mxu0 0.0
    %2178 = vmatprep.subr.mxu0 0.0
    %2179 = vmatpush1.msra.mxu0 0.0
    %2180 = vmatprep.subr.mxu0 0.0
    %2181 = vmatpush1.msra.mxu0 0.0
    %2182 = vmatprep.subr.mxu0 0.0
    %2183 = vmatpush1.msra.mxu0 0.0
    %2184 = vmatprep.subr.mxu0 0.0
    %2185 = vmatpush1.msra.mxu0 0.0
    %2186 = vmatprep.subr.mxu0 0.0
    %2187 = vmatpush1.msra.mxu0 0.0
    %2188 = vmatprep.subr.mxu0 0.0
    %2189 = vmatpush1.msra.mxu0 0.0
    %2190 = vmatprep.subr.mxu0 0.0
    %2191 = vmatpush1.msra.mxu0 0.0
    %2192 = vmatprep.subr.mxu0 0.0
    %2193 = vmatpush1.msra.mxu0 0.0
    %2194 = vmatprep.subr.mxu0 0.0
    %2195 = vmatpush1.msra.mxu0 0.0
    %2196 = vmatprep.subr.mxu0 0.0
    %2197 = vmatpush1.msra.mxu0 0.0
    %2198 = vmatprep.subr.mxu0 0.0
    %2199 = vmatpush1.msra.mxu0 0.0
    %2200 = vmatprep.subr.mxu0 0.0
    %2201 = vmatpush1.msra.mxu0 0.0
    %2202 = vmatprep.subr.mxu0 0.0
    %2203 = vmatpush1.msra.mxu0 0.0
    %2204 = vmatprep.subr.mxu0 0.0
    %2205 = vmatpush1.msra.mxu0 0.0
    %2206 = vmatprep.subr.mxu0 0.0
    %2207 = vmatpush1.msra.mxu0 0.0
    %2208 = vmatprep.subr.mxu0 0.0
    %2209 = vmatpush1.msra.mxu0 0.0
    %2210 = vmatprep.subr.mxu0 0.0
    %2211 = vmatpush1.msra.mxu0 0.0
    %2212 = vmatprep.subr.mxu0 0.0
    %2213 = vmatpush1.msra.mxu0 0.0
    %2214 = vmatprep.subr.mxu0 0.0
    %2215 = vmatpush1.msra.mxu0 0.0
    %2216 = vmatprep.subr.mxu0 0.0
    %2217 = vmatpush1.msra.mxu0 0.0
    %2218 = vmatprep.subr.mxu0 0.0
    %2219 = vmatpush1.msra.mxu0 0.0
    %2220 = vmatprep.mubr.f32.mxu0 0.0
    %2221 = vmatmul.mubr.f32.gmra.mrb[0].mxu0 %v2154
    %v2222 = vpop.f32.mrb[0].mxu0
    %v2223 = vadd.f32 0.0, %v2222
    %v2224 = vpop.f32.mrb[0].mxu0
    %2225 = vdwg.mxu0
    %vm2226 = vcmp.gt.f32.partialorder %v2223, 0.0
    %v2227 = vmul.f32 %v2223, 1.442695
    %v2228 = vpow.pop %v2227
    %v2229 = vsub.f32 %v2228, 1.0
    %v2230 = vsel %vm2226, %v2223, %v2229
    %v2231 = vadd.f32 %v2230, %v83
    %2232 = vst [vmem:[#allocation10] sm:$0xff] %v1924
    %2233 = vst [vmem:[#allocation10 + $0x8] sm:$0xff] %v2231
    // Predicated region
    $region34: #{tpu_custom_call.1} parent=1 // pred_check
      _
    $region35: #{tpu_custom_call.1} parent=1 // pred_check_branch
      %2235 = sbr.rel (0) target = $region37
    $region36: #{tpu_custom_call.1} parent=1 // pred_region
      %s2237 = ssub.s32 256, 256
      %2238 = vsyncadd [#allocation4], %s2237
      %s2239 = sshll.u32 [#allocation10], 4
      %s2240 = int_to_ptr.vmem [resolvable:$true] %s2239
      %2245 = dma.vmem_to_hbm [thread:$0]  %s2240, 256, %s4, [#allocation4], 128, 128, 8
    $region37: #{tpu_custom_call.1} parent=1 // pred_fallthru
      _
    // Predicated region
    $region38: #{tpu_custom_call.1} parent=1 // pred_check
      _
    $region39: #{tpu_custom_call.1} parent=1 // pred_check_branch
      %2247 = sbr.rel (0) target = $region41
    $region40: #{tpu_custom_call.1} parent=1 // pred_region
      %2248 = dma.done [#allocation4], 256
    $region41: #{tpu_custom_call.1} parent=1 // pred_fallthru
      _
    %2249 = vsyncpa [#allocation3], 1
    %2250 = vsyncpa [#allocation7], 1
    %2251 = vsyncpa [#allocation4], 1
    %2252 = vsyncpa [#allocation5], 1

</llo_original>
